<compile_context>
chip_gen: v6e
topology: v6e:2x2x1
jax: 0.10.0
libtpu: 0.0.40
codegen_flags: <defaults>
</compile_context>

<pallas_src>
import math

import jax
import jax.numpy as jnp
from jax.experimental import pallas as pl
from jax.experimental.pallas import tpu as pltpu


# ----------------------------- numeric helpers ------------------------------

def _split_hi_lo(a):
    """f32 -> (bf16 hi, bf16 lo) with a ~= hi + lo (keeps ~16 mantissa bits)."""
    hi = a.astype(jnp.bfloat16)
    lo = (a - hi.astype(jnp.float32)).astype(jnp.bfloat16)
    return hi, lo


def _mm3(a_hi, a_lo, b_hi, b_lo):
    """f32-accurate A @ B as three native bf16 MXU passes, f32 accumulation."""
    acc = jnp.dot(a_hi, b_hi, preferred_element_type=jnp.float32)
    acc = acc + jnp.dot(a_lo, b_hi, preferred_element_type=jnp.float32)
    acc = acc + jnp.dot(a_hi, b_lo, preferred_element_type=jnp.float32)
    return acc


# --------------------------------- kernel -----------------------------------

def _mri_fwd_kernel(fh_ref, fw_ref, mask_ref, x_ref, yr_ref, yi_ref,
                    ar_s, ai_s):
    rows, W = ar_s.shape              # rows == tb * H
    H = mask_ref.shape[0]
    tb = rows // H

    # ---- Stage 1: W-direction DFT, all tb images fused into one matmul ----
    xr = x_ref[0]                     # (tb*H, W) f32
    xi = x_ref[1]
    xr_h, xr_l = _split_hi_lo(xr)
    xi_h, xi_l = _split_hi_lo(xi)
    xs_h, xs_l = _split_hi_lo(xr + xi)

    # Gauss 3-multiply complex product:  A = X @ F_W
    t1 = _mm3(xr_h, xr_l, fw_ref[0], fw_ref[1])   # xr @ fw_real
    t2 = _mm3(xi_h, xi_l, fw_ref[2], fw_ref[3])   # xi @ fw_imag
    t3 = _mm3(xs_h, xs_l, fw_ref[4], fw_ref[5])   # (xr+xi) @ (fw_r + fw_i)

    ar_s[...] = t1 - t2               # real(A) staged in VMEM scratch
    t3 = t3 - t1                      # accumulate in place: small live set
    ai_s[...] = t3 - t2               # imag(A)

    # ---- Stage 2: H-direction DFT per image, then the sampling mask -------
    fhr_h = fh_ref[0]; fhr_l = fh_ref[1]
    fhi_h = fh_ref[2]; fhi_l = fh_ref[3]
    fhs_h = fh_ref[4]; fhs_l = fh_ref[5]
    m = mask_ref[...]

    def body(b, carry):
        r0 = b * H
        if (not isinstance(r0, int)) and H % 8 == 0:
            r0 = pl.multiple_of(r0, 8)            # aligned dynamic row window
        arb = ar_s[pl.ds(r0, H), :]
        aib = ai_s[pl.ds(r0, H), :]
        ar_h, ar_l = _split_hi_lo(arb)
        ai_h, ai_l = _split_hi_lo(aib)
        as_h, as_l = _split_hi_lo(arb + aib)
        u1 = _mm3(fhr_h, fhr_l, ar_h, ar_l)       # fh_real @ real(A)
        u2 = _mm3(fhi_h, fhi_l, ai_h, ai_l)       # fh_imag @ imag(A)
        u3 = _mm3(fhs_h, fhs_l, as_h, as_l)       # (fh_r+fh_i) @ (Ar+Ai)
        yr_ref[pl.ds(r0, H), :] = (u1 - u2) * m
        u3 = u3 - u1
        yi_ref[pl.ds(r0, H), :] = (u3 - u2) * m
        return carry

    # TODO(synk): for H < 256 an XLU-transpose batch-fused stage 2
    # ((tb*W, H) @ (H, H), using F_H symmetry) would fill the MXU better.
    if tb <= 4:
        for b in range(tb):           # short static trip count: full unroll
            body(b, None)
    else:
        jax.lax.fori_loop(0, tb, body, None)      # bounded per-iter live set


# ----------------------------- constant builders ----------------------------

def _dft_matrix(n):
    """Ortho-normalized n-point DFT matrix as (real, imag) float32 planes."""
    k = jnp.arange(n, dtype=jnp.int32)
    # Exact integer k*m mod n before the float conversion keeps the phases
    # accurate for large n (float outer(k, k) loses mantissa bits at n>=512).
    km = jnp.mod(jnp.outer(k, k), n).astype(jnp.float32)
    ang = (-2.0 * jnp.pi / n) * km
    scale = jnp.float32(1.0 / math.sqrt(n))       # 'ortho' normalization
    return jnp.cos(ang) * scale, jnp.sin(ang) * scale


def _pack_dft_hi_lo(n):
    """(6, n, n) bf16: [re_hi, re_lo, im_hi, im_lo, (re+im)_hi, (re+im)_lo]."""
    fr, fi = _dft_matrix(n)
    planes = []
    for mtx in (fr, fi, fr + fi):
        hi, lo = _split_hi_lo(mtx)
        planes += [hi, lo]
    return jnp.stack(planes)


# ----------------------------- tiling / sizing -------------------------------

def _const_spec(shape):
    """BlockSpec for an operand whose block index never changes.

    Returns (spec, n_buffers): single-buffered when pl.Buffered is available,
    otherwise the default double buffering (n_buffers feeds the VMEM budget).
    """
    idx_map = lambda n: (0,) * len(shape)
    try:
        return pl.BlockSpec(shape, idx_map, pipeline_mode=pl.Buffered(1)), 1
    except Exception:                  # older jax: no pipeline_mode support
        return pl.BlockSpec(shape, idx_map), 2


def _vmem_budget():
    """(usable VMEM bytes per TensorCore, minimum number of grid steps)."""
    try:
        kind = jax.devices()[0].device_kind.lower()
    except Exception:
        kind = ""
    if "v7" in kind or "tpu7" in kind:
        # v7x: 64 MiB VMEM *per TensorCore*, 2 TCs/chip.  Keep >= 4 grid
        # steps so each core still has >= 2 steps of DMA/compute overlap.
        return 48 * 1024 * 1024, 4
    if "v5" in kind or "v6" in kind:
        return 96 * 1024 * 1024, 2     # 128 MiB physical VMEM per core
    return 48 * 1024 * 1024, 2         # unknown device: stay conservative


def _pick_tile_batch(n_images, H, W, budget, const_bytes, min_steps):
    """Images per grid step: as large as VMEM allows, preferring divisors of N."""
    # Per image: 4 f32 I/O planes double-buffered (32 B/elem), 2 f32 scratch
    # planes (8 B/elem), plus headroom for in-kernel temporaries (~24 B/elem).
    per_image = 64 * H * W
    avail = budget - const_bytes - (4 << 20)
    cap = int(max(1, avail // per_image))
    cap = min(cap, n_images)
    if n_images >= min_steps:
        cap = min(cap, -(-n_images // min_steps))   # keep >= min_steps steps
    cap = max(cap, 1)
    # The flattened (tb*H, W) block needs tb*H % 8 == 0 (f32 sublane tile).
    f = 8 // math.gcd(H, 8)
    if f > 1:
        cap = (cap // f) * f
        if cap < 1:
            return n_images            # single full-array block (always legal)
    for d in range(cap, 0, -1):        # largest divisor of N that fits
        if n_images % d == 0 and d % f == 0:
            if 2 * d > cap:
                return d               # close enough to the cap: no padding
            break
    return cap                         # accept a padded final grid step


# --------------------------------- wrapper ----------------------------------

def op_mri_singlecoil_forward(x, mask):
    """x: (B, C, H, W) complex (or real), mask: (H, W) 0/1 sampling mask.
    Returns complex64 (B, C, H, W) = fft2(x, norm='ortho') * mask."""
    B, C, H, W = x.shape
    N = B * C

    # Real / imag planes extracted in ONE stacked pass over x, flattened to a
    # lane/sublane-dense (N*H, W) layout (free metadata reshape outside the
    # kernel).  Complex dtypes are not supported inside Pallas, so complex
    # arithmetic is carried as separate f32 planes.
    xri = jnp.stack([jnp.real(x), jnp.imag(x)]).astype(jnp.float32)
    xri = xri.reshape(2, N * H, W)
    mask_f = mask.astype(jnp.float32)

    fh_pack = _pack_dft_hi_lo(H)       # (6, H, H) bf16
    fw_pack = _pack_dft_hi_lo(W)       # (6, W, W) bf16

    fh_spec, nb_h = _const_spec((6, H, H))
    fw_spec, nb_w = _const_spec((6, W, W))
    mask_spec, nb_m = _const_spec((H, W))
    const_bytes = (nb_h * 6 * H * H * 2 + nb_w * 6 * W * W * 2
                   + nb_m * H * W * 4)

    budget, min_steps = _vmem_budget()
    tb = _pick_tile_batch(N, H, W, budget, const_bytes, min_steps)
    rows = tb * H
    grid = pl.cdiv(N, tb)

    x_spec = pl.BlockSpec((2, rows, W), lambda n: (0, n, 0))
    y_spec = pl.BlockSpec((rows, W), lambda n: (n, 0))

    yr, yi = pl.pallas_call(
        _mri_fwd_kernel,
        out_shape=(jax.ShapeDtypeStruct((N * H, W), jnp.float32),
                   jax.ShapeDtypeStruct((N * H, W), jnp.float32)),
        grid_spec=pltpu.PrefetchScalarGridSpec(
            num_scalar_prefetch=0,
            grid=(grid,),
            in_specs=[fh_spec,          # packed F_H hi/lo (bf16)
                      fw_spec,          # packed F_W hi/lo (bf16)
                      mask_spec,        # sampling mask
                      x_spec],          # stacked real/imag planes of x
            out_specs=(y_spec, y_spec),
            scratch_shapes=[pltpu.VMEM((rows, W), jnp.float32),
                            pltpu.VMEM((rows, W), jnp.float32)]),
        compiler_params=pltpu.CompilerParams(
            dimension_semantics=("parallel",),
            vmem_limit_bytes=int(budget)),
    )(fh_pack, fw_pack, mask_f, xri)

    return jax.lax.complex(yr, yi).reshape(B, C, H, W)


if __name__ == "__main__":
    B, C, H, W = 2, 4, 16, 16
    key = jax.random.PRNGKey(0)
    kr, ki, km = jax.random.split(key, 3)

    x = (jax.random.normal(kr, (B, C, H, W), dtype=jnp.float32)
         + 1j * jax.random.normal(ki, (B, C, H, W), dtype=jnp.float32)
         ).astype(jnp.complex64)

    # Deterministic undersampling-style binary mask (like torch mask.long()).
    mask = (jax.random.uniform(km, (H, W)) > 0.5).astype(jnp.int32)

    op = jax.jit(op_mri_singlecoil_forward)
    y = jax.block_until_ready(op(x, mask))

    # Reference check against jnp FFT.
    y_ref = jnp.fft.fft2(x, norm="ortho") * mask.astype(jnp.complex64)
    assert y.shape == x.shape and y.dtype == jnp.complex64
    assert jnp.allclose(y, y_ref, atol=1e-4, rtol=1e-4), "mismatch vs fft2 reference"

    print("KERNEL_OK")
</pallas_src>

<mosaic_0001>
module attributes {stable_mosaic.version = 11 : i64} {
  func.func @_mri_fwd_kernel(%arg0: i32, %arg1: memref<6x16x16xbf16, #tpu.memory_space<vmem>>, %arg2: memref<6x16x16xbf16, #tpu.memory_space<vmem>>, %arg3: memref<16x16xf32, #tpu.memory_space<vmem>>, %arg4: memref<2x64x16xf32, #tpu.memory_space<vmem>>, %arg5: memref<64x16xf32, #tpu.memory_space<vmem>>, %arg6: memref<64x16xf32, #tpu.memory_space<vmem>>, %arg7: memref<64x16xf32, #tpu.memory_space<vmem>>, %arg8: memref<64x16xf32, #tpu.memory_space<vmem>>) attributes {dimension_semantics = [#tpu.dimension_semantics<parallel>], iteration_bounds = array<i64: 2>, scalar_prefetch = 0 : i64, scratch_operands = 2 : i64, tpu.core_type = #tpu.core_type<tc>, window_params = [{pipeline_mode = #tpu.pipeline_mode<synchronous>, transform_indices = @transform_0, window_bounds = array<i64: 6, 16, 16>}, {pipeline_mode = #tpu.pipeline_mode<synchronous>, transform_indices = @transform_1, window_bounds = array<i64: 6, 16, 16>}, {pipeline_mode = #tpu.pipeline_mode<synchronous>, transform_indices = @transform_2, window_bounds = array<i64: 16, 16>}, {transform_indices = @transform_3, window_bounds = array<i64: 2, 64, 16>}, {transform_indices = @transform_4, window_bounds = array<i64: 64, 16>}, {transform_indices = @transform_5, window_bounds = array<i64: 64, 16>}]} {
    %c0 = arith.constant 0 : index
    %c0_0 = arith.constant 0 : index
    %c0_1 = arith.constant 0 : index
    %0 = vector.load %arg4[%c0, %c0_0, %c0_1] : memref<2x64x16xf32, #tpu.memory_space<vmem>>, vector<1x64x16xf32>
    %1 = vector.shape_cast %0 : vector<1x64x16xf32> to vector<64x16xf32>
    %c1 = arith.constant 1 : index
    %c0_2 = arith.constant 0 : index
    %c0_3 = arith.constant 0 : index
    %2 = vector.load %arg4[%c1, %c0_2, %c0_3] : memref<2x64x16xf32, #tpu.memory_space<vmem>>, vector<1x64x16xf32>
    %3 = vector.shape_cast %2 : vector<1x64x16xf32> to vector<64x16xf32>
    %4 = arith.truncf %1 : vector<64x16xf32> to vector<64x16xbf16>
    %5 = arith.extf %4 : vector<64x16xbf16> to vector<64x16xf32>
    %6 = arith.subf %1, %5 : vector<64x16xf32>
    %7 = arith.truncf %6 : vector<64x16xf32> to vector<64x16xbf16>
    %8 = arith.truncf %3 : vector<64x16xf32> to vector<64x16xbf16>
    %9 = arith.extf %8 : vector<64x16xbf16> to vector<64x16xf32>
    %10 = arith.subf %3, %9 : vector<64x16xf32>
    %11 = arith.truncf %10 : vector<64x16xf32> to vector<64x16xbf16>
    %12 = arith.addf %1, %3 : vector<64x16xf32>
    %13 = arith.truncf %12 : vector<64x16xf32> to vector<64x16xbf16>
    %14 = arith.extf %13 : vector<64x16xbf16> to vector<64x16xf32>
    %15 = arith.subf %12, %14 : vector<64x16xf32>
    %16 = arith.truncf %15 : vector<64x16xf32> to vector<64x16xbf16>
    %c0_4 = arith.constant 0 : index
    %c0_5 = arith.constant 0 : index
    %c0_6 = arith.constant 0 : index
    %17 = vector.load %arg2[%c0_4, %c0_5, %c0_6] : memref<6x16x16xbf16, #tpu.memory_space<vmem>>, vector<1x16x16xbf16>
    %18 = vector.shape_cast %17 : vector<1x16x16xbf16> to vector<16x16xbf16>
    %c1_7 = arith.constant 1 : index
    %c0_8 = arith.constant 0 : index
    %c0_9 = arith.constant 0 : index
    %19 = vector.load %arg2[%c1_7, %c0_8, %c0_9] : memref<6x16x16xbf16, #tpu.memory_space<vmem>>, vector<1x16x16xbf16>
    %20 = vector.shape_cast %19 : vector<1x16x16xbf16> to vector<16x16xbf16>
    %cst = arith.constant dense<0.000000e+00> : vector<64x16xf32>
    %21 = tpu.matmul %4, %18, %cst {dimension_numbers = #tpu.dot_dimension_numbers<[1], [0], [0], [1], [0, 0, 1, 1], [], []>} : vector<64x16xbf16>, vector<16x16xbf16>, vector<64x16xf32> -> vector<64x16xf32>
    %cst_10 = arith.constant dense<0.000000e+00> : vector<64x16xf32>
    %22 = tpu.matmul %7, %18, %cst_10 {dimension_numbers = #tpu.dot_dimension_numbers<[1], [0], [0], [1], [0, 0, 1, 1], [], []>} : vector<64x16xbf16>, vector<16x16xbf16>, vector<64x16xf32> -> vector<64x16xf32>
    %23 = arith.addf %21, %22 : vector<64x16xf32>
    %cst_11 = arith.constant dense<0.000000e+00> : vector<64x16xf32>
    %24 = tpu.matmul %4, %20, %cst_11 {dimension_numbers = #tpu.dot_dimension_numbers<[1], [0], [0], [1], [0, 0, 1, 1], [], []>} : vector<64x16xbf16>, vector<16x16xbf16>, vector<64x16xf32> -> vector<64x16xf32>
    %25 = arith.addf %23, %24 : vector<64x16xf32>
    %c2 = arith.constant 2 : index
    %c0_12 = arith.constant 0 : index
    %c0_13 = arith.constant 0 : index
    %26 = vector.load %arg2[%c2, %c0_12, %c0_13] : memref<6x16x16xbf16, #tpu.memory_space<vmem>>, vector<1x16x16xbf16>
    %27 = vector.shape_cast %26 : vector<1x16x16xbf16> to vector<16x16xbf16>
    %c3 = arith.constant 3 : index
    %c0_14 = arith.constant 0 : index
    %c0_15 = arith.constant 0 : index
    %28 = vector.load %arg2[%c3, %c0_14, %c0_15] : memref<6x16x16xbf16, #tpu.memory_space<vmem>>, vector<1x16x16xbf16>
    %29 = vector.shape_cast %28 : vector<1x16x16xbf16> to vector<16x16xbf16>
    %cst_16 = arith.constant dense<0.000000e+00> : vector<64x16xf32>
    %30 = tpu.matmul %8, %27, %cst_16 {dimension_numbers = #tpu.dot_dimension_numbers<[1], [0], [0], [1], [0, 0, 1, 1], [], []>} : vector<64x16xbf16>, vector<16x16xbf16>, vector<64x16xf32> -> vector<64x16xf32>
    %cst_17 = arith.constant dense<0.000000e+00> : vector<64x16xf32>
    %31 = tpu.matmul %11, %27, %cst_17 {dimension_numbers = #tpu.dot_dimension_numbers<[1], [0], [0], [1], [0, 0, 1, 1], [], []>} : vector<64x16xbf16>, vector<16x16xbf16>, vector<64x16xf32> -> vector<64x16xf32>
    %32 = arith.addf %30, %31 : vector<64x16xf32>
    %cst_18 = arith.constant dense<0.000000e+00> : vector<64x16xf32>
    %33 = tpu.matmul %8, %29, %cst_18 {dimension_numbers = #tpu.dot_dimension_numbers<[1], [0], [0], [1], [0, 0, 1, 1], [], []>} : vector<64x16xbf16>, vector<16x16xbf16>, vector<64x16xf32> -> vector<64x16xf32>
    %34 = arith.addf %32, %33 : vector<64x16xf32>
    %c4 = arith.constant 4 : index
    %c0_19 = arith.constant 0 : index
    %c0_20 = arith.constant 0 : index
    %35 = vector.load %arg2[%c4, %c0_19, %c0_20] : memref<6x16x16xbf16, #tpu.memory_space<vmem>>, vector<1x16x16xbf16>
    %36 = vector.shape_cast %35 : vector<1x16x16xbf16> to vector<16x16xbf16>
    %c5 = arith.constant 5 : index
    %c0_21 = arith.constant 0 : index
    %c0_22 = arith.constant 0 : index
    %37 = vector.load %arg2[%c5, %c0_21, %c0_22] : memref<6x16x16xbf16, #tpu.memory_space<vmem>>, vector<1x16x16xbf16>
    %38 = vector.shape_cast %37 : vector<1x16x16xbf16> to vector<16x16xbf16>
    %cst_23 = arith.constant dense<0.000000e+00> : vector<64x16xf32>
    %39 = tpu.matmul %13, %36, %cst_23 {dimension_numbers = #tpu.dot_dimension_numbers<[1], [0], [0], [1], [0, 0, 1, 1], [], []>} : vector<64x16xbf16>, vector<16x16xbf16>, vector<64x16xf32> -> vector<64x16xf32>
    %cst_24 = arith.constant dense<0.000000e+00> : vector<64x16xf32>
    %40 = tpu.matmul %16, %36, %cst_24 {dimension_numbers = #tpu.dot_dimension_numbers<[1], [0], [0], [1], [0, 0, 1, 1], [], []>} : vector<64x16xbf16>, vector<16x16xbf16>, vector<64x16xf32> -> vector<64x16xf32>
    %41 = arith.addf %39, %40 : vector<64x16xf32>
    %cst_25 = arith.constant dense<0.000000e+00> : vector<64x16xf32>
    %42 = tpu.matmul %13, %38, %cst_25 {dimension_numbers = #tpu.dot_dimension_numbers<[1], [0], [0], [1], [0, 0, 1, 1], [], []>} : vector<64x16xbf16>, vector<16x16xbf16>, vector<64x16xf32> -> vector<64x16xf32>
    %43 = arith.addf %41, %42 : vector<64x16xf32>
    %44 = arith.subf %25, %34 : vector<64x16xf32>
    %c0_26 = arith.constant 0 : index
    %c0_27 = arith.constant 0 : index
    %45 = vector.load %arg7[%c0_26, %c0_27] : memref<64x16xf32, #tpu.memory_space<vmem>>, vector<64x16xf32>
    tpu.vector_store %arg7[%c0_26, %c0_27], %44 {strides = array<i32>} : memref<64x16xf32, #tpu.memory_space<vmem>>, vector<64x16xf32>,
    %46 = arith.subf %43, %25 : vector<64x16xf32>
    %47 = arith.subf %46, %34 : vector<64x16xf32>
    %c0_28 = arith.constant 0 : index
    %c0_29 = arith.constant 0 : index
    %48 = vector.load %arg8[%c0_28, %c0_29] : memref<64x16xf32, #tpu.memory_space<vmem>>, vector<64x16xf32>
    tpu.vector_store %arg8[%c0_28, %c0_29], %47 {strides = array<i32>} : memref<64x16xf32, #tpu.memory_space<vmem>>, vector<64x16xf32>,
    %c0_30 = arith.constant 0 : index
    %c0_31 = arith.constant 0 : index
    %c0_32 = arith.constant 0 : index
    %49 = vector.load %arg1[%c0_30, %c0_31, %c0_32] : memref<6x16x16xbf16, #tpu.memory_space<vmem>>, vector<1x16x16xbf16>
    %50 = vector.shape_cast %49 : vector<1x16x16xbf16> to vector<16x16xbf16>
    %c1_33 = arith.constant 1 : index
    %c0_34 = arith.constant 0 : index
    %c0_35 = arith.constant 0 : index
    %51 = vector.load %arg1[%c1_33, %c0_34, %c0_35] : memref<6x16x16xbf16, #tpu.memory_space<vmem>>, vector<1x16x16xbf16>
    %52 = vector.shape_cast %51 : vector<1x16x16xbf16> to vector<16x16xbf16>
    %c2_36 = arith.constant 2 : index
    %c0_37 = arith.constant 0 : index
    %c0_38 = arith.constant 0 : index
    %53 = vector.load %arg1[%c2_36, %c0_37, %c0_38] : memref<6x16x16xbf16, #tpu.memory_space<vmem>>, vector<1x16x16xbf16>
    %54 = vector.shape_cast %53 : vector<1x16x16xbf16> to vector<16x16xbf16>
    %c3_39 = arith.constant 3 : index
    %c0_40 = arith.constant 0 : index
    %c0_41 = arith.constant 0 : index
    %55 = vector.load %arg1[%c3_39, %c0_40, %c0_41] : memref<6x16x16xbf16, #tpu.memory_space<vmem>>, vector<1x16x16xbf16>
    %56 = vector.shape_cast %55 : vector<1x16x16xbf16> to vector<16x16xbf16>
    %c4_42 = arith.constant 4 : index
    %c0_43 = arith.constant 0 : index
    %c0_44 = arith.constant 0 : index
    %57 = vector.load %arg1[%c4_42, %c0_43, %c0_44] : memref<6x16x16xbf16, #tpu.memory_space<vmem>>, vector<1x16x16xbf16>
    %58 = vector.shape_cast %57 : vector<1x16x16xbf16> to vector<16x16xbf16>
    %c5_45 = arith.constant 5 : index
    %c0_46 = arith.constant 0 : index
    %c0_47 = arith.constant 0 : index
    %59 = vector.load %arg1[%c5_45, %c0_46, %c0_47] : memref<6x16x16xbf16, #tpu.memory_space<vmem>>, vector<1x16x16xbf16>
    %60 = vector.shape_cast %59 : vector<1x16x16xbf16> to vector<16x16xbf16>
    %c0_48 = arith.constant 0 : index
    %c0_49 = arith.constant 0 : index
    %61 = vector.load %arg3[%c0_48, %c0_49] : memref<16x16xf32, #tpu.memory_space<vmem>>, vector<16x16xf32>
    %c0_50 = arith.constant 0 : index
    %c0_51 = arith.constant 0 : index
    %62 = vector.load %arg7[%c0_50, %c0_51] : memref<64x16xf32, #tpu.memory_space<vmem>>, vector<16x16xf32>
    %c0_52 = arith.constant 0 : index
    %c0_53 = arith.constant 0 : index
    %63 = vector.load %arg8[%c0_52, %c0_53] : memref<64x16xf32, #tpu.memory_space<vmem>>, vector<16x16xf32>
    %64 = arith.truncf %62 : vector<16x16xf32> to vector<16x16xbf16>
    %65 = arith.extf %64 : vector<16x16xbf16> to vector<16x16xf32>
    %66 = arith.subf %62, %65 : vector<16x16xf32>
    %67 = arith.truncf %66 : vector<16x16xf32> to vector<16x16xbf16>
    %68 = arith.truncf %63 : vector<16x16xf32> to vector<16x16xbf16>
    %69 = arith.extf %68 : vector<16x16xbf16> to vector<16x16xf32>
    %70 = arith.subf %63, %69 : vector<16x16xf32>
    %71 = arith.truncf %70 : vector<16x16xf32> to vector<16x16xbf16>
    %72 = arith.addf %62, %63 : vector<16x16xf32>
    %73 = arith.truncf %72 : vector<16x16xf32> to vector<16x16xbf16>
    %74 = arith.extf %73 : vector<16x16xbf16> to vector<16x16xf32>
    %75 = arith.subf %72, %74 : vector<16x16xf32>
    %76 = arith.truncf %75 : vector<16x16xf32> to vector<16x16xbf16>
    %cst_54 = arith.constant dense<0.000000e+00> : vector<16x16xf32>
    %77 = tpu.matmul %50, %64, %cst_54 {dimension_numbers = #tpu.dot_dimension_numbers<[1], [0], [0], [1], [0, 0, 1, 1], [], []>} : vector<16x16xbf16>, vector<16x16xbf16>, vector<16x16xf32> -> vector<16x16xf32>
    %cst_55 = arith.constant dense<0.000000e+00> : vector<16x16xf32>
    %78 = tpu.matmul %52, %64, %cst_55 {dimension_numbers = #tpu.dot_dimension_numbers<[1], [0], [0], [1], [0, 0, 1, 1], [], []>} : vector<16x16xbf16>, vector<16x16xbf16>, vector<16x16xf32> -> vector<16x16xf32>
    %79 = arith.addf %77, %78 : vector<16x16xf32>
    %cst_56 = arith.constant dense<0.000000e+00> : vector<16x16xf32>
    %80 = tpu.matmul %50, %67, %cst_56 {dimension_numbers = #tpu.dot_dimension_numbers<[1], [0], [0], [1], [0, 0, 1, 1], [], []>} : vector<16x16xbf16>, vector<16x16xbf16>, vector<16x16xf32> -> vector<16x16xf32>
    %81 = arith.addf %79, %80 : vector<16x16xf32>
    %cst_57 = arith.constant dense<0.000000e+00> : vector<16x16xf32>
    %82 = tpu.matmul %54, %68, %cst_57 {dimension_numbers = #tpu.dot_dimension_numbers<[1], [0], [0], [1], [0, 0, 1, 1], [], []>} : vector<16x16xbf16>, vector<16x16xbf16>, vector<16x16xf32> -> vector<16x16xf32>
    %cst_58 = arith.constant dense<0.000000e+00> : vector<16x16xf32>
    %83 = tpu.matmul %56, %68, %cst_58 {dimension_numbers = #tpu.dot_dimension_numbers<[1], [0], [0], [1], [0, 0, 1, 1], [], []>} : vector<16x16xbf16>, vector<16x16xbf16>, vector<16x16xf32> -> vector<16x16xf32>
    %84 = arith.addf %82, %83 : vector<16x16xf32>
    %cst_59 = arith.constant dense<0.000000e+00> : vector<16x16xf32>
    %85 = tpu.matmul %54, %71, %cst_59 {dimension_numbers = #tpu.dot_dimension_numbers<[1], [0], [0], [1], [0, 0, 1, 1], [], []>} : vector<16x16xbf16>, vector<16x16xbf16>, vector<16x16xf32> -> vector<16x16xf32>
    %86 = arith.addf %84, %85 : vector<16x16xf32>
    %cst_60 = arith.constant dense<0.000000e+00> : vector<16x16xf32>
    %87 = tpu.matmul %58, %73, %cst_60 {dimension_numbers = #tpu.dot_dimension_numbers<[1], [0], [0], [1], [0, 0, 1, 1], [], []>} : vector<16x16xbf16>, vector<16x16xbf16>, vector<16x16xf32> -> vector<16x16xf32>
    %cst_61 = arith.constant dense<0.000000e+00> : vector<16x16xf32>
    %88 = tpu.matmul %60, %73, %cst_61 {dimension_numbers = #tpu.dot_dimension_numbers<[1], [0], [0], [1], [0, 0, 1, 1], [], []>} : vector<16x16xbf16>, vector<16x16xbf16>, vector<16x16xf32> -> vector<16x16xf32>
    %89 = arith.addf %87, %88 : vector<16x16xf32>
    %cst_62 = arith.constant dense<0.000000e+00> : vector<16x16xf32>
    %90 = tpu.matmul %58, %76, %cst_62 {dimension_numbers = #tpu.dot_dimension_numbers<[1], [0], [0], [1], [0, 0, 1, 1], [], []>} : vector<16x16xbf16>, vector<16x16xbf16>, vector<16x16xf32> -> vector<16x16xf32>
    %91 = arith.addf %89, %90 : vector<16x16xf32>
    %92 = arith.subf %81, %86 : vector<16x16xf32>
    %93 = arith.mulf %92, %61 : vector<16x16xf32>
    %c0_63 = arith.constant 0 : index
    %c0_64 = arith.constant 0 : index
    %94 = vector.load %arg5[%c0_63, %c0_64] : memref<64x16xf32, #tpu.memory_space<vmem>>, vector<16x16xf32>
    tpu.vector_store %arg5[%c0_63, %c0_64], %93 {strides = array<i32>} : memref<64x16xf32, #tpu.memory_space<vmem>>, vector<16x16xf32>,
    %95 = arith.subf %91, %81 : vector<16x16xf32>
    %96 = arith.subf %95, %86 : vector<16x16xf32>
    %97 = arith.mulf %96, %61 : vector<16x16xf32>
    %c0_65 = arith.constant 0 : index
    %c0_66 = arith.constant 0 : index
    %98 = vector.load %arg6[%c0_65, %c0_66] : memref<64x16xf32, #tpu.memory_space<vmem>>, vector<16x16xf32>
    tpu.vector_store %arg6[%c0_65, %c0_66], %97 {strides = array<i32>} : memref<64x16xf32, #tpu.memory_space<vmem>>, vector<16x16xf32>,
    %c16 = arith.constant 16 : index
    %c0_67 = arith.constant 0 : index
    %99 = vector.load %arg7[%c16, %c0_67] : memref<64x16xf32, #tpu.memory_space<vmem>>, vector<16x16xf32>
    %c16_68 = arith.constant 16 : index
    %c0_69 = arith.constant 0 : index
    %100 = vector.load %arg8[%c16_68, %c0_69] : memref<64x16xf32, #tpu.memory_space<vmem>>, vector<16x16xf32>
    %101 = arith.truncf %99 : vector<16x16xf32> to vector<16x16xbf16>
    %102 = arith.extf %101 : vector<16x16xbf16> to vector<16x16xf32>
    %103 = arith.subf %99, %102 : vector<16x16xf32>
    %104 = arith.truncf %103 : vector<16x16xf32> to vector<16x16xbf16>
    %105 = arith.truncf %100 : vector<16x16xf32> to vector<16x16xbf16>
    %106 = arith.extf %105 : vector<16x16xbf16> to vector<16x16xf32>
    %107 = arith.subf %100, %106 : vector<16x16xf32>
    %108 = arith.truncf %107 : vector<16x16xf32> to vector<16x16xbf16>
    %109 = arith.addf %99, %100 : vector<16x16xf32>
    %110 = arith.truncf %109 : vector<16x16xf32> to vector<16x16xbf16>
    %111 = arith.extf %110 : vector<16x16xbf16> to vector<16x16xf32>
    %112 = arith.subf %109, %111 : vector<16x16xf32>
    %113 = arith.truncf %112 : vector<16x16xf32> to vector<16x16xbf16>
    %cst_70 = arith.constant dense<0.000000e+00> : vector<16x16xf32>
    %114 = tpu.matmul %50, %101, %cst_70 {dimension_numbers = #tpu.dot_dimension_numbers<[1], [0], [0], [1], [0, 0, 1, 1], [], []>} : vector<16x16xbf16>, vector<16x16xbf16>, vector<16x16xf32> -> vector<16x16xf32>
    %cst_71 = arith.constant dense<0.000000e+00> : vector<16x16xf32>
    %115 = tpu.matmul %52, %101, %cst_71 {dimension_numbers = #tpu.dot_dimension_numbers<[1], [0], [0], [1], [0, 0, 1, 1], [], []>} : vector<16x16xbf16>, vector<16x16xbf16>, vector<16x16xf32> -> vector<16x16xf32>
    %116 = arith.addf %114, %115 : vector<16x16xf32>
    %cst_72 = arith.constant dense<0.000000e+00> : vector<16x16xf32>
    %117 = tpu.matmul %50, %104, %cst_72 {dimension_numbers = #tpu.dot_dimension_numbers<[1], [0], [0], [1], [0, 0, 1, 1], [], []>} : vector<16x16xbf16>, vector<16x16xbf16>, vector<16x16xf32> -> vector<16x16xf32>
    %118 = arith.addf %116, %117 : vector<16x16xf32>
    %cst_73 = arith.constant dense<0.000000e+00> : vector<16x16xf32>
    %119 = tpu.matmul %54, %105, %cst_73 {dimension_numbers = #tpu.dot_dimension_numbers<[1], [0], [0], [1], [0, 0, 1, 1], [], []>} : vector<16x16xbf16>, vector<16x16xbf16>, vector<16x16xf32> -> vector<16x16xf32>
    %cst_74 = arith.constant dense<0.000000e+00> : vector<16x16xf32>
    %120 = tpu.matmul %56, %105, %cst_74 {dimension_numbers = #tpu.dot_dimension_numbers<[1], [0], [0], [1], [0, 0, 1, 1], [], []>} : vector<16x16xbf16>, vector<16x16xbf16>, vector<16x16xf32> -> vector<16x16xf32>
    %121 = arith.addf %119, %120 : vector<16x16xf32>
    %cst_75 = arith.constant dense<0.000000e+00> : vector<16x16xf32>
    %122 = tpu.matmul %54, %108, %cst_75 {dimension_numbers = #tpu.dot_dimension_numbers<[1], [0], [0], [1], [0, 0, 1, 1], [], []>} : vector<16x16xbf16>, vector<16x16xbf16>, vector<16x16xf32> -> vector<16x16xf32>
    %123 = arith.addf %121, %122 : vector<16x16xf32>
    %cst_76 = arith.constant dense<0.000000e+00> : vector<16x16xf32>
    %124 = tpu.matmul %58, %110, %cst_76 {dimension_numbers = #tpu.dot_dimension_numbers<[1], [0], [0], [1], [0, 0, 1, 1], [], []>} : vector<16x16xbf16>, vector<16x16xbf16>, vector<16x16xf32> -> vector<16x16xf32>
    %cst_77 = arith.constant dense<0.000000e+00> : vector<16x16xf32>
    %125 = tpu.matmul %60, %110, %cst_77 {dimension_numbers = #tpu.dot_dimension_numbers<[1], [0], [0], [1], [0, 0, 1, 1], [], []>} : vector<16x16xbf16>, vector<16x16xbf16>, vector<16x16xf32> -> vector<16x16xf32>
    %126 = arith.addf %124, %125 : vector<16x16xf32>
    %cst_78 = arith.constant dense<0.000000e+00> : vector<16x16xf32>
    %127 = tpu.matmul %58, %113, %cst_78 {dimension_numbers = #tpu.dot_dimension_numbers<[1], [0], [0], [1], [0, 0, 1, 1], [], []>} : vector<16x16xbf16>, vector<16x16xbf16>, vector<16x16xf32> -> vector<16x16xf32>
    %128 = arith.addf %126, %127 : vector<16x16xf32>
    %129 = arith.subf %118, %123 : vector<16x16xf32>
    %130 = arith.mulf %129, %61 : vector<16x16xf32>
    %c16_79 = arith.constant 16 : index
    %c0_80 = arith.constant 0 : index
    %131 = vector.load %arg5[%c16_79, %c0_80] : memref<64x16xf32, #tpu.memory_space<vmem>>, vector<16x16xf32>
    tpu.vector_store %arg5[%c16_79, %c0_80], %130 {strides = array<i32>} : memref<64x16xf32, #tpu.memory_space<vmem>>, vector<16x16xf32>,
    %132 = arith.subf %128, %118 : vector<16x16xf32>
    %133 = arith.subf %132, %123 : vector<16x16xf32>
    %134 = arith.mulf %133, %61 : vector<16x16xf32>
    %c16_81 = arith.constant 16 : index
    %c0_82 = arith.constant 0 : index
    %135 = vector.load %arg6[%c16_81, %c0_82] : memref<64x16xf32, #tpu.memory_space<vmem>>, vector<16x16xf32>
    tpu.vector_store %arg6[%c16_81, %c0_82], %134 {strides = array<i32>} : memref<64x16xf32, #tpu.memory_space<vmem>>, vector<16x16xf32>,
    %c32 = arith.constant 32 : index
    %c0_83 = arith.constant 0 : index
    %136 = vector.load %arg7[%c32, %c0_83] : memref<64x16xf32, #tpu.memory_space<vmem>>, vector<16x16xf32>
    %c32_84 = arith.constant 32 : index
    %c0_85 = arith.constant 0 : index
    %137 = vector.load %arg8[%c32_84, %c0_85] : memref<64x16xf32, #tpu.memory_space<vmem>>, vector<16x16xf32>
    %138 = arith.truncf %136 : vector<16x16xf32> to vector<16x16xbf16>
    %139 = arith.extf %138 : vector<16x16xbf16> to vector<16x16xf32>
    %140 = arith.subf %136, %139 : vector<16x16xf32>
    %141 = arith.truncf %140 : vector<16x16xf32> to vector<16x16xbf16>
    %142 = arith.truncf %137 : vector<16x16xf32> to vector<16x16xbf16>
    %143 = arith.extf %142 : vector<16x16xbf16> to vector<16x16xf32>
    %144 = arith.subf %137, %143 : vector<16x16xf32>
    %145 = arith.truncf %144 : vector<16x16xf32> to vector<16x16xbf16>
    %146 = arith.addf %136, %137 : vector<16x16xf32>
    %147 = arith.truncf %146 : vector<16x16xf32> to vector<16x16xbf16>
    %148 = arith.extf %147 : vector<16x16xbf16> to vector<16x16xf32>
    %149 = arith.subf %146, %148 : vector<16x16xf32>
    %150 = arith.truncf %149 : vector<16x16xf32> to vector<16x16xbf16>
    %cst_86 = arith.constant dense<0.000000e+00> : vector<16x16xf32>
    %151 = tpu.matmul %50, %138, %cst_86 {dimension_numbers = #tpu.dot_dimension_numbers<[1], [0], [0], [1], [0, 0, 1, 1], [], []>} : vector<16x16xbf16>, vector<16x16xbf16>, vector<16x16xf32> -> vector<16x16xf32>
    %cst_87 = arith.constant dense<0.000000e+00> : vector<16x16xf32>
    %152 = tpu.matmul %52, %138, %cst_87 {dimension_numbers = #tpu.dot_dimension_numbers<[1], [0], [0], [1], [0, 0, 1, 1], [], []>} : vector<16x16xbf16>, vector<16x16xbf16>, vector<16x16xf32> -> vector<16x16xf32>
    %153 = arith.addf %151, %152 : vector<16x16xf32>
    %cst_88 = arith.constant dense<0.000000e+00> : vector<16x16xf32>
    %154 = tpu.matmul %50, %141, %cst_88 {dimension_numbers = #tpu.dot_dimension_numbers<[1], [0], [0], [1], [0, 0, 1, 1], [], []>} : vector<16x16xbf16>, vector<16x16xbf16>, vector<16x16xf32> -> vector<16x16xf32>
    %155 = arith.addf %153, %154 : vector<16x16xf32>
    %cst_89 = arith.constant dense<0.000000e+00> : vector<16x16xf32>
    %156 = tpu.matmul %54, %142, %cst_89 {dimension_numbers = #tpu.dot_dimension_numbers<[1], [0], [0], [1], [0, 0, 1, 1], [], []>} : vector<16x16xbf16>, vector<16x16xbf16>, vector<16x16xf32> -> vector<16x16xf32>
    %cst_90 = arith.constant dense<0.000000e+00> : vector<16x16xf32>
    %157 = tpu.matmul %56, %142, %cst_90 {dimension_numbers = #tpu.dot_dimension_numbers<[1], [0], [0], [1], [0, 0, 1, 1], [], []>} : vector<16x16xbf16>, vector<16x16xbf16>, vector<16x16xf32> -> vector<16x16xf32>
    %158 = arith.addf %156, %157 : vector<16x16xf32>
    %cst_91 = arith.constant dense<0.000000e+00> : vector<16x16xf32>
    %159 = tpu.matmul %54, %145, %cst_91 {dimension_numbers = #tpu.dot_dimension_numbers<[1], [0], [0], [1], [0, 0, 1, 1], [], []>} : vector<16x16xbf16>, vector<16x16xbf16>, vector<16x16xf32> -> vector<16x16xf32>
    %160 = arith.addf %158, %159 : vector<16x16xf32>
    %cst_92 = arith.constant dense<0.000000e+00> : vector<16x16xf32>
    %161 = tpu.matmul %58, %147, %cst_92 {dimension_numbers = #tpu.dot_dimension_numbers<[1], [0], [0], [1], [0, 0, 1, 1], [], []>} : vector<16x16xbf16>, vector<16x16xbf16>, vector<16x16xf32> -> vector<16x16xf32>
    %cst_93 = arith.constant dense<0.000000e+00> : vector<16x16xf32>
    %162 = tpu.matmul %60, %147, %cst_93 {dimension_numbers = #tpu.dot_dimension_numbers<[1], [0], [0], [1], [0, 0, 1, 1], [], []>} : vector<16x16xbf16>, vector<16x16xbf16>, vector<16x16xf32> -> vector<16x16xf32>
    %163 = arith.addf %161, %162 : vector<16x16xf32>
    %cst_94 = arith.constant dense<0.000000e+00> : vector<16x16xf32>
    %164 = tpu.matmul %58, %150, %cst_94 {dimension_numbers = #tpu.dot_dimension_numbers<[1], [0], [0], [1], [0, 0, 1, 1], [], []>} : vector<16x16xbf16>, vector<16x16xbf16>, vector<16x16xf32> -> vector<16x16xf32>
    %165 = arith.addf %163, %164 : vector<16x16xf32>
    %166 = arith.subf %155, %160 : vector<16x16xf32>
    %167 = arith.mulf %166, %61 : vector<16x16xf32>
    %c32_95 = arith.constant 32 : index
    %c0_96 = arith.constant 0 : index
    %168 = vector.load %arg5[%c32_95, %c0_96] : memref<64x16xf32, #tpu.memory_space<vmem>>, vector<16x16xf32>
    tpu.vector_store %arg5[%c32_95, %c0_96], %167 {strides = array<i32>} : memref<64x16xf32, #tpu.memory_space<vmem>>, vector<16x16xf32>,
    %169 = arith.subf %165, %155 : vector<16x16xf32>
    %170 = arith.subf %169, %160 : vector<16x16xf32>
    %171 = arith.mulf %170, %61 : vector<16x16xf32>
    %c32_97 = arith.constant 32 : index
    %c0_98 = arith.constant 0 : index
    %172 = vector.load %arg6[%c32_97, %c0_98] : memref<64x16xf32, #tpu.memory_space<vmem>>, vector<16x16xf32>
    tpu.vector_store %arg6[%c32_97, %c0_98], %171 {strides = array<i32>} : memref<64x16xf32, #tpu.memory_space<vmem>>, vector<16x16xf32>,
    %c48 = arith.constant 48 : index
    %c0_99 = arith.constant 0 : index
    %173 = vector.load %arg7[%c48, %c0_99] : memref<64x16xf32, #tpu.memory_space<vmem>>, vector<16x16xf32>
    %c48_100 = arith.constant 48 : index
    %c0_101 = arith.constant 0 : index
    %174 = vector.load %arg8[%c48_100, %c0_101] : memref<64x16xf32, #tpu.memory_space<vmem>>, vector<16x16xf32>
    %175 = arith.truncf %173 : vector<16x16xf32> to vector<16x16xbf16>
    %176 = arith.extf %175 : vector<16x16xbf16> to vector<16x16xf32>
    %177 = arith.subf %173, %176 : vector<16x16xf32>
    %178 = arith.truncf %177 : vector<16x16xf32> to vector<16x16xbf16>
    %179 = arith.truncf %174 : vector<16x16xf32> to vector<16x16xbf16>
    %180 = arith.extf %179 : vector<16x16xbf16> to vector<16x16xf32>
    %181 = arith.subf %174, %180 : vector<16x16xf32>
    %182 = arith.truncf %181 : vector<16x16xf32> to vector<16x16xbf16>
    %183 = arith.addf %173, %174 : vector<16x16xf32>
    %184 = arith.truncf %183 : vector<16x16xf32> to vector<16x16xbf16>
    %185 = arith.extf %184 : vector<16x16xbf16> to vector<16x16xf32>
    %186 = arith.subf %183, %185 : vector<16x16xf32>
    %187 = arith.truncf %186 : vector<16x16xf32> to vector<16x16xbf16>
    %cst_102 = arith.constant dense<0.000000e+00> : vector<16x16xf32>
    %188 = tpu.matmul %50, %175, %cst_102 {dimension_numbers = #tpu.dot_dimension_numbers<[1], [0], [0], [1], [0, 0, 1, 1], [], []>} : vector<16x16xbf16>, vector<16x16xbf16>, vector<16x16xf32> -> vector<16x16xf32>
    %cst_103 = arith.constant dense<0.000000e+00> : vector<16x16xf32>
    %189 = tpu.matmul %52, %175, %cst_103 {dimension_numbers = #tpu.dot_dimension_numbers<[1], [0], [0], [1], [0, 0, 1, 1], [], []>} : vector<16x16xbf16>, vector<16x16xbf16>, vector<16x16xf32> -> vector<16x16xf32>
    %190 = arith.addf %188, %189 : vector<16x16xf32>
    %cst_104 = arith.constant dense<0.000000e+00> : vector<16x16xf32>
    %191 = tpu.matmul %50, %178, %cst_104 {dimension_numbers = #tpu.dot_dimension_numbers<[1], [0], [0], [1], [0, 0, 1, 1], [], []>} : vector<16x16xbf16>, vector<16x16xbf16>, vector<16x16xf32> -> vector<16x16xf32>
    %192 = arith.addf %190, %191 : vector<16x16xf32>
    %cst_105 = arith.constant dense<0.000000e+00> : vector<16x16xf32>
    %193 = tpu.matmul %54, %179, %cst_105 {dimension_numbers = #tpu.dot_dimension_numbers<[1], [0], [0], [1], [0, 0, 1, 1], [], []>} : vector<16x16xbf16>, vector<16x16xbf16>, vector<16x16xf32> -> vector<16x16xf32>
    %cst_106 = arith.constant dense<0.000000e+00> : vector<16x16xf32>
    %194 = tpu.matmul %56, %179, %cst_106 {dimension_numbers = #tpu.dot_dimension_numbers<[1], [0], [0], [1], [0, 0, 1, 1], [], []>} : vector<16x16xbf16>, vector<16x16xbf16>, vector<16x16xf32> -> vector<16x16xf32>
    %195 = arith.addf %193, %194 : vector<16x16xf32>
    %cst_107 = arith.constant dense<0.000000e+00> : vector<16x16xf32>
    %196 = tpu.matmul %54, %182, %cst_107 {dimension_numbers = #tpu.dot_dimension_numbers<[1], [0], [0], [1], [0, 0, 1, 1], [], []>} : vector<16x16xbf16>, vector<16x16xbf16>, vector<16x16xf32> -> vector<16x16xf32>
    %197 = arith.addf %195, %196 : vector<16x16xf32>
    %cst_108 = arith.constant dense<0.000000e+00> : vector<16x16xf32>
    %198 = tpu.matmul %58, %184, %cst_108 {dimension_numbers = #tpu.dot_dimension_numbers<[1], [0], [0], [1], [0, 0, 1, 1], [], []>} : vector<16x16xbf16>, vector<16x16xbf16>, vector<16x16xf32> -> vector<16x16xf32>
    %cst_109 = arith.constant dense<0.000000e+00> : vector<16x16xf32>
    %199 = tpu.matmul %60, %184, %cst_109 {dimension_numbers = #tpu.dot_dimension_numbers<[1], [0], [0], [1], [0, 0, 1, 1], [], []>} : vector<16x16xbf16>, vector<16x16xbf16>, vector<16x16xf32> -> vector<16x16xf32>
    %200 = arith.addf %198, %199 : vector<16x16xf32>
    %cst_110 = arith.constant dense<0.000000e+00> : vector<16x16xf32>
    %201 = tpu.matmul %58, %187, %cst_110 {dimension_numbers = #tpu.dot_dimension_numbers<[1], [0], [0], [1], [0, 0, 1, 1], [], []>} : vector<16x16xbf16>, vector<16x16xbf16>, vector<16x16xf32> -> vector<16x16xf32>
    %202 = arith.addf %200, %201 : vector<16x16xf32>
    %203 = arith.subf %192, %197 : vector<16x16xf32>
    %204 = arith.mulf %203, %61 : vector<16x16xf32>
    %c48_111 = arith.constant 48 : index
    %c0_112 = arith.constant 0 : index
    %205 = vector.load %arg5[%c48_111, %c0_112] : memref<64x16xf32, #tpu.memory_space<vmem>>, vector<16x16xf32>
    tpu.vector_store %arg5[%c48_111, %c0_112], %204 {strides = array<i32>} : memref<64x16xf32, #tpu.memory_space<vmem>>, vector<16x16xf32>,
    %206 = arith.subf %202, %192 : vector<16x16xf32>
    %207 = arith.subf %206, %197 : vector<16x16xf32>
    %208 = arith.mulf %207, %61 : vector<16x16xf32>
    %c48_113 = arith.constant 48 : index
    %c0_114 = arith.constant 0 : index
    %209 = vector.load %arg6[%c48_113, %c0_114] : memref<64x16xf32, #tpu.memory_space<vmem>>, vector<16x16xf32>
    tpu.vector_store %arg6[%c48_113, %c0_114], %208 {strides = array<i32>} : memref<64x16xf32, #tpu.memory_space<vmem>>, vector<16x16xf32>,
    return
  }
  func.func @transform_0(%arg0: i32) -> (i32, i32, i32) {
    %c0_i32 = arith.constant 0 : i32
    %c0_i32_0 = arith.constant 0 : i32
    %c0_i32_1 = arith.constant 0 : i32
    %c0_i32_2 = arith.constant 0 : i32
    return %c0_i32, %c0_i32_0, %c0_i32_1 : i32, i32, i32
  }
  func.func @transform_1(%arg0: i32) -> (i32, i32, i32) {
    %c0_i32 = arith.constant 0 : i32
    %c0_i32_0 = arith.constant 0 : i32
    %c0_i32_1 = arith.constant 0 : i32
    %c0_i32_2 = arith.constant 0 : i32
    return %c0_i32, %c0_i32_0, %c0_i32_1 : i32, i32, i32
  }
  func.func @transform_2(%arg0: i32) -> (i32, i32) {
    %c0_i32 = arith.constant 0 : i32
    %c0_i32_0 = arith.constant 0 : i32
    %c0_i32_1 = arith.constant 0 : i32
    return %c0_i32, %c0_i32_0 : i32, i32
  }
  func.func @transform_3(%arg0: i32) -> (i32, i32, i32) {
    %c0_i32 = arith.constant 0 : i32
    %c0_i32_0 = arith.constant 0 : i32
    %c0_i32_1 = arith.constant 0 : i32
    return %c0_i32, %arg0, %c0_i32_0 : i32, i32, i32
  }
  func.func @transform_4(%arg0: i32) -> (i32, i32) {
    %c0_i32 = arith.constant 0 : i32
    %c0_i32_0 = arith.constant 0 : i32
    return %arg0, %c0_i32 : i32, i32
  }
  func.func @transform_5(%arg0: i32) -> (i32, i32) {
    %c0_i32 = arith.constant 0 : i32
    %c0_i32_0 = arith.constant 0 : i32
    return %arg0, %c0_i32 : i32, i32
  }
}

</mosaic_0001>

<llo_original>
// kernel: custom-call.1
$region0: #{custom-call.1}
  %s0 = inlined_call_operand.hbm [shape: c64[2,4,16,16], index: 0, kind: input, shape index: {}]
  %s1 = inlined_call_operand.vmem [shape: f32[2,4,16,16], index: 1, kind: output, shape index: {}]
  %s2 = scalar_lea.hbm %s0, 2048
  $region1: #{custom-call.1} parent=0
    #allocation0 [shape = 's32[1]{0}', space=sflag, size = 0x4, scoped, tag = 'scoped memory for custom-call.1']
    %3 = vsyncpa [#allocation0], 0
    %s4 = sshll.u32 %s1, 4
    %s5 = int_to_ptr.vmem [resolvable:$true] %s4
    %7 = dma.hbm_to_vmem [thread:$0]  %s2, 2048, %s5, [#allocation0]
    %8 = dma.done [#allocation0], 2048
    %9 = vsyncpa [#allocation0], 1

// kernel: custom-call
$region0: #{custom-call}
  %s0 = inlined_call_operand.hbm [shape: c64[2,4,16,16], index: 0, kind: input, shape index: {}]
  %s1 = inlined_call_operand.vmem [shape: f32[2,4,16,16], index: 1, kind: output, shape index: {}]
  $region1: #{custom-call} parent=0
    #allocation0 [shape = 's32[1]{0}', space=sflag, size = 0x4, scoped, tag = 'scoped memory for custom-call']
    %2 = vsyncpa [#allocation0], 0
    %s3 = sshll.u32 %s1, 4
    %s4 = int_to_ptr.vmem [resolvable:$true] %s3
    %6 = dma.hbm_to_vmem [thread:$0]  %s0, 2048, %s4, [#allocation0]
    %7 = dma.done [#allocation0], 2048
    %8 = vsyncpa [#allocation0], 1

// kernel: custom-call.2
$region0: #{custom-call.2}
  %s0 = inlined_call_operand.vmem [shape: f32[2,4,16,16], index: 0, kind: input, shape index: {}]
  %s1 = inlined_call_operand.vmem [shape: f32[2,4,16,16], index: 1, kind: input, shape index: {}]
  %s2 = inlined_call_operand.hbm [shape: c64[2,4,16,16], index: 2, kind: output, shape index: {}]
  %s3 = scalar_lea.hbm %s2, 2048
  $region1: #{custom-call.2} parent=0
    #allocation0 [shape = 's32[1]{0}', space=sflag, size = 0x4, scoped, tag = 'scoped memory for custom-call.2']
    %4 = vsyncpa [#allocation0], 0
    %s5 = sshll.u32 %s0, 4
    %s6 = int_to_ptr.vmem [resolvable:$true] %s5
    %8 = dma.vmem_to_hbm [thread:$0]  %s6, 2048, %s2, [#allocation0]
    %9 = dma.done [#allocation0], 2048
    %10 = vsyncpa [#allocation0], 1
  $region2: #{custom-call.2} parent=0
    #allocation1 [shape = 's32[1]{0}', space=sflag, size = 0x4, scoped, tag = 'scoped memory for custom-call.2']
    %11 = vsyncpa [#allocation1], 0
    %s12 = sshll.u32 %s1, 4
    %s13 = int_to_ptr.vmem [resolvable:$true] %s12
    %15 = dma.vmem_to_hbm [thread:$0]  %s13, 2048, %s3, [#allocation1]
    %16 = dma.done [#allocation1], 2048
    %17 = vsyncpa [#allocation1], 1

// kernel: op_mri_singlecoil_forward.1
$region0: #{op_mri_singlecoil_forward.1}
  #allocation0 [shape = 'u32[]', space=smem, size = 0x4, offset = 0x4, fixed_abs, tag = 'smem constant byte address 0x4 - core index']
  #allocation1 [shape = 'u32[144,128]{1,0:T(1,128)}', space=vmem, size = 0x12000, scoped, tag = 'internal scratch']
  #allocation2 [shape = 'f32[64,16]{1,0:T(8,128)}', space=vmem, size = 0x8000, scoped, tag = 'scratch operand']
  #allocation3 [shape = 'f32[64,16]{1,0:T(8,128)}', space=vmem, size = 0x8000, scoped, tag = 'scratch operand']
  %s0 = inlined_call_operand.vmem [shape: bf16[6,16,16], index: 0, kind: input, shape index: {}, may-alias: {0,1}]
  %s1 = inlined_call_operand.vmem [shape: bf16[6,16,16], index: 1, kind: input, shape index: {}, may-alias: {0,1}]
  %s2 = inlined_call_operand.vmem [shape: f32[16,16], index: 2, kind: input, shape index: {}]
  %s3 = inlined_call_operand.vmem [shape: f32[2,128,16], index: 3, kind: input, shape index: {}]
  %s4 = inlined_call_operand.vmem [shape: f32[128,16], index: 4, kind: output, shape index: {0}]
  %s5 = inlined_call_operand.vmem [shape: f32[128,16], index: 5, kind: output, shape index: {1}]
  %6 = xla_tuple %s4, %s5
  %s7 = sld [smem:[#allocation0]]
  $region95: #{op_mri_singlecoil_forward.1} parent=0
    _
  %s9 = ssub.s32 1, %s7
  %s10 = scalar_select 0, %s9, %s7
  $region1: #{op_mri_singlecoil_forward.1} parent=0
    #allocation4 [shape = 'u8[131072]{0}', space=vmem, size = 0x20000, scoped, tag = 'input window, operand 3']
    loop: start=0, step=1, limit=4
    $region2: #{op_mri_singlecoil_forward.1} parent=1 // loop_pre_header
      _
    $region3: #{op_mri_singlecoil_forward.1} parent=1 // loop_header
      %s12 = sphi 0, %s16
      %p13 = scmp.ge.s32.totalorder %s12, 4
      %s20 = sphi 0, %s20
      %s22 = sphi 0, %s20
      %s23 = sphi 0, %s22
      %s37 = sphi 0, %s23
      %s41 = sphi 0, %s41
      %s43 = sphi 0, %s41
      %s44 = sphi 0, %s43
      %s58 = sphi 0, %s44
      %s62 = sphi 0, %s62
      %s64 = sphi 0, %s62
      %s65 = sphi 0, %s64
      %s79 = sphi 0, %s65
      %s85 = sphi 0, %s87
      %s88 = sphi 0, %s85
      %s89 = sphi 0, %s88
      %s105 = sphi 0, %s89
      %s111 = sphi 0, %s113
      %s114 = sphi 0, %s111
      %s115 = sphi 0, %s114
      %s131 = sphi 0, %s115
      %s137 = sphi 0, %s139
      %s140 = sphi 0, %s137
      %s141 = sphi 0, %s140
      %s157 = sphi 0, %s141
    $region4: #{op_mri_singlecoil_forward.1} parent=1 // loop_header_branch
      %15 = sbr.rel (%p13) target = $region8
    $region5: #{op_mri_singlecoil_forward.1} parent=1 // loop_body
      %s17 = ssub.s32 %s12, 1
      %s18 = ssub.s32 %s12, 2
      %s19 = sadd.s32 %s12, 1
      %s21 = sadd.s32 %s20, 1
      %p24 = scmp.eq.s32.totalorder %s12, 1
      %p25 = scmp.ne.s32.totalorder %s20, %s22
      %p26 = scmp.eq.s32.totalorder %s12, 0
      %p27 = por %p25, %p26
      %p28 = scmp.ne.s32.totalorder %s20, %s22
      %p29 = scmp.eq.s32.totalorder %s17, 1
      %p30 = por %p28, %p29
      %p31 = scmp.ne.s32.totalorder %s22, %s23
      %p32 = scmp.eq.s32.totalorder %s17, 0
      %p33 = por %p31, %p32
      %p34 = scmp.ne.s32.totalorder %s22, %s23
      %p35 = scmp.eq.s32.totalorder %s18, 1
      %p36 = por %p34, %p35
      %p38 = scmp.ne.s32.totalorder %s23, %s37
      %p39 = scmp.eq.s32.totalorder %s18, 0
      %p40 = por %p38, %p39
      %s42 = sadd.s32 %s41, 1
      %p45 = scmp.eq.s32.totalorder %s12, 1
      %p46 = scmp.ne.s32.totalorder %s41, %s43
      %p47 = scmp.eq.s32.totalorder %s12, 0
      %p48 = por %p46, %p47
      %p49 = scmp.ne.s32.totalorder %s41, %s43
      %p50 = scmp.eq.s32.totalorder %s17, 1
      %p51 = por %p49, %p50
      %p52 = scmp.ne.s32.totalorder %s43, %s44
      %p53 = scmp.eq.s32.totalorder %s17, 0
      %p54 = por %p52, %p53
      %p55 = scmp.ne.s32.totalorder %s43, %s44
      %p56 = scmp.eq.s32.totalorder %s18, 1
      %p57 = por %p55, %p56
      %p59 = scmp.ne.s32.totalorder %s44, %s58
      %p60 = scmp.eq.s32.totalorder %s18, 0
      %p61 = por %p59, %p60
      %s63 = sadd.s32 %s62, 1
      %p66 = scmp.eq.s32.totalorder %s12, 1
      %p67 = scmp.ne.s32.totalorder %s62, %s64
      %p68 = scmp.eq.s32.totalorder %s12, 0
      %p69 = por %p67, %p68
      %p70 = scmp.ne.s32.totalorder %s62, %s64
      %p71 = scmp.eq.s32.totalorder %s17, 1
      %p72 = por %p70, %p71
      %p73 = scmp.ne.s32.totalorder %s64, %s65
      %p74 = scmp.eq.s32.totalorder %s17, 0
      %p75 = por %p73, %p74
      %p76 = scmp.ne.s32.totalorder %s64, %s65
      %p77 = scmp.eq.s32.totalorder %s18, 1
      %p78 = por %p76, %p77
      %p80 = scmp.ne.s32.totalorder %s65, %s79
      %p81 = scmp.eq.s32.totalorder %s18, 0
      %p82 = por %p80, %p81
      %s83 = ssub.s32 %s12, %s19
      %p84 = scmp.eq.s32.totalorder %s83, 0
      %s86 = sadd.s32 %s85, 1
      %s87 = scalar_select %p84, %s85, %s86
      %p90 = pneg %p84
      %p91 = scmp.eq.s32.totalorder %s12, 1
      %p92 = por %p90, %p91
      %p93 = scmp.ne.s32.totalorder %s85, %s88
      %p94 = scmp.eq.s32.totalorder %s12, 0
      %p95 = por %p93, %p94
      %p96 = scmp.ne.s32.totalorder %s85, %s88
      %p97 = scmp.eq.s32.totalorder %s17, 1
      %p98 = por %p96, %p97
      %p99 = scmp.ne.s32.totalorder %s88, %s89
      %p100 = scmp.eq.s32.totalorder %s17, 0
      %p101 = por %p99, %p100
      %p102 = scmp.ne.s32.totalorder %s88, %s89
      %p103 = scmp.eq.s32.totalorder %s18, 1
      %p104 = por %p102, %p103
      %p106 = scmp.ne.s32.totalorder %s89, %s105
      %p107 = scmp.eq.s32.totalorder %s18, 0
      %p108 = por %p106, %p107
      %s109 = ssub.s32 %s12, %s19
      %p110 = scmp.eq.s32.totalorder %s109, 0
      %s112 = sadd.s32 %s111, 1
      %s113 = scalar_select %p110, %s111, %s112
      %p116 = pneg %p110
      %p117 = scmp.eq.s32.totalorder %s12, 1
      %p118 = por %p116, %p117
      %p119 = scmp.ne.s32.totalorder %s111, %s114
      %p120 = scmp.eq.s32.totalorder %s12, 0
      %p121 = por %p119, %p120
      %p122 = scmp.ne.s32.totalorder %s111, %s114
      %p123 = scmp.eq.s32.totalorder %s17, 1
      %p124 = por %p122, %p123
      %p125 = scmp.ne.s32.totalorder %s114, %s115
      %p126 = scmp.eq.s32.totalorder %s17, 0
      %p127 = por %p125, %p126
      %p128 = scmp.ne.s32.totalorder %s114, %s115
      %p129 = scmp.eq.s32.totalorder %s18, 1
      %p130 = por %p128, %p129
      %p132 = scmp.ne.s32.totalorder %s115, %s131
      %p133 = scmp.eq.s32.totalorder %s18, 0
      %p134 = por %p132, %p133
      %s135 = ssub.s32 %s12, %s19
      %p136 = scmp.eq.s32.totalorder %s135, 0
      %s138 = sadd.s32 %s137, 1
      %s139 = scalar_select %p136, %s137, %s138
      %p142 = pneg %p136
      %p143 = scmp.eq.s32.totalorder %s12, 1
      %p144 = por %p142, %p143
      %p145 = scmp.ne.s32.totalorder %s137, %s140
      %p146 = scmp.eq.s32.totalorder %s12, 0
      %p147 = por %p145, %p146
      %p148 = scmp.ne.s32.totalorder %s137, %s140
      %p149 = scmp.eq.s32.totalorder %s17, 1
      %p150 = por %p148, %p149
      %p151 = scmp.ne.s32.totalorder %s140, %s141
      %p152 = scmp.eq.s32.totalorder %s17, 0
      %p153 = por %p151, %p152
      %p154 = scmp.ne.s32.totalorder %s140, %s141
      %p155 = scmp.eq.s32.totalorder %s18, 1
      %p156 = por %p154, %p155
      %p158 = scmp.ne.s32.totalorder %s141, %s157
      %p159 = scmp.eq.s32.totalorder %s18, 0
      %p160 = por %p158, %p159
      %p161 = scmp.le.s32.totalorder 1, %s12
      %p162 = scmp.lt.s32.totalorder %s12, 3
      %p163 = pnand %p161, %p162
      %p164 = pneg %p163
      // Predicated region
      $region9: #{op_mri_singlecoil_forward.1} parent=5 // pred_check
        _
      $region10: #{op_mri_singlecoil_forward.1} parent=5 // pred_check_branch
        %166 = sbr.rel (%p163) target = $region12
      $region11: #{op_mri_singlecoil_forward.1} parent=5 // pred_region
        %s167 = ssub.s32 %s12, 1
        // Predicated region
        $region13: #{op_mri_singlecoil_forward.1} parent=11 // pred_check
          %p168 = pneg %p33
        $region14: #{op_mri_singlecoil_forward.1} parent=11 // pred_check_branch
          %170 = sbr.rel (%p168) target = $region16
        $region15: #{op_mri_singlecoil_forward.1} parent=11 // pred_region
          _
        $region16: #{op_mri_singlecoil_forward.1} parent=11 // pred_fallthru
          _
        // Predicated region
        $region17: #{op_mri_singlecoil_forward.1} parent=11 // pred_check
          %p171 = pneg %p54
        $region18: #{op_mri_singlecoil_forward.1} parent=11 // pred_check_branch
          %173 = sbr.rel (%p171) target = $region20
        $region19: #{op_mri_singlecoil_forward.1} parent=11 // pred_region
          _
        $region20: #{op_mri_singlecoil_forward.1} parent=11 // pred_fallthru
          _
        // Predicated region
        $region21: #{op_mri_singlecoil_forward.1} parent=11 // pred_check
          %p174 = pneg %p75
        $region22: #{op_mri_singlecoil_forward.1} parent=11 // pred_check_branch
          %176 = sbr.rel (%p174) target = $region24
        $region23: #{op_mri_singlecoil_forward.1} parent=11 // pred_region
          _
        $region24: #{op_mri_singlecoil_forward.1} parent=11 // pred_fallthru
          _
      $region12: #{op_mri_singlecoil_forward.1} parent=5 // pred_fallthru
        _
      %p177 = scmp.lt.s32.totalorder %s12, 2
      // Predicated region
      $region25: #{op_mri_singlecoil_forward.1} parent=5 // pred_check
        %p178 = pneg %p177
      $region26: #{op_mri_singlecoil_forward.1} parent=5 // pred_check_branch
        %180 = sbr.rel (%p178) target = $region28
      $region27: #{op_mri_singlecoil_forward.1} parent=5 // pred_region
        // Predicated region
        $region29: #{op_mri_singlecoil_forward.1} parent=27 // pred_check
          %p181 = pneg %p95
        $region30: #{op_mri_singlecoil_forward.1} parent=27 // pred_check_branch
          %183 = sbr.rel (%p181) target = $region32
        $region31: #{op_mri_singlecoil_forward.1} parent=27 // pred_region
          %s184 = sand.u32 %s85, 1
          %s185 = sand.u32 %s85, 1
          %s186 = smul.addr %s185, 128
          %s187 = scalar_lea.vmem [#allocation4], %s186
          %s188 = smul.u32 8, %s12
          %s189 = smul.addr %s188, 8
          %s190 = scalar_lea.vmem %s3, %s189
          // Predicated region
          $region33: #{op_mri_singlecoil_forward.1} parent=31 // pred_check
            _
          $region34: #{op_mri_singlecoil_forward.1} parent=31 // pred_check_branch
            %192 = sbr.rel (0) target = $region36
          $region35: #{op_mri_singlecoil_forward.1} parent=31 // pred_region
            // Predicated region
            $region37: #{op_mri_singlecoil_forward.1} parent=35 // pred_check
              _
            $region38: #{op_mri_singlecoil_forward.1} parent=35 // pred_check_branch
              %194 = sbr.rel (0) target = $region40
            $region39: #{op_mri_singlecoil_forward.1} parent=35 // pred_region
              // Predicated region
              $region52: #{op_mri_singlecoil_forward.1} parent=39 // pred_check
                _
              $region53: #{op_mri_singlecoil_forward.1} parent=39 // pred_check_branch
                %240 = sbr.rel (0) target = $region55
              $region54: #{op_mri_singlecoil_forward.1} parent=39 // pred_region
                loop: start=0, step=1, limit=1
                $region56: #{op_mri_singlecoil_forward.1} parent=54 // loop_pre_header
                  _
                $region57: #{op_mri_singlecoil_forward.1} parent=54 // loop_header
                  %s242 = sphi 0, %s246
                  %p243 = scmp.ge.s32.totalorder %s242, 1
                  %s247 = sphi %s190, %s190
                  %s248 = sphi %s187, %s187
                $region58: #{op_mri_singlecoil_forward.1} parent=54 // loop_header_branch
                  %245 = sbr.rel (%p243) target = $region62
                $region59: #{op_mri_singlecoil_forward.1} parent=54 // loop_body
                  %v249 = vld [vmem:[%s247] sm:$0xff]
                  %250 = vst [vmem:[%s248] sm:$0xff] %v249
                  %v251 = vld [vmem:[%s247 + $0x8] sm:$0xff]
                  %252 = vst [vmem:[%s248 + $0x8] sm:$0xff] %v251
                  %v253 = vld [vmem:[%s247 + $0x10] sm:$0xff]
                  %254 = vst [vmem:[%s248 + $0x10] sm:$0xff] %v253
                  %v255 = vld [vmem:[%s247 + $0x18] sm:$0xff]
                  %256 = vst [vmem:[%s248 + $0x18] sm:$0xff] %v255
                  %v257 = vld [vmem:[%s247 + $0x20] sm:$0xff]
                  %258 = vst [vmem:[%s248 + $0x20] sm:$0xff] %v257
                  %v259 = vld [vmem:[%s247 + $0x28] sm:$0xff]
                  %260 = vst [vmem:[%s248 + $0x28] sm:$0xff] %v259
                  %v261 = vld [vmem:[%s247 + $0x30] sm:$0xff]
                  %262 = vst [vmem:[%s248 + $0x30] sm:$0xff] %v261
                  %v263 = vld [vmem:[%s247 + $0x38] sm:$0xff]
                  %264 = vst [vmem:[%s248 + $0x38] sm:$0xff] %v263
                  %v265 = vld [vmem:[%s247 + $0x80] sm:$0xff]
                  %266 = vst [vmem:[%s248 + $0x40] sm:$0xff] %v265
                  %v267 = vld [vmem:[%s247 + $0x88] sm:$0xff]
                  %268 = vst [vmem:[%s248 + $0x48] sm:$0xff] %v267
                  %v269 = vld [vmem:[%s247 + $0x90] sm:$0xff]
                  %270 = vst [vmem:[%s248 + $0x50] sm:$0xff] %v269
                  %v271 = vld [vmem:[%s247 + $0x98] sm:$0xff]
                  %272 = vst [vmem:[%s248 + $0x58] sm:$0xff] %v271
                  %v273 = vld [vmem:[%s247 + $0xa0] sm:$0xff]
                  %274 = vst [vmem:[%s248 + $0x60] sm:$0xff] %v273
                  %v275 = vld [vmem:[%s247 + $0xa8] sm:$0xff]
                  %276 = vst [vmem:[%s248 + $0x68] sm:$0xff] %v275
                  %v277 = vld [vmem:[%s247 + $0xb0] sm:$0xff]
                  %278 = vst [vmem:[%s248 + $0x70] sm:$0xff] %v277
                  %v279 = vld [vmem:[%s247 + $0xb8] sm:$0xff]
                  %280 = vst [vmem:[%s248 + $0x78] sm:$0xff] %v279
                $region60: #{op_mri_singlecoil_forward.1} parent=54 // loop_footer
                  %s246 = sadd.s32 1, %s242
                $region61: #{op_mri_singlecoil_forward.1} parent=54 // loop_footer_branch
                  %241 = sbr.rel target = $region57
                $region62: #{op_mri_singlecoil_forward.1} parent=54 // loop_exit
                  _
              $region55: #{op_mri_singlecoil_forward.1} parent=39 // pred_fallthru
                _
              // Predicated region
              $region63: #{op_mri_singlecoil_forward.1} parent=39 // pred_check
                _
              $region64: #{op_mri_singlecoil_forward.1} parent=39 // pred_check_branch
                %282 = sbr.rel target = $region66
              $region65: #{op_mri_singlecoil_forward.1} parent=39 // pred_region
                _
              $region66: #{op_mri_singlecoil_forward.1} parent=39 // pred_fallthru
                _
            $region40: #{op_mri_singlecoil_forward.1} parent=35 // pred_fallthru
              _
            // Predicated region
            $region41: #{op_mri_singlecoil_forward.1} parent=35 // pred_check
              _
            $region42: #{op_mri_singlecoil_forward.1} parent=35 // pred_check_branch
              %196 = sbr.rel target = $region44
            $region43: #{op_mri_singlecoil_forward.1} parent=35 // pred_region
              %s198 = ssub.s32 256, 1
              loop: start=0, step=1, limit=1
              $region45: #{op_mri_singlecoil_forward.1} parent=43 // loop_pre_header
                _
              $region46: #{op_mri_singlecoil_forward.1} parent=43 // loop_header
                %s200 = sphi 0, %s204
                %p201 = scmp.ge.s32.totalorder %s200, 1
                %s205 = sphi %s190, %s190
                %s206 = sphi %s187, %s187
              $region47: #{op_mri_singlecoil_forward.1} parent=43 // loop_header_branch
                %203 = sbr.rel (%p201) target = $region51
              $region48: #{op_mri_singlecoil_forward.1} parent=43 // loop_body
                %v207 = vld [vmem:[%s205] sm:%s198]
                %208 = vst [vmem:[%s206] sm:%s198] %v207
                %v209 = vld [vmem:[%s205 + $0x8] sm:%s198]
                %210 = vst [vmem:[%s206 + $0x8] sm:%s198] %v209
                %v211 = vld [vmem:[%s205 + $0x10] sm:%s198]
                %212 = vst [vmem:[%s206 + $0x10] sm:%s198] %v211
                %v213 = vld [vmem:[%s205 + $0x18] sm:%s198]
                %214 = vst [vmem:[%s206 + $0x18] sm:%s198] %v213
                %v215 = vld [vmem:[%s205 + $0x20] sm:%s198]
                %216 = vst [vmem:[%s206 + $0x20] sm:%s198] %v215
                %v217 = vld [vmem:[%s205 + $0x28] sm:%s198]
                %218 = vst [vmem:[%s206 + $0x28] sm:%s198] %v217
                %v219 = vld [vmem:[%s205 + $0x30] sm:%s198]
                %220 = vst [vmem:[%s206 + $0x30] sm:%s198] %v219
                %v221 = vld [vmem:[%s205 + $0x38] sm:%s198]
                %222 = vst [vmem:[%s206 + $0x38] sm:%s198] %v221
                %v223 = vld [vmem:[%s205 + $0x80] sm:%s198]
                %224 = vst [vmem:[%s206 + $0x40] sm:%s198] %v223
                %v225 = vld [vmem:[%s205 + $0x88] sm:%s198]
                %226 = vst [vmem:[%s206 + $0x48] sm:%s198] %v225
                %v227 = vld [vmem:[%s205 + $0x90] sm:%s198]
                %228 = vst [vmem:[%s206 + $0x50] sm:%s198] %v227
                %v229 = vld [vmem:[%s205 + $0x98] sm:%s198]
                %230 = vst [vmem:[%s206 + $0x58] sm:%s198] %v229
                %v231 = vld [vmem:[%s205 + $0xa0] sm:%s198]
                %232 = vst [vmem:[%s206 + $0x60] sm:%s198] %v231
                %v233 = vld [vmem:[%s205 + $0xa8] sm:%s198]
                %234 = vst [vmem:[%s206 + $0x68] sm:%s198] %v233
                %v235 = vld [vmem:[%s205 + $0xb0] sm:%s198]
                %236 = vst [vmem:[%s206 + $0x70] sm:%s198] %v235
                %v237 = vld [vmem:[%s205 + $0xb8] sm:%s198]
                %238 = vst [vmem:[%s206 + $0x78] sm:%s198] %v237
              $region49: #{op_mri_singlecoil_forward.1} parent=43 // loop_footer
                %s204 = sadd.s32 1, %s200
              $region50: #{op_mri_singlecoil_forward.1} parent=43 // loop_footer_branch
                %199 = sbr.rel target = $region46
              $region51: #{op_mri_singlecoil_forward.1} parent=43 // loop_exit
                _
            $region44: #{op_mri_singlecoil_forward.1} parent=35 // pred_fallthru
              _
          $region36: #{op_mri_singlecoil_forward.1} parent=31 // pred_fallthru
            _
          %283 = vnop
        $region32: #{op_mri_singlecoil_forward.1} parent=27 // pred_fallthru
          _
      $region28: #{op_mri_singlecoil_forward.1} parent=5 // pred_fallthru
        _
      %p284 = scmp.le.s32.totalorder 1, %s12
      %p285 = scmp.lt.s32.totalorder %s12, 3
      %p286 = pnand %p284, %p285
      %p287 = pneg %p286
      // Predicated region
      $region67: #{op_mri_singlecoil_forward.1} parent=5 // pred_check
        _
      $region68: #{op_mri_singlecoil_forward.1} parent=5 // pred_check_branch
        %289 = sbr.rel (%p286) target = $region70
      $region69: #{op_mri_singlecoil_forward.1} parent=5 // pred_region
        %s290 = ssub.s32 %s12, 1
        %s291 = sand.u32 %s88, 1
        %s292 = sand.u32 %s88, 1
        %s293 = smul.addr %s292, 128
        %s294 = scalar_lea.vmem [#allocation4], %s293
        // Predicated region
        $region71: #{op_mri_singlecoil_forward.1} parent=69 // pred_check
          %p295 = pneg %p101
        $region72: #{op_mri_singlecoil_forward.1} parent=69 // pred_check_branch
          %297 = sbr.rel (%p295) target = $region74
        $region73: #{op_mri_singlecoil_forward.1} parent=69 // pred_region
          _
        $region74: #{op_mri_singlecoil_forward.1} parent=69 // pred_fallthru
          _
        %p298 = pneg %p33
        %p299 = pneg %p30
        %p300 = pneg %p54
        %p301 = pneg %p51
        %p302 = pneg %p75
        %p303 = pneg %p72
        %s304 = sand.u32 %s88, 1
        %s305 = sand.u32 %s88, 1
        %s306 = smul.addr %s305, 128
        %s307 = scalar_lea.vmem [#allocation4], %s306
        %p308 = pneg %p101
        %p309 = pneg %p98
        %p310 = pneg %p127
        %p311 = pneg %p124
        %s312 = smul.u32 8, %s17
        %p313 = scmp.lt.s32.totalorder %s312, 15
        %s314 = scalar_select %p313, %s312, 15
        %s315 = smul.addr %s314, 8
        %s316 = scalar_lea.vmem %s4, %s315
        %p317 = pneg %p153
        %p318 = pneg %p150
        %s319 = smul.u32 8, %s17
        %p320 = scmp.lt.s32.totalorder %s319, 15
        %s321 = scalar_select %p320, %s319, 15
        %s322 = smul.addr %s321, 8
        %s323 = scalar_lea.vmem %s5, %s322
        %s324 = smul.u32 8, %s17
        %s325 = smul.u32 8, %s17
        %p326 = scmp.lt.s32.totalorder %s325, 15
        %s327 = scalar_select %p326, %s325, 15
        %s328 = smul.addr %s327, 8
        %s329 = scalar_lea.vmem %s4, %s328
        %s330 = smul.u32 8, %s17
        %s331 = smul.u32 8, %s17
        %p332 = scmp.lt.s32.totalorder %s331, 15
        %s333 = scalar_select %p332, %s331, 15
        %s334 = smul.addr %s333, 8
        %s335 = scalar_lea.vmem %s5, %s334
        %s336 = smul.u32 8, %s17
        %v338 = vld [vmem:[%s294] sm:$0xff]
        %v339 = vld [vmem:[%s294 + $0x8] sm:$0xff]
        %v340 = vld [vmem:[%s294 + $0x10] sm:$0xff]
        %v341 = vld [vmem:[%s294 + $0x18] sm:$0xff]
        %v342 = vld [vmem:[%s294 + $0x20] sm:$0xff]
        %v343 = vld [vmem:[%s294 + $0x28] sm:$0xff]
        %v344 = vld [vmem:[%s294 + $0x30] sm:$0xff]
        %v345 = vld [vmem:[%s294 + $0x38] sm:$0xff]
        %s346 = scalar_lea.vmem %s294, 64 [#allocation4]
        %v347 = vld [vmem:[%s346] sm:$0xff]
        %v348 = vld [vmem:[%s346 + $0x8] sm:$0xff]
        %v349 = vld [vmem:[%s346 + $0x10] sm:$0xff]
        %v350 = vld [vmem:[%s346 + $0x18] sm:$0xff]
        %v351 = vld [vmem:[%s346 + $0x20] sm:$0xff]
        %v352 = vld [vmem:[%s346 + $0x28] sm:$0xff]
        %v353 = vld [vmem:[%s346 + $0x30] sm:$0xff]
        %v354 = vld [vmem:[%s346 + $0x38] sm:$0xff]
        %v355 = vpack.c.bf16 %v339, %v338
        %v356 = vpack.c.bf16 %v341, %v340
        %v357 = vpack.c.bf16 %v343, %v342
        %v358 = vpack.c.bf16 %v345, %v344
        %v359 = vunpack.c.l.bf16 %v355
        %v360 = vunpack.c.h.bf16 %v355
        %v361 = vunpack.c.l.bf16 %v356
        %v362 = vunpack.c.h.bf16 %v356
        %v363 = vunpack.c.l.bf16 %v357
        %v364 = vunpack.c.h.bf16 %v357
        %v365 = vunpack.c.l.bf16 %v358
        %v366 = vunpack.c.h.bf16 %v358
        %v367 = vsub.f32 %v338, %v359
        %v368 = vsub.f32 %v339, %v360
        %v369 = vsub.f32 %v340, %v361
        %v370 = vsub.f32 %v341, %v362
        %v371 = vsub.f32 %v342, %v363
        %v372 = vsub.f32 %v343, %v364
        %v373 = vsub.f32 %v344, %v365
        %v374 = vsub.f32 %v345, %v366
        %v375 = vpack.c.bf16 %v368, %v367
        %v376 = vpack.c.bf16 %v370, %v369
        %v377 = vpack.c.bf16 %v372, %v371
        %v378 = vpack.c.bf16 %v374, %v373
        %v379 = vpack.c.bf16 %v348, %v347
        %v380 = vpack.c.bf16 %v350, %v349
        %v381 = vpack.c.bf16 %v352, %v351
        %v382 = vpack.c.bf16 %v354, %v353
        %v383 = vunpack.c.l.bf16 %v379
        %v384 = vunpack.c.h.bf16 %v379
        %v385 = vunpack.c.l.bf16 %v380
        %v386 = vunpack.c.h.bf16 %v380
        %v387 = vunpack.c.l.bf16 %v381
        %v388 = vunpack.c.h.bf16 %v381
        %v389 = vunpack.c.l.bf16 %v382
        %v390 = vunpack.c.h.bf16 %v382
        %v391 = vsub.f32 %v347, %v383
        %v392 = vsub.f32 %v348, %v384
        %v393 = vsub.f32 %v349, %v385
        %v394 = vsub.f32 %v350, %v386
        %v395 = vsub.f32 %v351, %v387
        %v396 = vsub.f32 %v352, %v388
        %v397 = vsub.f32 %v353, %v389
        %v398 = vsub.f32 %v354, %v390
        %v399 = vpack.c.bf16 %v392, %v391
        %v400 = vpack.c.bf16 %v394, %v393
        %v401 = vpack.c.bf16 %v396, %v395
        %v402 = vpack.c.bf16 %v398, %v397
        %v403 = vadd.f32 %v338, %v347
        %v404 = vadd.f32 %v339, %v348
        %v405 = vadd.f32 %v340, %v349
        %v406 = vadd.f32 %v341, %v350
        %v407 = vadd.f32 %v342, %v351
        %v408 = vadd.f32 %v343, %v352
        %v409 = vadd.f32 %v344, %v353
        %v410 = vadd.f32 %v345, %v354
        %v411 = vpack.c.bf16 %v404, %v403
        %v412 = vpack.c.bf16 %v406, %v405
        %v413 = vpack.c.bf16 %v408, %v407
        %v414 = vpack.c.bf16 %v410, %v409
        %v415 = vunpack.c.l.bf16 %v411
        %v416 = vunpack.c.h.bf16 %v411
        %v417 = vunpack.c.l.bf16 %v412
        %v418 = vunpack.c.h.bf16 %v412
        %v419 = vunpack.c.l.bf16 %v413
        %v420 = vunpack.c.h.bf16 %v413
        %v421 = vunpack.c.l.bf16 %v414
        %v422 = vunpack.c.h.bf16 %v414
        %v423 = vsub.f32 %v403, %v415
        %v424 = vsub.f32 %v404, %v416
        %v425 = vsub.f32 %v405, %v417
        %v426 = vsub.f32 %v406, %v418
        %v427 = vsub.f32 %v407, %v419
        %v428 = vsub.f32 %v408, %v420
        %v429 = vsub.f32 %v409, %v421
        %v430 = vsub.f32 %v410, %v422
        %v431 = vpack.c.bf16 %v424, %v423
        %v432 = vpack.c.bf16 %v426, %v425
        %v433 = vpack.c.bf16 %v428, %v427
        %v434 = vpack.c.bf16 %v430, %v429
        %v435 = vld [vmem:[%s1] sm:$0xf]
        %v436 = vld [vmem:[%s1 + $0x4] sm:$0xf]
        %s437 = scalar_lea.vmem %s1, 8
        %v438 = vld [vmem:[%s437] sm:$0xf]
        %v439 = vld [vmem:[%s437 + $0x4] sm:$0xf]
        %v442 = vunpack.c.l.b16 %v435
        %v443 = vunpack.c.l.b16 %v436
        %v444 = vpack.c.b16 %v443, %v442
        %vm446 = vcmask 130048
        %v448 = vsel %vm446, %v375, 0
        %v451 = vsel %vm446, %v376, 0
        %v454 = vsel %vm446, %v377, 0
        %v457 = vsel %vm446, %v378, 0
        %459 = vmatprep.subr.bf16.mxu0 0
        %460 = vmatpush1.bf16.msra.mxu0 0
        %461 = vmatprep.subr.bf16.mxu0 0
        %462 = vmatpush1.bf16.msra.mxu0 0
        %463 = vmatprep.subr.bf16.mxu0 0
        %464 = vmatpush1.bf16.msra.mxu0 0
        %465 = vmatprep.subr.bf16.mxu0 0
        %466 = vmatpush1.bf16.msra.mxu0 0
        %467 = vmatprep.subr.bf16.mxu0 0
        %468 = vmatpush1.bf16.msra.mxu0 0
        %469 = vmatprep.subr.bf16.mxu0 0
        %470 = vmatpush1.bf16.msra.mxu0 0
        %471 = vmatprep.subr.bf16.mxu0 0
        %472 = vmatpush1.bf16.msra.mxu0 0
        %473 = vmatprep.subr.bf16.mxu0 0
        %474 = vmatpush1.bf16.msra.mxu0 %v444
        %475 = vmatprep.subr.bf16.mxu0 0
        %476 = vmatpush2.bf16.msra.mxu0 0
        %477 = vmatprep.subr.bf16.mxu0 0
        %478 = vmatpush2.bf16.msra.mxu0 0
        %479 = vmatprep.subr.bf16.mxu0 0
        %480 = vmatpush2.bf16.msra.mxu0 0
        %481 = vmatprep.subr.bf16.mxu0 0
        %482 = vmatpush2.bf16.msra.mxu0 0
        %483 = vmatprep.subr.bf16.mxu0 0
        %484 = vmatpush2.bf16.msra.mxu0 0
        %485 = vmatprep.subr.bf16.mxu0 0
        %486 = vmatpush2.bf16.msra.mxu0 0
        %487 = vmatprep.subr.bf16.mxu0 0
        %488 = vmatpush2.bf16.msra.mxu0 0
        %489 = vmatprep.subr.bf16.mxu0 0
        %490 = vmatpush2.bf16.msra.mxu0 0
        %491 = vmatprep.mubr.bf16.mxu0 0
        %492 = vmatmul.mubr.bf16.gmra.mxu0 %v448
        %v493 = vpop.f32.mrf.mxu0
        %v494 = vadd.f32 0.0, %v493
        %v495 = vpop.f32.mrf.mxu0
        %v496 = vpop.f32.mrf.mxu0
        %v497 = vadd.f32 0.0, %v496
        %v498 = vpop.f32.mrf.mxu0
        %499 = vmatprep.mubr.bf16.mxu0 0
        %500 = vmatmul.mubr.bf16.gmra.mxu0 %v451
        %v501 = vpop.f32.mrf.mxu0
        %v502 = vadd.f32 0.0, %v501
        %v503 = vpop.f32.mrf.mxu0
        %v504 = vpop.f32.mrf.mxu0
        %v505 = vadd.f32 0.0, %v504
        %v506 = vpop.f32.mrf.mxu0
        %507 = vmatprep.mubr.bf16.mxu0 0
        %508 = vmatmul.mubr.bf16.gmra.mxu0 %v454
        %v509 = vpop.f32.mrf.mxu0
        %v510 = vadd.f32 0.0, %v509
        %v511 = vpop.f32.mrf.mxu0
        %v512 = vpop.f32.mrf.mxu0
        %v513 = vadd.f32 0.0, %v512
        %v514 = vpop.f32.mrf.mxu0
        %515 = vmatprep.mubr.bf16.mxu0 0
        %516 = vmatmul.mubr.bf16.gmra.mxu0 %v457
        %v517 = vpop.f32.mrf.mxu0
        %v518 = vadd.f32 0.0, %v517
        %v519 = vpop.f32.mrf.mxu0
        %v520 = vpop.f32.mrf.mxu0
        %v521 = vadd.f32 0.0, %v520
        %v522 = vpop.f32.mrf.mxu0
        %523 = vdwg.mxu0
        %v525 = vsel %vm446, %v355, 0
        %v528 = vsel %vm446, %v356, 0
        %v531 = vsel %vm446, %v357, 0
        %v534 = vsel %vm446, %v358, 0
        %536 = vmatprep.subr.bf16.mxu0 0
        %537 = vmatpush1.bf16.msra.mxu0 0
        %538 = vmatprep.subr.bf16.mxu0 0
        %539 = vmatpush1.bf16.msra.mxu0 0
        %540 = vmatprep.subr.bf16.mxu0 0
        %541 = vmatpush1.bf16.msra.mxu0 0
        %542 = vmatprep.subr.bf16.mxu0 0
        %543 = vmatpush1.bf16.msra.mxu0 0
        %544 = vmatprep.subr.bf16.mxu0 0
        %545 = vmatpush1.bf16.msra.mxu0 0
        %546 = vmatprep.subr.bf16.mxu0 0
        %547 = vmatpush1.bf16.msra.mxu0 0
        %548 = vmatprep.subr.bf16.mxu0 0
        %549 = vmatpush1.bf16.msra.mxu0 0
        %550 = vmatprep.subr.bf16.mxu0 0
        %551 = vmatpush1.bf16.msra.mxu0 %v444
        %552 = vmatprep.subr.bf16.mxu0 0
        %553 = vmatpush2.bf16.msra.mxu0 0
        %554 = vmatprep.subr.bf16.mxu0 0
        %555 = vmatpush2.bf16.msra.mxu0 0
        %556 = vmatprep.subr.bf16.mxu0 0
        %557 = vmatpush2.bf16.msra.mxu0 0
        %558 = vmatprep.subr.bf16.mxu0 0
        %559 = vmatpush2.bf16.msra.mxu0 0
        %560 = vmatprep.subr.bf16.mxu0 0
        %561 = vmatpush2.bf16.msra.mxu0 0
        %562 = vmatprep.subr.bf16.mxu0 0
        %563 = vmatpush2.bf16.msra.mxu0 0
        %564 = vmatprep.subr.bf16.mxu0 0
        %565 = vmatpush2.bf16.msra.mxu0 0
        %566 = vmatprep.subr.bf16.mxu0 0
        %567 = vmatpush2.bf16.msra.mxu0 0
        %568 = vmatprep.mubr.bf16.mxu0 0
        %569 = vmatmul.mubr.bf16.gmra.mxu0 %v525
        %v570 = vpop.f32.mrf.mxu0
        %v571 = vadd.f32 %v494, %v570
        %v572 = vpop.f32.mrf.mxu0
        %v573 = vpop.f32.mrf.mxu0
        %v574 = vadd.f32 %v497, %v573
        %v575 = vpop.f32.mrf.mxu0
        %576 = vmatprep.mubr.bf16.mxu0 0
        %577 = vmatmul.mubr.bf16.gmra.mxu0 %v528
        %v578 = vpop.f32.mrf.mxu0
        %v579 = vadd.f32 %v502, %v578
        %v580 = vpop.f32.mrf.mxu0
        %v581 = vpop.f32.mrf.mxu0
        %v582 = vadd.f32 %v505, %v581
        %v583 = vpop.f32.mrf.mxu0
        %584 = vmatprep.mubr.bf16.mxu0 0
        %585 = vmatmul.mubr.bf16.gmra.mxu0 %v531
        %v586 = vpop.f32.mrf.mxu0
        %v587 = vadd.f32 %v510, %v586
        %v588 = vpop.f32.mrf.mxu0
        %v589 = vpop.f32.mrf.mxu0
        %v590 = vadd.f32 %v513, %v589
        %v591 = vpop.f32.mrf.mxu0
        %592 = vmatprep.mubr.bf16.mxu0 0
        %593 = vmatmul.mubr.bf16.gmra.mxu0 %v534
        %v594 = vpop.f32.mrf.mxu0
        %v595 = vadd.f32 %v518, %v594
        %v596 = vpop.f32.mrf.mxu0
        %v597 = vpop.f32.mrf.mxu0
        %v598 = vadd.f32 %v521, %v597
        %v599 = vpop.f32.mrf.mxu0
        %600 = vdwg.mxu0
        %v603 = vunpack.c.l.b16 %v438
        %v604 = vunpack.c.l.b16 %v439
        %v605 = vpack.c.b16 %v604, %v603
        %607 = vmatprep.subr.bf16.mxu0 0
        %608 = vmatpush1.bf16.msra.mxu0 0
        %609 = vmatprep.subr.bf16.mxu0 0
        %610 = vmatpush1.bf16.msra.mxu0 0
        %611 = vmatprep.subr.bf16.mxu0 0
        %612 = vmatpush1.bf16.msra.mxu0 0
        %613 = vmatprep.subr.bf16.mxu0 0
        %614 = vmatpush1.bf16.msra.mxu0 0
        %615 = vmatprep.subr.bf16.mxu0 0
        %616 = vmatpush1.bf16.msra.mxu0 0
        %617 = vmatprep.subr.bf16.mxu0 0
        %618 = vmatpush1.bf16.msra.mxu0 0
        %619 = vmatprep.subr.bf16.mxu0 0
        %620 = vmatpush1.bf16.msra.mxu0 0
        %621 = vmatprep.subr.bf16.mxu0 0
        %622 = vmatpush1.bf16.msra.mxu0 %v605
        %623 = vmatprep.subr.bf16.mxu0 0
        %624 = vmatpush2.bf16.msra.mxu0 0
        %625 = vmatprep.subr.bf16.mxu0 0
        %626 = vmatpush2.bf16.msra.mxu0 0
        %627 = vmatprep.subr.bf16.mxu0 0
        %628 = vmatpush2.bf16.msra.mxu0 0
        %629 = vmatprep.subr.bf16.mxu0 0
        %630 = vmatpush2.bf16.msra.mxu0 0
        %631 = vmatprep.subr.bf16.mxu0 0
        %632 = vmatpush2.bf16.msra.mxu0 0
        %633 = vmatprep.subr.bf16.mxu0 0
        %634 = vmatpush2.bf16.msra.mxu0 0
        %635 = vmatprep.subr.bf16.mxu0 0
        %636 = vmatpush2.bf16.msra.mxu0 0
        %637 = vmatprep.subr.bf16.mxu0 0
        %638 = vmatpush2.bf16.msra.mxu0 0
        %639 = vmatprep.mubr.bf16.mxu0 0
        %640 = vmatmul.mubr.bf16.gmra.mxu0 %v525
        %v641 = vpop.f32.mrf.mxu0
        %v642 = vadd.f32 0.0, %v641
        %v643 = vpop.f32.mrf.mxu0
        %v644 = vpop.f32.mrf.mxu0
        %v645 = vadd.f32 0.0, %v644
        %v646 = vpop.f32.mrf.mxu0
        %647 = vmatprep.mubr.bf16.mxu0 0
        %648 = vmatmul.mubr.bf16.gmra.mxu0 %v528
        %v649 = vpop.f32.mrf.mxu0
        %v650 = vadd.f32 0.0, %v649
        %v651 = vpop.f32.mrf.mxu0
        %v652 = vpop.f32.mrf.mxu0
        %v653 = vadd.f32 0.0, %v652
        %v654 = vpop.f32.mrf.mxu0
        %655 = vmatprep.mubr.bf16.mxu0 0
        %656 = vmatmul.mubr.bf16.gmra.mxu0 %v531
        %v657 = vpop.f32.mrf.mxu0
        %v658 = vadd.f32 0.0, %v657
        %v659 = vpop.f32.mrf.mxu0
        %v660 = vpop.f32.mrf.mxu0
        %v661 = vadd.f32 0.0, %v660
        %v662 = vpop.f32.mrf.mxu0
        %663 = vmatprep.mubr.bf16.mxu0 0
        %664 = vmatmul.mubr.bf16.gmra.mxu0 %v534
        %v665 = vpop.f32.mrf.mxu0
        %v666 = vadd.f32 0.0, %v665
        %v667 = vpop.f32.mrf.mxu0
        %v668 = vpop.f32.mrf.mxu0
        %v669 = vadd.f32 0.0, %v668
        %v670 = vpop.f32.mrf.mxu0
        %671 = vdwg.mxu0
        %v672 = vadd.f32 %v571, %v642
        %v673 = vadd.f32 %v574, %v645
        %v674 = vadd.f32 %v579, %v650
        %v675 = vadd.f32 %v582, %v653
        %v676 = vadd.f32 %v587, %v658
        %v677 = vadd.f32 %v590, %v661
        %v678 = vadd.f32 %v595, %v666
        %v679 = vadd.f32 %v598, %v669
        %s680 = scalar_lea.vmem %s1, 16
        %v681 = vld [vmem:[%s680] sm:$0xf]
        %v682 = vld [vmem:[%s680 + $0x4] sm:$0xf]
        %s683 = scalar_lea.vmem %s1, 24
        %v684 = vld [vmem:[%s683] sm:$0xf]
        %v685 = vld [vmem:[%s683 + $0x4] sm:$0xf]
        %v688 = vunpack.c.l.b16 %v681
        %v689 = vunpack.c.l.b16 %v682
        %v690 = vpack.c.b16 %v689, %v688
        %v693 = vsel %vm446, %v399, 0
        %v696 = vsel %vm446, %v400, 0
        %v699 = vsel %vm446, %v401, 0
        %v702 = vsel %vm446, %v402, 0
        %704 = vmatprep.subr.bf16.mxu0 0
        %705 = vmatpush1.bf16.msra.mxu0 0
        %706 = vmatprep.subr.bf16.mxu0 0
        %707 = vmatpush1.bf16.msra.mxu0 0
        %708 = vmatprep.subr.bf16.mxu0 0
        %709 = vmatpush1.bf16.msra.mxu0 0
        %710 = vmatprep.subr.bf16.mxu0 0
        %711 = vmatpush1.bf16.msra.mxu0 0
        %712 = vmatprep.subr.bf16.mxu0 0
        %713 = vmatpush1.bf16.msra.mxu0 0
        %714 = vmatprep.subr.bf16.mxu0 0
        %715 = vmatpush1.bf16.msra.mxu0 0
        %716 = vmatprep.subr.bf16.mxu0 0
        %717 = vmatpush1.bf16.msra.mxu0 0
        %718 = vmatprep.subr.bf16.mxu0 0
        %719 = vmatpush1.bf16.msra.mxu0 %v690
        %720 = vmatprep.subr.bf16.mxu0 0
        %721 = vmatpush2.bf16.msra.mxu0 0
        %722 = vmatprep.subr.bf16.mxu0 0
        %723 = vmatpush2.bf16.msra.mxu0 0
        %724 = vmatprep.subr.bf16.mxu0 0
        %725 = vmatpush2.bf16.msra.mxu0 0
        %726 = vmatprep.subr.bf16.mxu0 0
        %727 = vmatpush2.bf16.msra.mxu0 0
        %728 = vmatprep.subr.bf16.mxu0 0
        %729 = vmatpush2.bf16.msra.mxu0 0
        %730 = vmatprep.subr.bf16.mxu0 0
        %731 = vmatpush2.bf16.msra.mxu0 0
        %732 = vmatprep.subr.bf16.mxu0 0
        %733 = vmatpush2.bf16.msra.mxu0 0
        %734 = vmatprep.subr.bf16.mxu0 0
        %735 = vmatpush2.bf16.msra.mxu0 0
        %736 = vmatprep.mubr.bf16.mxu0 0
        %737 = vmatmul.mubr.bf16.gmra.mxu0 %v693
        %v738 = vpop.f32.mrf.mxu0
        %v739 = vadd.f32 0.0, %v738
        %v740 = vpop.f32.mrf.mxu0
        %v741 = vpop.f32.mrf.mxu0
        %v742 = vadd.f32 0.0, %v741
        %v743 = vpop.f32.mrf.mxu0
        %744 = vmatprep.mubr.bf16.mxu0 0
        %745 = vmatmul.mubr.bf16.gmra.mxu0 %v696
        %v746 = vpop.f32.mrf.mxu0
        %v747 = vadd.f32 0.0, %v746
        %v748 = vpop.f32.mrf.mxu0
        %v749 = vpop.f32.mrf.mxu0
        %v750 = vadd.f32 0.0, %v749
        %v751 = vpop.f32.mrf.mxu0
        %752 = vmatprep.mubr.bf16.mxu0 0
        %753 = vmatmul.mubr.bf16.gmra.mxu0 %v699
        %v754 = vpop.f32.mrf.mxu0
        %v755 = vadd.f32 0.0, %v754
        %v756 = vpop.f32.mrf.mxu0
        %v757 = vpop.f32.mrf.mxu0
        %v758 = vadd.f32 0.0, %v757
        %v759 = vpop.f32.mrf.mxu0
        %760 = vmatprep.mubr.bf16.mxu0 0
        %761 = vmatmul.mubr.bf16.gmra.mxu0 %v702
        %v762 = vpop.f32.mrf.mxu0
        %v763 = vadd.f32 0.0, %v762
        %v764 = vpop.f32.mrf.mxu0
        %v765 = vpop.f32.mrf.mxu0
        %v766 = vadd.f32 0.0, %v765
        %v767 = vpop.f32.mrf.mxu0
        %768 = vdwg.mxu0
        %v770 = vsel %vm446, %v379, 0
        %v773 = vsel %vm446, %v380, 0
        %v776 = vsel %vm446, %v381, 0
        %v779 = vsel %vm446, %v382, 0
        %781 = vmatprep.subr.bf16.mxu0 0
        %782 = vmatpush1.bf16.msra.mxu0 0
        %783 = vmatprep.subr.bf16.mxu0 0
        %784 = vmatpush1.bf16.msra.mxu0 0
        %785 = vmatprep.subr.bf16.mxu0 0
        %786 = vmatpush1.bf16.msra.mxu0 0
        %787 = vmatprep.subr.bf16.mxu0 0
        %788 = vmatpush1.bf16.msra.mxu0 0
        %789 = vmatprep.subr.bf16.mxu0 0
        %790 = vmatpush1.bf16.msra.mxu0 0
        %791 = vmatprep.subr.bf16.mxu0 0
        %792 = vmatpush1.bf16.msra.mxu0 0
        %793 = vmatprep.subr.bf16.mxu0 0
        %794 = vmatpush1.bf16.msra.mxu0 0
        %795 = vmatprep.subr.bf16.mxu0 0
        %796 = vmatpush1.bf16.msra.mxu0 %v690
        %797 = vmatprep.subr.bf16.mxu0 0
        %798 = vmatpush2.bf16.msra.mxu0 0
        %799 = vmatprep.subr.bf16.mxu0 0
        %800 = vmatpush2.bf16.msra.mxu0 0
        %801 = vmatprep.subr.bf16.mxu0 0
        %802 = vmatpush2.bf16.msra.mxu0 0
        %803 = vmatprep.subr.bf16.mxu0 0
        %804 = vmatpush2.bf16.msra.mxu0 0
        %805 = vmatprep.subr.bf16.mxu0 0
        %806 = vmatpush2.bf16.msra.mxu0 0
        %807 = vmatprep.subr.bf16.mxu0 0
        %808 = vmatpush2.bf16.msra.mxu0 0
        %809 = vmatprep.subr.bf16.mxu0 0
        %810 = vmatpush2.bf16.msra.mxu0 0
        %811 = vmatprep.subr.bf16.mxu0 0
        %812 = vmatpush2.bf16.msra.mxu0 0
        %813 = vmatprep.mubr.bf16.mxu0 0
        %814 = vmatmul.mubr.bf16.gmra.mxu0 %v770
        %v815 = vpop.f32.mrf.mxu0
        %v816 = vadd.f32 %v739, %v815
        %v817 = vpop.f32.mrf.mxu0
        %v818 = vpop.f32.mrf.mxu0
        %v819 = vadd.f32 %v742, %v818
        %v820 = vpop.f32.mrf.mxu0
        %821 = vmatprep.mubr.bf16.mxu0 0
        %822 = vmatmul.mubr.bf16.gmra.mxu0 %v773
        %v823 = vpop.f32.mrf.mxu0
        %v824 = vadd.f32 %v747, %v823
        %v825 = vpop.f32.mrf.mxu0
        %v826 = vpop.f32.mrf.mxu0
        %v827 = vadd.f32 %v750, %v826
        %v828 = vpop.f32.mrf.mxu0
        %829 = vmatprep.mubr.bf16.mxu0 0
        %830 = vmatmul.mubr.bf16.gmra.mxu0 %v776
        %v831 = vpop.f32.mrf.mxu0
        %v832 = vadd.f32 %v755, %v831
        %v833 = vpop.f32.mrf.mxu0
        %v834 = vpop.f32.mrf.mxu0
        %v835 = vadd.f32 %v758, %v834
        %v836 = vpop.f32.mrf.mxu0
        %837 = vmatprep.mubr.bf16.mxu0 0
        %838 = vmatmul.mubr.bf16.gmra.mxu0 %v779
        %v839 = vpop.f32.mrf.mxu0
        %v840 = vadd.f32 %v763, %v839
        %v841 = vpop.f32.mrf.mxu0
        %v842 = vpop.f32.mrf.mxu0
        %v843 = vadd.f32 %v766, %v842
        %v844 = vpop.f32.mrf.mxu0
        %845 = vdwg.mxu0
        %v848 = vunpack.c.l.b16 %v684
        %v849 = vunpack.c.l.b16 %v685
        %v850 = vpack.c.b16 %v849, %v848
        %852 = vmatprep.subr.bf16.mxu0 0
        %853 = vmatpush1.bf16.msra.mxu0 0
        %854 = vmatprep.subr.bf16.mxu0 0
        %855 = vmatpush1.bf16.msra.mxu0 0
        %856 = vmatprep.subr.bf16.mxu0 0
        %857 = vmatpush1.bf16.msra.mxu0 0
        %858 = vmatprep.subr.bf16.mxu0 0
        %859 = vmatpush1.bf16.msra.mxu0 0
        %860 = vmatprep.subr.bf16.mxu0 0
        %861 = vmatpush1.bf16.msra.mxu0 0
        %862 = vmatprep.subr.bf16.mxu0 0
        %863 = vmatpush1.bf16.msra.mxu0 0
        %864 = vmatprep.subr.bf16.mxu0 0
        %865 = vmatpush1.bf16.msra.mxu0 0
        %866 = vmatprep.subr.bf16.mxu0 0
        %867 = vmatpush1.bf16.msra.mxu0 %v850
        %868 = vmatprep.subr.bf16.mxu0 0
        %869 = vmatpush2.bf16.msra.mxu0 0
        %870 = vmatprep.subr.bf16.mxu0 0
        %871 = vmatpush2.bf16.msra.mxu0 0
        %872 = vmatprep.subr.bf16.mxu0 0
        %873 = vmatpush2.bf16.msra.mxu0 0
        %874 = vmatprep.subr.bf16.mxu0 0
        %875 = vmatpush2.bf16.msra.mxu0 0
        %876 = vmatprep.subr.bf16.mxu0 0
        %877 = vmatpush2.bf16.msra.mxu0 0
        %878 = vmatprep.subr.bf16.mxu0 0
        %879 = vmatpush2.bf16.msra.mxu0 0
        %880 = vmatprep.subr.bf16.mxu0 0
        %881 = vmatpush2.bf16.msra.mxu0 0
        %882 = vmatprep.subr.bf16.mxu0 0
        %883 = vmatpush2.bf16.msra.mxu0 0
        %884 = vmatprep.mubr.bf16.mxu0 0
        %885 = vmatmul.mubr.bf16.gmra.mxu0 %v770
        %v886 = vpop.f32.mrf.mxu0
        %v887 = vadd.f32 0.0, %v886
        %v888 = vpop.f32.mrf.mxu0
        %v889 = vpop.f32.mrf.mxu0
        %v890 = vadd.f32 0.0, %v889
        %v891 = vpop.f32.mrf.mxu0
        %892 = vmatprep.mubr.bf16.mxu0 0
        %893 = vmatmul.mubr.bf16.gmra.mxu0 %v773
        %v894 = vpop.f32.mrf.mxu0
        %v895 = vadd.f32 0.0, %v894
        %v896 = vpop.f32.mrf.mxu0
        %v897 = vpop.f32.mrf.mxu0
        %v898 = vadd.f32 0.0, %v897
        %v899 = vpop.f32.mrf.mxu0
        %900 = vmatprep.mubr.bf16.mxu0 0
        %901 = vmatmul.mubr.bf16.gmra.mxu0 %v776
        %v902 = vpop.f32.mrf.mxu0
        %v903 = vadd.f32 0.0, %v902
        %v904 = vpop.f32.mrf.mxu0
        %v905 = vpop.f32.mrf.mxu0
        %v906 = vadd.f32 0.0, %v905
        %v907 = vpop.f32.mrf.mxu0
        %908 = vmatprep.mubr.bf16.mxu0 0
        %909 = vmatmul.mubr.bf16.gmra.mxu0 %v779
        %v910 = vpop.f32.mrf.mxu0
        %v911 = vadd.f32 0.0, %v910
        %v912 = vpop.f32.mrf.mxu0
        %v913 = vpop.f32.mrf.mxu0
        %v914 = vadd.f32 0.0, %v913
        %v915 = vpop.f32.mrf.mxu0
        %916 = vdwg.mxu0
        %v917 = vadd.f32 %v816, %v887
        %v918 = vadd.f32 %v819, %v890
        %v919 = vadd.f32 %v824, %v895
        %v920 = vadd.f32 %v827, %v898
        %v921 = vadd.f32 %v832, %v903
        %v922 = vadd.f32 %v835, %v906
        %v923 = vadd.f32 %v840, %v911
        %v924 = vadd.f32 %v843, %v914
        %s925 = scalar_lea.vmem %s1, 32
        %v926 = vld [vmem:[%s925] sm:$0xf]
        %v927 = vld [vmem:[%s925 + $0x4] sm:$0xf]
        %s928 = scalar_lea.vmem %s1, 40
        %v929 = vld [vmem:[%s928] sm:$0xf]
        %v930 = vld [vmem:[%s928 + $0x4] sm:$0xf]
        %v933 = vunpack.c.l.b16 %v926
        %v934 = vunpack.c.l.b16 %v927
        %v935 = vpack.c.b16 %v934, %v933
        %v938 = vsel %vm446, %v431, 0
        %v941 = vsel %vm446, %v432, 0
        %v944 = vsel %vm446, %v433, 0
        %v947 = vsel %vm446, %v434, 0
        %949 = vmatprep.subr.bf16.mxu0 0
        %950 = vmatpush1.bf16.msra.mxu0 0
        %951 = vmatprep.subr.bf16.mxu0 0
        %952 = vmatpush1.bf16.msra.mxu0 0
        %953 = vmatprep.subr.bf16.mxu0 0
        %954 = vmatpush1.bf16.msra.mxu0 0
        %955 = vmatprep.subr.bf16.mxu0 0
        %956 = vmatpush1.bf16.msra.mxu0 0
        %957 = vmatprep.subr.bf16.mxu0 0
        %958 = vmatpush1.bf16.msra.mxu0 0
        %959 = vmatprep.subr.bf16.mxu0 0
        %960 = vmatpush1.bf16.msra.mxu0 0
        %961 = vmatprep.subr.bf16.mxu0 0
        %962 = vmatpush1.bf16.msra.mxu0 0
        %963 = vmatprep.subr.bf16.mxu0 0
        %964 = vmatpush1.bf16.msra.mxu0 %v935
        %965 = vmatprep.subr.bf16.mxu0 0
        %966 = vmatpush2.bf16.msra.mxu0 0
        %967 = vmatprep.subr.bf16.mxu0 0
        %968 = vmatpush2.bf16.msra.mxu0 0
        %969 = vmatprep.subr.bf16.mxu0 0
        %970 = vmatpush2.bf16.msra.mxu0 0
        %971 = vmatprep.subr.bf16.mxu0 0
        %972 = vmatpush2.bf16.msra.mxu0 0
        %973 = vmatprep.subr.bf16.mxu0 0
        %974 = vmatpush2.bf16.msra.mxu0 0
        %975 = vmatprep.subr.bf16.mxu0 0
        %976 = vmatpush2.bf16.msra.mxu0 0
        %977 = vmatprep.subr.bf16.mxu0 0
        %978 = vmatpush2.bf16.msra.mxu0 0
        %979 = vmatprep.subr.bf16.mxu0 0
        %980 = vmatpush2.bf16.msra.mxu0 0
        %981 = vmatprep.mubr.bf16.mxu0 0
        %982 = vmatmul.mubr.bf16.gmra.mxu0 %v938
        %v983 = vpop.f32.mrf.mxu0
        %v984 = vadd.f32 0.0, %v983
        %v985 = vpop.f32.mrf.mxu0
        %v986 = vpop.f32.mrf.mxu0
        %v987 = vadd.f32 0.0, %v986
        %v988 = vpop.f32.mrf.mxu0
        %989 = vmatprep.mubr.bf16.mxu0 0
        %990 = vmatmul.mubr.bf16.gmra.mxu0 %v941
        %v991 = vpop.f32.mrf.mxu0
        %v992 = vadd.f32 0.0, %v991
        %v993 = vpop.f32.mrf.mxu0
        %v994 = vpop.f32.mrf.mxu0
        %v995 = vadd.f32 0.0, %v994
        %v996 = vpop.f32.mrf.mxu0
        %997 = vmatprep.mubr.bf16.mxu0 0
        %998 = vmatmul.mubr.bf16.gmra.mxu0 %v944
        %v999 = vpop.f32.mrf.mxu0
        %v1000 = vadd.f32 0.0, %v999
        %v1001 = vpop.f32.mrf.mxu0
        %v1002 = vpop.f32.mrf.mxu0
        %v1003 = vadd.f32 0.0, %v1002
        %v1004 = vpop.f32.mrf.mxu0
        %1005 = vmatprep.mubr.bf16.mxu0 0
        %1006 = vmatmul.mubr.bf16.gmra.mxu0 %v947
        %v1007 = vpop.f32.mrf.mxu0
        %v1008 = vadd.f32 0.0, %v1007
        %v1009 = vpop.f32.mrf.mxu0
        %v1010 = vpop.f32.mrf.mxu0
        %v1011 = vadd.f32 0.0, %v1010
        %v1012 = vpop.f32.mrf.mxu0
        %1013 = vdwg.mxu0
        %v1015 = vsel %vm446, %v411, 0
        %v1018 = vsel %vm446, %v412, 0
        %v1021 = vsel %vm446, %v413, 0
        %v1024 = vsel %vm446, %v414, 0
        %1026 = vmatprep.subr.bf16.mxu0 0
        %1027 = vmatpush1.bf16.msra.mxu0 0
        %1028 = vmatprep.subr.bf16.mxu0 0
        %1029 = vmatpush1.bf16.msra.mxu0 0
        %1030 = vmatprep.subr.bf16.mxu0 0
        %1031 = vmatpush1.bf16.msra.mxu0 0
        %1032 = vmatprep.subr.bf16.mxu0 0
        %1033 = vmatpush1.bf16.msra.mxu0 0
        %1034 = vmatprep.subr.bf16.mxu0 0
        %1035 = vmatpush1.bf16.msra.mxu0 0
        %1036 = vmatprep.subr.bf16.mxu0 0
        %1037 = vmatpush1.bf16.msra.mxu0 0
        %1038 = vmatprep.subr.bf16.mxu0 0
        %1039 = vmatpush1.bf16.msra.mxu0 0
        %1040 = vmatprep.subr.bf16.mxu0 0
        %1041 = vmatpush1.bf16.msra.mxu0 %v935
        %1042 = vmatprep.subr.bf16.mxu0 0
        %1043 = vmatpush2.bf16.msra.mxu0 0
        %1044 = vmatprep.subr.bf16.mxu0 0
        %1045 = vmatpush2.bf16.msra.mxu0 0
        %1046 = vmatprep.subr.bf16.mxu0 0
        %1047 = vmatpush2.bf16.msra.mxu0 0
        %1048 = vmatprep.subr.bf16.mxu0 0
        %1049 = vmatpush2.bf16.msra.mxu0 0
        %1050 = vmatprep.subr.bf16.mxu0 0
        %1051 = vmatpush2.bf16.msra.mxu0 0
        %1052 = vmatprep.subr.bf16.mxu0 0
        %1053 = vmatpush2.bf16.msra.mxu0 0
        %1054 = vmatprep.subr.bf16.mxu0 0
        %1055 = vmatpush2.bf16.msra.mxu0 0
        %1056 = vmatprep.subr.bf16.mxu0 0
        %1057 = vmatpush2.bf16.msra.mxu0 0
        %1058 = vmatprep.mubr.bf16.mxu0 0
        %1059 = vmatmul.mubr.bf16.gmra.mxu0 %v1015
        %v1060 = vpop.f32.mrf.mxu0
        %v1061 = vadd.f32 %v984, %v1060
        %v1062 = vpop.f32.mrf.mxu0
        %v1063 = vpop.f32.mrf.mxu0
        %v1064 = vadd.f32 %v987, %v1063
        %v1065 = vpop.f32.mrf.mxu0
        %1066 = vmatprep.mubr.bf16.mxu0 0
        %1067 = vmatmul.mubr.bf16.gmra.mxu0 %v1018
        %v1068 = vpop.f32.mrf.mxu0
        %v1069 = vadd.f32 %v992, %v1068
        %v1070 = vpop.f32.mrf.mxu0
        %v1071 = vpop.f32.mrf.mxu0
        %v1072 = vadd.f32 %v995, %v1071
        %v1073 = vpop.f32.mrf.mxu0
        %1074 = vmatprep.mubr.bf16.mxu0 0
        %1075 = vmatmul.mubr.bf16.gmra.mxu0 %v1021
        %v1076 = vpop.f32.mrf.mxu0
        %v1077 = vadd.f32 %v1000, %v1076
        %v1078 = vpop.f32.mrf.mxu0
        %v1079 = vpop.f32.mrf.mxu0
        %v1080 = vadd.f32 %v1003, %v1079
        %v1081 = vpop.f32.mrf.mxu0
        %1082 = vmatprep.mubr.bf16.mxu0 0
        %1083 = vmatmul.mubr.bf16.gmra.mxu0 %v1024
        %v1084 = vpop.f32.mrf.mxu0
        %v1085 = vadd.f32 %v1008, %v1084
        %v1086 = vpop.f32.mrf.mxu0
        %v1087 = vpop.f32.mrf.mxu0
        %v1088 = vadd.f32 %v1011, %v1087
        %v1089 = vpop.f32.mrf.mxu0
        %1090 = vdwg.mxu0
        %v1093 = vunpack.c.l.b16 %v929
        %v1094 = vunpack.c.l.b16 %v930
        %v1095 = vpack.c.b16 %v1094, %v1093
        %1097 = vmatprep.subr.bf16.mxu0 0
        %1098 = vmatpush1.bf16.msra.mxu0 0
        %1099 = vmatprep.subr.bf16.mxu0 0
        %1100 = vmatpush1.bf16.msra.mxu0 0
        %1101 = vmatprep.subr.bf16.mxu0 0
        %1102 = vmatpush1.bf16.msra.mxu0 0
        %1103 = vmatprep.subr.bf16.mxu0 0
        %1104 = vmatpush1.bf16.msra.mxu0 0
        %1105 = vmatprep.subr.bf16.mxu0 0
        %1106 = vmatpush1.bf16.msra.mxu0 0
        %1107 = vmatprep.subr.bf16.mxu0 0
        %1108 = vmatpush1.bf16.msra.mxu0 0
        %1109 = vmatprep.subr.bf16.mxu0 0
        %1110 = vmatpush1.bf16.msra.mxu0 0
        %1111 = vmatprep.subr.bf16.mxu0 0
        %1112 = vmatpush1.bf16.msra.mxu0 %v1095
        %1113 = vmatprep.subr.bf16.mxu0 0
        %1114 = vmatpush2.bf16.msra.mxu0 0
        %1115 = vmatprep.subr.bf16.mxu0 0
        %1116 = vmatpush2.bf16.msra.mxu0 0
        %1117 = vmatprep.subr.bf16.mxu0 0
        %1118 = vmatpush2.bf16.msra.mxu0 0
        %1119 = vmatprep.subr.bf16.mxu0 0
        %1120 = vmatpush2.bf16.msra.mxu0 0
        %1121 = vmatprep.subr.bf16.mxu0 0
        %1122 = vmatpush2.bf16.msra.mxu0 0
        %1123 = vmatprep.subr.bf16.mxu0 0
        %1124 = vmatpush2.bf16.msra.mxu0 0
        %1125 = vmatprep.subr.bf16.mxu0 0
        %1126 = vmatpush2.bf16.msra.mxu0 0
        %1127 = vmatprep.subr.bf16.mxu0 0
        %1128 = vmatpush2.bf16.msra.mxu0 0
        %1129 = vmatprep.mubr.bf16.mxu0 0
        %1130 = vmatmul.mubr.bf16.gmra.mxu0 %v1015
        %v1131 = vpop.f32.mrf.mxu0
        %v1132 = vadd.f32 0.0, %v1131
        %v1133 = vpop.f32.mrf.mxu0
        %v1134 = vpop.f32.mrf.mxu0
        %v1135 = vadd.f32 0.0, %v1134
        %v1136 = vpop.f32.mrf.mxu0
        %1137 = vmatprep.mubr.bf16.mxu0 0
        %1138 = vmatmul.mubr.bf16.gmra.mxu0 %v1018
        %v1139 = vpop.f32.mrf.mxu0
        %v1140 = vadd.f32 0.0, %v1139
        %v1141 = vpop.f32.mrf.mxu0
        %v1142 = vpop.f32.mrf.mxu0
        %v1143 = vadd.f32 0.0, %v1142
        %v1144 = vpop.f32.mrf.mxu0
        %1145 = vmatprep.mubr.bf16.mxu0 0
        %1146 = vmatmul.mubr.bf16.gmra.mxu0 %v1021
        %v1147 = vpop.f32.mrf.mxu0
        %v1148 = vadd.f32 0.0, %v1147
        %v1149 = vpop.f32.mrf.mxu0
        %v1150 = vpop.f32.mrf.mxu0
        %v1151 = vadd.f32 0.0, %v1150
        %v1152 = vpop.f32.mrf.mxu0
        %1153 = vmatprep.mubr.bf16.mxu0 0
        %1154 = vmatmul.mubr.bf16.gmra.mxu0 %v1024
        %v1155 = vpop.f32.mrf.mxu0
        %v1156 = vadd.f32 0.0, %v1155
        %v1157 = vpop.f32.mrf.mxu0
        %v1158 = vpop.f32.mrf.mxu0
        %v1159 = vadd.f32 0.0, %v1158
        %v1160 = vpop.f32.mrf.mxu0
        %1161 = vdwg.mxu0
        %v1162 = vadd.f32 %v1061, %v1132
        %v1163 = vadd.f32 %v1064, %v1135
        %v1164 = vadd.f32 %v1069, %v1140
        %v1165 = vadd.f32 %v1072, %v1143
        %v1166 = vadd.f32 %v1077, %v1148
        %v1167 = vadd.f32 %v1080, %v1151
        %v1168 = vadd.f32 %v1085, %v1156
        %v1169 = vadd.f32 %v1088, %v1159
        %v1170 = vsub.f32 %v672, %v917
        %v1171 = vsub.f32 %v673, %v918
        %v1172 = vsub.f32 %v674, %v919
        %v1173 = vsub.f32 %v675, %v920
        %v1174 = vsub.f32 %v676, %v921
        %v1175 = vsub.f32 %v677, %v922
        %v1176 = vsub.f32 %v678, %v923
        %v1177 = vsub.f32 %v679, %v924
        %1178 = vst.msk [vmem:[#allocation2] sm:$0xff] %vm446, %v1170
        %1179 = vst.msk [vmem:[#allocation2 + $0x8] sm:$0xff] %vm446, %v1171
        %1180 = vst.msk [vmem:[#allocation2 + $0x10] sm:$0xff] %vm446, %v1172
        %1181 = vst.msk [vmem:[#allocation2 + $0x18] sm:$0xff] %vm446, %v1173
        %1182 = vst.msk [vmem:[#allocation2 + $0x20] sm:$0xff] %vm446, %v1174
        %1183 = vst.msk [vmem:[#allocation2 + $0x28] sm:$0xff] %vm446, %v1175
        %1184 = vst.msk [vmem:[#allocation2 + $0x30] sm:$0xff] %vm446, %v1176
        %1185 = vst.msk [vmem:[#allocation2 + $0x38] sm:$0xff] %vm446, %v1177
        %v1186 = vsub.f32 %v1162, %v672
        %v1187 = vsub.f32 %v1163, %v673
        %v1188 = vsub.f32 %v1164, %v674
        %v1189 = vsub.f32 %v1165, %v675
        %v1190 = vsub.f32 %v1166, %v676
        %v1191 = vsub.f32 %v1167, %v677
        %v1192 = vsub.f32 %v1168, %v678
        %v1193 = vsub.f32 %v1169, %v679
        %v1194 = vsub.f32 %v1186, %v917
        %v1195 = vsub.f32 %v1187, %v918
        %v1196 = vsub.f32 %v1188, %v919
        %v1197 = vsub.f32 %v1189, %v920
        %v1198 = vsub.f32 %v1190, %v921
        %v1199 = vsub.f32 %v1191, %v922
        %v1200 = vsub.f32 %v1192, %v923
        %v1201 = vsub.f32 %v1193, %v924
        %1202 = vst.msk [vmem:[#allocation3] sm:$0xff] %vm446, %v1194
        %1203 = vst.msk [vmem:[#allocation3 + $0x8] sm:$0xff] %vm446, %v1195
        %1204 = vst.msk [vmem:[#allocation3 + $0x10] sm:$0xff] %vm446, %v1196
        %1205 = vst.msk [vmem:[#allocation3 + $0x18] sm:$0xff] %vm446, %v1197
        %1206 = vst.msk [vmem:[#allocation3 + $0x20] sm:$0xff] %vm446, %v1198
        %1207 = vst.msk [vmem:[#allocation3 + $0x28] sm:$0xff] %vm446, %v1199
        %1208 = vst.msk [vmem:[#allocation3 + $0x30] sm:$0xff] %vm446, %v1200
        %1209 = vst.msk [vmem:[#allocation3 + $0x38] sm:$0xff] %vm446, %v1201
        %v1210 = vld [vmem:[%s0] sm:$0xf]
        %v1211 = vld [vmem:[%s0 + $0x4] sm:$0xf]
        %s1212 = scalar_lea.vmem %s0, 8
        %v1213 = vld [vmem:[%s1212] sm:$0xf]
        %v1214 = vld [vmem:[%s1212 + $0x4] sm:$0xf]
        %s1215 = scalar_lea.vmem %s0, 16
        %v1216 = vld [vmem:[%s1215] sm:$0xf]
        %v1217 = vld [vmem:[%s1215 + $0x4] sm:$0xf]
        %s1218 = scalar_lea.vmem %s0, 24
        %v1219 = vld [vmem:[%s1218] sm:$0xf]
        %v1220 = vld [vmem:[%s1218 + $0x4] sm:$0xf]
        %s1221 = scalar_lea.vmem %s0, 32
        %v1222 = vld [vmem:[%s1221] sm:$0xf]
        %v1223 = vld [vmem:[%s1221 + $0x4] sm:$0xf]
        %s1224 = scalar_lea.vmem %s0, 40
        %v1225 = vld [vmem:[%s1224] sm:$0xf]
        %v1226 = vld [vmem:[%s1224 + $0x4] sm:$0xf]
        %v1227 = vld [vmem:[%s2] sm:$0xff]
        %v1228 = vld [vmem:[%s2 + $0x8] sm:$0xff]
        %v1229 = vld [vmem:[#allocation2] sm:$0xff]
        %v1230 = vld [vmem:[#allocation2 + $0x8] sm:$0xff]
        %v1231 = vld [vmem:[#allocation3] sm:$0xff]
        %v1232 = vld [vmem:[#allocation3 + $0x8] sm:$0xff]
        %v1233 = vpack.c.bf16 %v1230, %v1229
        %v1234 = vunpack.c.l.bf16 %v1233
        %v1235 = vunpack.c.h.bf16 %v1233
        %v1236 = vsub.f32 %v1229, %v1234
        %v1237 = vsub.f32 %v1230, %v1235
        %v1238 = vpack.c.bf16 %v1237, %v1236
        %v1239 = vpack.c.bf16 %v1232, %v1231
        %v1240 = vunpack.c.l.bf16 %v1239
        %v1241 = vunpack.c.h.bf16 %v1239
        %v1242 = vsub.f32 %v1231, %v1240
        %v1243 = vsub.f32 %v1232, %v1241
        %v1244 = vpack.c.bf16 %v1243, %v1242
        %v1245 = vadd.f32 %v1229, %v1231
        %v1246 = vadd.f32 %v1230, %v1232
        %v1247 = vpack.c.bf16 %v1246, %v1245
        %v1248 = vunpack.c.l.bf16 %v1247
        %v1249 = vunpack.c.h.bf16 %v1247
        %v1250 = vsub.f32 %v1245, %v1248
        %v1251 = vsub.f32 %v1246, %v1249
        %v1252 = vpack.c.bf16 %v1251, %v1250
        %v1255 = vunpack.c.l.b16 %v1213
        %v1256 = vunpack.c.l.b16 %v1214
        %v1257 = vpack.c.b16 %v1256, %v1255
        %v1259 = vsel %vm446, %v1257, 0
        %1261 = vmatprep.subr.bf16.mxu0 0
        %1262 = vmatpush1.bf16.msra.mxu0 0
        %1263 = vmatprep.subr.bf16.mxu0 0
        %1264 = vmatpush1.bf16.msra.mxu0 0
        %1265 = vmatprep.subr.bf16.mxu0 0
        %1266 = vmatpush1.bf16.msra.mxu0 0
        %1267 = vmatprep.subr.bf16.mxu0 0
        %1268 = vmatpush1.bf16.msra.mxu0 0
        %1269 = vmatprep.subr.bf16.mxu0 0
        %1270 = vmatpush1.bf16.msra.mxu0 0
        %1271 = vmatprep.subr.bf16.mxu0 0
        %1272 = vmatpush1.bf16.msra.mxu0 0
        %1273 = vmatprep.subr.bf16.mxu0 0
        %1274 = vmatpush1.bf16.msra.mxu0 0
        %1275 = vmatprep.subr.bf16.mxu0 0
        %1276 = vmatpush1.bf16.msra.mxu0 %v1233
        %1277 = vmatprep.subr.bf16.mxu0 0
        %1278 = vmatpush2.bf16.msra.mxu0 0
        %1279 = vmatprep.subr.bf16.mxu0 0
        %1280 = vmatpush2.bf16.msra.mxu0 0
        %1281 = vmatprep.subr.bf16.mxu0 0
        %1282 = vmatpush2.bf16.msra.mxu0 0
        %1283 = vmatprep.subr.bf16.mxu0 0
        %1284 = vmatpush2.bf16.msra.mxu0 0
        %1285 = vmatprep.subr.bf16.mxu0 0
        %1286 = vmatpush2.bf16.msra.mxu0 0
        %1287 = vmatprep.subr.bf16.mxu0 0
        %1288 = vmatpush2.bf16.msra.mxu0 0
        %1289 = vmatprep.subr.bf16.mxu0 0
        %1290 = vmatpush2.bf16.msra.mxu0 0
        %1291 = vmatprep.subr.bf16.mxu0 0
        %1292 = vmatpush2.bf16.msra.mxu0 0
        %1293 = vmatprep.mubr.bf16.mxu0 0
        %1294 = vmatmul.mubr.bf16.gmra.mxu0 %v1259
        %v1295 = vpop.f32.mrf.mxu0
        %v1296 = vadd.f32 0.0, %v1295
        %v1297 = vpop.f32.mrf.mxu0
        %v1298 = vpop.f32.mrf.mxu0
        %v1299 = vadd.f32 0.0, %v1298
        %v1300 = vpop.f32.mrf.mxu0
        %1301 = vdwg.mxu0
        %v1304 = vunpack.c.l.b16 %v1210
        %v1305 = vunpack.c.l.b16 %v1211
        %v1306 = vpack.c.b16 %v1305, %v1304
        %v1308 = vsel %vm446, %v1306, 0
        %1310 = vmatprep.subr.bf16.mxu0 0
        %1311 = vmatpush1.bf16.msra.mxu0 0
        %1312 = vmatprep.subr.bf16.mxu0 0
        %1313 = vmatpush1.bf16.msra.mxu0 0
        %1314 = vmatprep.subr.bf16.mxu0 0
        %1315 = vmatpush1.bf16.msra.mxu0 0
        %1316 = vmatprep.subr.bf16.mxu0 0
        %1317 = vmatpush1.bf16.msra.mxu0 0
        %1318 = vmatprep.subr.bf16.mxu0 0
        %1319 = vmatpush1.bf16.msra.mxu0 0
        %1320 = vmatprep.subr.bf16.mxu0 0
        %1321 = vmatpush1.bf16.msra.mxu0 0
        %1322 = vmatprep.subr.bf16.mxu0 0
        %1323 = vmatpush1.bf16.msra.mxu0 0
        %1324 = vmatprep.subr.bf16.mxu0 0
        %1325 = vmatpush1.bf16.msra.mxu0 %v1233
        %1326 = vmatprep.subr.bf16.mxu0 0
        %1327 = vmatpush2.bf16.msra.mxu0 0
        %1328 = vmatprep.subr.bf16.mxu0 0
        %1329 = vmatpush2.bf16.msra.mxu0 0
        %1330 = vmatprep.subr.bf16.mxu0 0
        %1331 = vmatpush2.bf16.msra.mxu0 0
        %1332 = vmatprep.subr.bf16.mxu0 0
        %1333 = vmatpush2.bf16.msra.mxu0 0
        %1334 = vmatprep.subr.bf16.mxu0 0
        %1335 = vmatpush2.bf16.msra.mxu0 0
        %1336 = vmatprep.subr.bf16.mxu0 0
        %1337 = vmatpush2.bf16.msra.mxu0 0
        %1338 = vmatprep.subr.bf16.mxu0 0
        %1339 = vmatpush2.bf16.msra.mxu0 0
        %1340 = vmatprep.subr.bf16.mxu0 0
        %1341 = vmatpush2.bf16.msra.mxu0 0
        %1342 = vmatprep.mubr.bf16.mxu0 0
        %1343 = vmatmul.mubr.bf16.gmra.mxu0 %v1308
        %v1344 = vpop.f32.mrf.mxu0
        %v1345 = vadd.f32 %v1296, %v1344
        %v1346 = vpop.f32.mrf.mxu0
        %v1347 = vpop.f32.mrf.mxu0
        %v1348 = vadd.f32 %v1299, %v1347
        %v1349 = vpop.f32.mrf.mxu0
        %1350 = vdwg.mxu0
        %1351 = vmatprep.subr.bf16.mxu0 0
        %1352 = vmatpush1.bf16.msra.mxu0 0
        %1353 = vmatprep.subr.bf16.mxu0 0
        %1354 = vmatpush1.bf16.msra.mxu0 0
        %1355 = vmatprep.subr.bf16.mxu0 0
        %1356 = vmatpush1.bf16.msra.mxu0 0
        %1357 = vmatprep.subr.bf16.mxu0 0
        %1358 = vmatpush1.bf16.msra.mxu0 0
        %1359 = vmatprep.subr.bf16.mxu0 0
        %1360 = vmatpush1.bf16.msra.mxu0 0
        %1361 = vmatprep.subr.bf16.mxu0 0
        %1362 = vmatpush1.bf16.msra.mxu0 0
        %1363 = vmatprep.subr.bf16.mxu0 0
        %1364 = vmatpush1.bf16.msra.mxu0 0
        %1365 = vmatprep.subr.bf16.mxu0 0
        %1366 = vmatpush1.bf16.msra.mxu0 %v1238
        %1367 = vmatprep.subr.bf16.mxu0 0
        %1368 = vmatpush2.bf16.msra.mxu0 0
        %1369 = vmatprep.subr.bf16.mxu0 0
        %1370 = vmatpush2.bf16.msra.mxu0 0
        %1371 = vmatprep.subr.bf16.mxu0 0
        %1372 = vmatpush2.bf16.msra.mxu0 0
        %1373 = vmatprep.subr.bf16.mxu0 0
        %1374 = vmatpush2.bf16.msra.mxu0 0
        %1375 = vmatprep.subr.bf16.mxu0 0
        %1376 = vmatpush2.bf16.msra.mxu0 0
        %1377 = vmatprep.subr.bf16.mxu0 0
        %1378 = vmatpush2.bf16.msra.mxu0 0
        %1379 = vmatprep.subr.bf16.mxu0 0
        %1380 = vmatpush2.bf16.msra.mxu0 0
        %1381 = vmatprep.subr.bf16.mxu0 0
        %1382 = vmatpush2.bf16.msra.mxu0 0
        %1383 = vmatprep.mubr.bf16.mxu0 0
        %1384 = vmatmul.mubr.bf16.gmra.mxu0 %v1308
        %v1385 = vpop.f32.mrf.mxu0
        %v1386 = vadd.f32 0.0, %v1385
        %v1387 = vpop.f32.mrf.mxu0
        %v1388 = vpop.f32.mrf.mxu0
        %v1389 = vadd.f32 0.0, %v1388
        %v1390 = vpop.f32.mrf.mxu0
        %1391 = vdwg.mxu0
        %v1392 = vadd.f32 %v1345, %v1386
        %v1393 = vadd.f32 %v1348, %v1389
        %v1396 = vunpack.c.l.b16 %v1219
        %v1397 = vunpack.c.l.b16 %v1220
        %v1398 = vpack.c.b16 %v1397, %v1396
        %v1400 = vsel %vm446, %v1398, 0
        %1402 = vmatprep.subr.bf16.mxu0 0
        %1403 = vmatpush1.bf16.msra.mxu0 0
        %1404 = vmatprep.subr.bf16.mxu0 0
        %1405 = vmatpush1.bf16.msra.mxu0 0
        %1406 = vmatprep.subr.bf16.mxu0 0
        %1407 = vmatpush1.bf16.msra.mxu0 0
        %1408 = vmatprep.subr.bf16.mxu0 0
        %1409 = vmatpush1.bf16.msra.mxu0 0
        %1410 = vmatprep.subr.bf16.mxu0 0
        %1411 = vmatpush1.bf16.msra.mxu0 0
        %1412 = vmatprep.subr.bf16.mxu0 0
        %1413 = vmatpush1.bf16.msra.mxu0 0
        %1414 = vmatprep.subr.bf16.mxu0 0
        %1415 = vmatpush1.bf16.msra.mxu0 0
        %1416 = vmatprep.subr.bf16.mxu0 0
        %1417 = vmatpush1.bf16.msra.mxu0 %v1239
        %1418 = vmatprep.subr.bf16.mxu0 0
        %1419 = vmatpush2.bf16.msra.mxu0 0
        %1420 = vmatprep.subr.bf16.mxu0 0
        %1421 = vmatpush2.bf16.msra.mxu0 0
        %1422 = vmatprep.subr.bf16.mxu0 0
        %1423 = vmatpush2.bf16.msra.mxu0 0
        %1424 = vmatprep.subr.bf16.mxu0 0
        %1425 = vmatpush2.bf16.msra.mxu0 0
        %1426 = vmatprep.subr.bf16.mxu0 0
        %1427 = vmatpush2.bf16.msra.mxu0 0
        %1428 = vmatprep.subr.bf16.mxu0 0
        %1429 = vmatpush2.bf16.msra.mxu0 0
        %1430 = vmatprep.subr.bf16.mxu0 0
        %1431 = vmatpush2.bf16.msra.mxu0 0
        %1432 = vmatprep.subr.bf16.mxu0 0
        %1433 = vmatpush2.bf16.msra.mxu0 0
        %1434 = vmatprep.mubr.bf16.mxu0 0
        %1435 = vmatmul.mubr.bf16.gmra.mxu0 %v1400
        %v1436 = vpop.f32.mrf.mxu0
        %v1437 = vadd.f32 0.0, %v1436
        %v1438 = vpop.f32.mrf.mxu0
        %v1439 = vpop.f32.mrf.mxu0
        %v1440 = vadd.f32 0.0, %v1439
        %v1441 = vpop.f32.mrf.mxu0
        %1442 = vdwg.mxu0
        %v1445 = vunpack.c.l.b16 %v1216
        %v1446 = vunpack.c.l.b16 %v1217
        %v1447 = vpack.c.b16 %v1446, %v1445
        %v1449 = vsel %vm446, %v1447, 0
        %1451 = vmatprep.subr.bf16.mxu0 0
        %1452 = vmatpush1.bf16.msra.mxu0 0
        %1453 = vmatprep.subr.bf16.mxu0 0
        %1454 = vmatpush1.bf16.msra.mxu0 0
        %1455 = vmatprep.subr.bf16.mxu0 0
        %1456 = vmatpush1.bf16.msra.mxu0 0
        %1457 = vmatprep.subr.bf16.mxu0 0
        %1458 = vmatpush1.bf16.msra.mxu0 0
        %1459 = vmatprep.subr.bf16.mxu0 0
        %1460 = vmatpush1.bf16.msra.mxu0 0
        %1461 = vmatprep.subr.bf16.mxu0 0
        %1462 = vmatpush1.bf16.msra.mxu0 0
        %1463 = vmatprep.subr.bf16.mxu0 0
        %1464 = vmatpush1.bf16.msra.mxu0 0
        %1465 = vmatprep.subr.bf16.mxu0 0
        %1466 = vmatpush1.bf16.msra.mxu0 %v1239
        %1467 = vmatprep.subr.bf16.mxu0 0
        %1468 = vmatpush2.bf16.msra.mxu0 0
        %1469 = vmatprep.subr.bf16.mxu0 0
        %1470 = vmatpush2.bf16.msra.mxu0 0
        %1471 = vmatprep.subr.bf16.mxu0 0
        %1472 = vmatpush2.bf16.msra.mxu0 0
        %1473 = vmatprep.subr.bf16.mxu0 0
        %1474 = vmatpush2.bf16.msra.mxu0 0
        %1475 = vmatprep.subr.bf16.mxu0 0
        %1476 = vmatpush2.bf16.msra.mxu0 0
        %1477 = vmatprep.subr.bf16.mxu0 0
        %1478 = vmatpush2.bf16.msra.mxu0 0
        %1479 = vmatprep.subr.bf16.mxu0 0
        %1480 = vmatpush2.bf16.msra.mxu0 0
        %1481 = vmatprep.subr.bf16.mxu0 0
        %1482 = vmatpush2.bf16.msra.mxu0 0
        %1483 = vmatprep.mubr.bf16.mxu0 0
        %1484 = vmatmul.mubr.bf16.gmra.mxu0 %v1449
        %v1485 = vpop.f32.mrf.mxu0
        %v1486 = vadd.f32 %v1437, %v1485
        %v1487 = vpop.f32.mrf.mxu0
        %v1488 = vpop.f32.mrf.mxu0
        %v1489 = vadd.f32 %v1440, %v1488
        %v1490 = vpop.f32.mrf.mxu0
        %1491 = vdwg.mxu0
        %1492 = vmatprep.subr.bf16.mxu0 0
        %1493 = vmatpush1.bf16.msra.mxu0 0
        %1494 = vmatprep.subr.bf16.mxu0 0
        %1495 = vmatpush1.bf16.msra.mxu0 0
        %1496 = vmatprep.subr.bf16.mxu0 0
        %1497 = vmatpush1.bf16.msra.mxu0 0
        %1498 = vmatprep.subr.bf16.mxu0 0
        %1499 = vmatpush1.bf16.msra.mxu0 0
        %1500 = vmatprep.subr.bf16.mxu0 0
        %1501 = vmatpush1.bf16.msra.mxu0 0
        %1502 = vmatprep.subr.bf16.mxu0 0
        %1503 = vmatpush1.bf16.msra.mxu0 0
        %1504 = vmatprep.subr.bf16.mxu0 0
        %1505 = vmatpush1.bf16.msra.mxu0 0
        %1506 = vmatprep.subr.bf16.mxu0 0
        %1507 = vmatpush1.bf16.msra.mxu0 %v1244
        %1508 = vmatprep.subr.bf16.mxu0 0
        %1509 = vmatpush2.bf16.msra.mxu0 0
        %1510 = vmatprep.subr.bf16.mxu0 0
        %1511 = vmatpush2.bf16.msra.mxu0 0
        %1512 = vmatprep.subr.bf16.mxu0 0
        %1513 = vmatpush2.bf16.msra.mxu0 0
        %1514 = vmatprep.subr.bf16.mxu0 0
        %1515 = vmatpush2.bf16.msra.mxu0 0
        %1516 = vmatprep.subr.bf16.mxu0 0
        %1517 = vmatpush2.bf16.msra.mxu0 0
        %1518 = vmatprep.subr.bf16.mxu0 0
        %1519 = vmatpush2.bf16.msra.mxu0 0
        %1520 = vmatprep.subr.bf16.mxu0 0
        %1521 = vmatpush2.bf16.msra.mxu0 0
        %1522 = vmatprep.subr.bf16.mxu0 0
        %1523 = vmatpush2.bf16.msra.mxu0 0
        %1524 = vmatprep.mubr.bf16.mxu0 0
        %1525 = vmatmul.mubr.bf16.gmra.mxu0 %v1449
        %v1526 = vpop.f32.mrf.mxu0
        %v1527 = vadd.f32 0.0, %v1526
        %v1528 = vpop.f32.mrf.mxu0
        %v1529 = vpop.f32.mrf.mxu0
        %v1530 = vadd.f32 0.0, %v1529
        %v1531 = vpop.f32.mrf.mxu0
        %1532 = vdwg.mxu0
        %v1533 = vadd.f32 %v1486, %v1527
        %v1534 = vadd.f32 %v1489, %v1530
        %v1537 = vunpack.c.l.b16 %v1225
        %v1538 = vunpack.c.l.b16 %v1226
        %v1539 = vpack.c.b16 %v1538, %v1537
        %v1541 = vsel %vm446, %v1539, 0
        %1543 = vmatprep.subr.bf16.mxu0 0
        %1544 = vmatpush1.bf16.msra.mxu0 0
        %1545 = vmatprep.subr.bf16.mxu0 0
        %1546 = vmatpush1.bf16.msra.mxu0 0
        %1547 = vmatprep.subr.bf16.mxu0 0
        %1548 = vmatpush1.bf16.msra.mxu0 0
        %1549 = vmatprep.subr.bf16.mxu0 0
        %1550 = vmatpush1.bf16.msra.mxu0 0
        %1551 = vmatprep.subr.bf16.mxu0 0
        %1552 = vmatpush1.bf16.msra.mxu0 0
        %1553 = vmatprep.subr.bf16.mxu0 0
        %1554 = vmatpush1.bf16.msra.mxu0 0
        %1555 = vmatprep.subr.bf16.mxu0 0
        %1556 = vmatpush1.bf16.msra.mxu0 0
        %1557 = vmatprep.subr.bf16.mxu0 0
        %1558 = vmatpush1.bf16.msra.mxu0 %v1247
        %1559 = vmatprep.subr.bf16.mxu0 0
        %1560 = vmatpush2.bf16.msra.mxu0 0
        %1561 = vmatprep.subr.bf16.mxu0 0
        %1562 = vmatpush2.bf16.msra.mxu0 0
        %1563 = vmatprep.subr.bf16.mxu0 0
        %1564 = vmatpush2.bf16.msra.mxu0 0
        %1565 = vmatprep.subr.bf16.mxu0 0
        %1566 = vmatpush2.bf16.msra.mxu0 0
        %1567 = vmatprep.subr.bf16.mxu0 0
        %1568 = vmatpush2.bf16.msra.mxu0 0
        %1569 = vmatprep.subr.bf16.mxu0 0
        %1570 = vmatpush2.bf16.msra.mxu0 0
        %1571 = vmatprep.subr.bf16.mxu0 0
        %1572 = vmatpush2.bf16.msra.mxu0 0
        %1573 = vmatprep.subr.bf16.mxu0 0
        %1574 = vmatpush2.bf16.msra.mxu0 0
        %1575 = vmatprep.mubr.bf16.mxu0 0
        %1576 = vmatmul.mubr.bf16.gmra.mxu0 %v1541
        %v1577 = vpop.f32.mrf.mxu0
        %v1578 = vadd.f32 0.0, %v1577
        %v1579 = vpop.f32.mrf.mxu0
        %v1580 = vpop.f32.mrf.mxu0
        %v1581 = vadd.f32 0.0, %v1580
        %v1582 = vpop.f32.mrf.mxu0
        %1583 = vdwg.mxu0
        %v1586 = vunpack.c.l.b16 %v1222
        %v1587 = vunpack.c.l.b16 %v1223
        %v1588 = vpack.c.b16 %v1587, %v1586
        %v1590 = vsel %vm446, %v1588, 0
        %1592 = vmatprep.subr.bf16.mxu0 0
        %1593 = vmatpush1.bf16.msra.mxu0 0
        %1594 = vmatprep.subr.bf16.mxu0 0
        %1595 = vmatpush1.bf16.msra.mxu0 0
        %1596 = vmatprep.subr.bf16.mxu0 0
        %1597 = vmatpush1.bf16.msra.mxu0 0
        %1598 = vmatprep.subr.bf16.mxu0 0
        %1599 = vmatpush1.bf16.msra.mxu0 0
        %1600 = vmatprep.subr.bf16.mxu0 0
        %1601 = vmatpush1.bf16.msra.mxu0 0
        %1602 = vmatprep.subr.bf16.mxu0 0
        %1603 = vmatpush1.bf16.msra.mxu0 0
        %1604 = vmatprep.subr.bf16.mxu0 0
        %1605 = vmatpush1.bf16.msra.mxu0 0
        %1606 = vmatprep.subr.bf16.mxu0 0
        %1607 = vmatpush1.bf16.msra.mxu0 %v1247
        %1608 = vmatprep.subr.bf16.mxu0 0
        %1609 = vmatpush2.bf16.msra.mxu0 0
        %1610 = vmatprep.subr.bf16.mxu0 0
        %1611 = vmatpush2.bf16.msra.mxu0 0
        %1612 = vmatprep.subr.bf16.mxu0 0
        %1613 = vmatpush2.bf16.msra.mxu0 0
        %1614 = vmatprep.subr.bf16.mxu0 0
        %1615 = vmatpush2.bf16.msra.mxu0 0
        %1616 = vmatprep.subr.bf16.mxu0 0
        %1617 = vmatpush2.bf16.msra.mxu0 0
        %1618 = vmatprep.subr.bf16.mxu0 0
        %1619 = vmatpush2.bf16.msra.mxu0 0
        %1620 = vmatprep.subr.bf16.mxu0 0
        %1621 = vmatpush2.bf16.msra.mxu0 0
        %1622 = vmatprep.subr.bf16.mxu0 0
        %1623 = vmatpush2.bf16.msra.mxu0 0
        %1624 = vmatprep.mubr.bf16.mxu0 0
        %1625 = vmatmul.mubr.bf16.gmra.mxu0 %v1590
        %v1626 = vpop.f32.mrf.mxu0
        %v1627 = vadd.f32 %v1578, %v1626
        %v1628 = vpop.f32.mrf.mxu0
        %v1629 = vpop.f32.mrf.mxu0
        %v1630 = vadd.f32 %v1581, %v1629
        %v1631 = vpop.f32.mrf.mxu0
        %1632 = vdwg.mxu0
        %1633 = vmatprep.subr.bf16.mxu0 0
        %1634 = vmatpush1.bf16.msra.mxu0 0
        %1635 = vmatprep.subr.bf16.mxu0 0
        %1636 = vmatpush1.bf16.msra.mxu0 0
        %1637 = vmatprep.subr.bf16.mxu0 0
        %1638 = vmatpush1.bf16.msra.mxu0 0
        %1639 = vmatprep.subr.bf16.mxu0 0
        %1640 = vmatpush1.bf16.msra.mxu0 0
        %1641 = vmatprep.subr.bf16.mxu0 0
        %1642 = vmatpush1.bf16.msra.mxu0 0
        %1643 = vmatprep.subr.bf16.mxu0 0
        %1644 = vmatpush1.bf16.msra.mxu0 0
        %1645 = vmatprep.subr.bf16.mxu0 0
        %1646 = vmatpush1.bf16.msra.mxu0 0
        %1647 = vmatprep.subr.bf16.mxu0 0
        %1648 = vmatpush1.bf16.msra.mxu0 %v1252
        %1649 = vmatprep.subr.bf16.mxu0 0
        %1650 = vmatpush2.bf16.msra.mxu0 0
        %1651 = vmatprep.subr.bf16.mxu0 0
        %1652 = vmatpush2.bf16.msra.mxu0 0
        %1653 = vmatprep.subr.bf16.mxu0 0
        %1654 = vmatpush2.bf16.msra.mxu0 0
        %1655 = vmatprep.subr.bf16.mxu0 0
        %1656 = vmatpush2.bf16.msra.mxu0 0
        %1657 = vmatprep.subr.bf16.mxu0 0
        %1658 = vmatpush2.bf16.msra.mxu0 0
        %1659 = vmatprep.subr.bf16.mxu0 0
        %1660 = vmatpush2.bf16.msra.mxu0 0
        %1661 = vmatprep.subr.bf16.mxu0 0
        %1662 = vmatpush2.bf16.msra.mxu0 0
        %1663 = vmatprep.subr.bf16.mxu0 0
        %1664 = vmatpush2.bf16.msra.mxu0 0
        %1665 = vmatprep.mubr.bf16.mxu0 0
        %1666 = vmatmul.mubr.bf16.gmra.mxu0 %v1590
        %v1667 = vpop.f32.mrf.mxu0
        %v1668 = vadd.f32 0.0, %v1667
        %v1669 = vpop.f32.mrf.mxu0
        %v1670 = vpop.f32.mrf.mxu0
        %v1671 = vadd.f32 0.0, %v1670
        %v1672 = vpop.f32.mrf.mxu0
        %1673 = vdwg.mxu0
        %v1674 = vadd.f32 %v1627, %v1668
        %v1675 = vadd.f32 %v1630, %v1671
        %v1676 = vsub.f32 %v1392, %v1533
        %v1677 = vsub.f32 %v1393, %v1534
        %v1678 = vmul.f32 %v1676, %v1227
        %v1679 = vmul.f32 %v1677, %v1228
        %1680 = vst.msk [vmem:[%s329] sm:$0xff] %vm446, %v1678
        %1681 = vst.msk [vmem:[%s329 + $0x8] sm:$0xff] %vm446, %v1679
        %v1682 = vsub.f32 %v1674, %v1392
        %v1683 = vsub.f32 %v1675, %v1393
        %v1684 = vsub.f32 %v1682, %v1533
        %v1685 = vsub.f32 %v1683, %v1534
        %v1686 = vmul.f32 %v1684, %v1227
        %v1687 = vmul.f32 %v1685, %v1228
        %1688 = vst.msk [vmem:[%s335] sm:$0xff] %vm446, %v1686
        %1689 = vst.msk [vmem:[%s335 + $0x8] sm:$0xff] %vm446, %v1687
        %v1690 = vld [vmem:[#allocation2 + $0x10] sm:$0xff]
        %v1691 = vld [vmem:[#allocation2 + $0x18] sm:$0xff]
        %v1692 = vld [vmem:[#allocation3 + $0x10] sm:$0xff]
        %v1693 = vld [vmem:[#allocation3 + $0x18] sm:$0xff]
        %v1694 = vpack.c.bf16 %v1691, %v1690
        %v1695 = vunpack.c.l.bf16 %v1694
        %v1696 = vunpack.c.h.bf16 %v1694
        %v1697 = vsub.f32 %v1690, %v1695
        %v1698 = vsub.f32 %v1691, %v1696
        %v1699 = vpack.c.bf16 %v1698, %v1697
        %v1700 = vpack.c.bf16 %v1693, %v1692
        %v1701 = vunpack.c.l.bf16 %v1700
        %v1702 = vunpack.c.h.bf16 %v1700
        %v1703 = vsub.f32 %v1692, %v1701
        %v1704 = vsub.f32 %v1693, %v1702
        %v1705 = vpack.c.bf16 %v1704, %v1703
        %v1706 = vadd.f32 %v1690, %v1692
        %v1707 = vadd.f32 %v1691, %v1693
        %v1708 = vpack.c.bf16 %v1707, %v1706
        %v1709 = vunpack.c.l.bf16 %v1708
        %v1710 = vunpack.c.h.bf16 %v1708
        %v1711 = vsub.f32 %v1706, %v1709
        %v1712 = vsub.f32 %v1707, %v1710
        %v1713 = vpack.c.bf16 %v1712, %v1711
        %1714 = vmatprep.subr.bf16.mxu0 0
        %1715 = vmatpush1.bf16.msra.mxu0 0
        %1716 = vmatprep.subr.bf16.mxu0 0
        %1717 = vmatpush1.bf16.msra.mxu0 0
        %1718 = vmatprep.subr.bf16.mxu0 0
        %1719 = vmatpush1.bf16.msra.mxu0 0
        %1720 = vmatprep.subr.bf16.mxu0 0
        %1721 = vmatpush1.bf16.msra.mxu0 0
        %1722 = vmatprep.subr.bf16.mxu0 0
        %1723 = vmatpush1.bf16.msra.mxu0 0
        %1724 = vmatprep.subr.bf16.mxu0 0
        %1725 = vmatpush1.bf16.msra.mxu0 0
        %1726 = vmatprep.subr.bf16.mxu0 0
        %1727 = vmatpush1.bf16.msra.mxu0 0
        %1728 = vmatprep.subr.bf16.mxu0 0
        %1729 = vmatpush1.bf16.msra.mxu0 %v1694
        %1730 = vmatprep.subr.bf16.mxu0 0
        %1731 = vmatpush2.bf16.msra.mxu0 0
        %1732 = vmatprep.subr.bf16.mxu0 0
        %1733 = vmatpush2.bf16.msra.mxu0 0
        %1734 = vmatprep.subr.bf16.mxu0 0
        %1735 = vmatpush2.bf16.msra.mxu0 0
        %1736 = vmatprep.subr.bf16.mxu0 0
        %1737 = vmatpush2.bf16.msra.mxu0 0
        %1738 = vmatprep.subr.bf16.mxu0 0
        %1739 = vmatpush2.bf16.msra.mxu0 0
        %1740 = vmatprep.subr.bf16.mxu0 0
        %1741 = vmatpush2.bf16.msra.mxu0 0
        %1742 = vmatprep.subr.bf16.mxu0 0
        %1743 = vmatpush2.bf16.msra.mxu0 0
        %1744 = vmatprep.subr.bf16.mxu0 0
        %1745 = vmatpush2.bf16.msra.mxu0 0
        %1746 = vmatprep.mubr.bf16.mxu0 0
        %1747 = vmatmul.mubr.bf16.gmra.mxu0 %v1259
        %v1748 = vpop.f32.mrf.mxu0
        %v1749 = vadd.f32 0.0, %v1748
        %v1750 = vpop.f32.mrf.mxu0
        %v1751 = vpop.f32.mrf.mxu0
        %v1752 = vadd.f32 0.0, %v1751
        %v1753 = vpop.f32.mrf.mxu0
        %1754 = vdwg.mxu0
        %1755 = vmatprep.subr.bf16.mxu0 0
        %1756 = vmatpush1.bf16.msra.mxu0 0
        %1757 = vmatprep.subr.bf16.mxu0 0
        %1758 = vmatpush1.bf16.msra.mxu0 0
        %1759 = vmatprep.subr.bf16.mxu0 0
        %1760 = vmatpush1.bf16.msra.mxu0 0
        %1761 = vmatprep.subr.bf16.mxu0 0
        %1762 = vmatpush1.bf16.msra.mxu0 0
        %1763 = vmatprep.subr.bf16.mxu0 0
        %1764 = vmatpush1.bf16.msra.mxu0 0
        %1765 = vmatprep.subr.bf16.mxu0 0
        %1766 = vmatpush1.bf16.msra.mxu0 0
        %1767 = vmatprep.subr.bf16.mxu0 0
        %1768 = vmatpush1.bf16.msra.mxu0 0
        %1769 = vmatprep.subr.bf16.mxu0 0
        %1770 = vmatpush1.bf16.msra.mxu0 %v1694
        %1771 = vmatprep.subr.bf16.mxu0 0
        %1772 = vmatpush2.bf16.msra.mxu0 0
        %1773 = vmatprep.subr.bf16.mxu0 0
        %1774 = vmatpush2.bf16.msra.mxu0 0
        %1775 = vmatprep.subr.bf16.mxu0 0
        %1776 = vmatpush2.bf16.msra.mxu0 0
        %1777 = vmatprep.subr.bf16.mxu0 0
        %1778 = vmatpush2.bf16.msra.mxu0 0
        %1779 = vmatprep.subr.bf16.mxu0 0
        %1780 = vmatpush2.bf16.msra.mxu0 0
        %1781 = vmatprep.subr.bf16.mxu0 0
        %1782 = vmatpush2.bf16.msra.mxu0 0
        %1783 = vmatprep.subr.bf16.mxu0 0
        %1784 = vmatpush2.bf16.msra.mxu0 0
        %1785 = vmatprep.subr.bf16.mxu0 0
        %1786 = vmatpush2.bf16.msra.mxu0 0
        %1787 = vmatprep.mubr.bf16.mxu0 0
        %1788 = vmatmul.mubr.bf16.gmra.mxu0 %v1308
        %v1789 = vpop.f32.mrf.mxu0
        %v1790 = vadd.f32 %v1749, %v1789
        %v1791 = vpop.f32.mrf.mxu0
        %v1792 = vpop.f32.mrf.mxu0
        %v1793 = vadd.f32 %v1752, %v1792
        %v1794 = vpop.f32.mrf.mxu0
        %1795 = vdwg.mxu0
        %1796 = vmatprep.subr.bf16.mxu0 0
        %1797 = vmatpush1.bf16.msra.mxu0 0
        %1798 = vmatprep.subr.bf16.mxu0 0
        %1799 = vmatpush1.bf16.msra.mxu0 0
        %1800 = vmatprep.subr.bf16.mxu0 0
        %1801 = vmatpush1.bf16.msra.mxu0 0
        %1802 = vmatprep.subr.bf16.mxu0 0
        %1803 = vmatpush1.bf16.msra.mxu0 0
        %1804 = vmatprep.subr.bf16.mxu0 0
        %1805 = vmatpush1.bf16.msra.mxu0 0
        %1806 = vmatprep.subr.bf16.mxu0 0
        %1807 = vmatpush1.bf16.msra.mxu0 0
        %1808 = vmatprep.subr.bf16.mxu0 0
        %1809 = vmatpush1.bf16.msra.mxu0 0
        %1810 = vmatprep.subr.bf16.mxu0 0
        %1811 = vmatpush1.bf16.msra.mxu0 %v1699
        %1812 = vmatprep.subr.bf16.mxu0 0
        %1813 = vmatpush2.bf16.msra.mxu0 0
        %1814 = vmatprep.subr.bf16.mxu0 0
        %1815 = vmatpush2.bf16.msra.mxu0 0
        %1816 = vmatprep.subr.bf16.mxu0 0
        %1817 = vmatpush2.bf16.msra.mxu0 0
        %1818 = vmatprep.subr.bf16.mxu0 0
        %1819 = vmatpush2.bf16.msra.mxu0 0
        %1820 = vmatprep.subr.bf16.mxu0 0
        %1821 = vmatpush2.bf16.msra.mxu0 0
        %1822 = vmatprep.subr.bf16.mxu0 0
        %1823 = vmatpush2.bf16.msra.mxu0 0
        %1824 = vmatprep.subr.bf16.mxu0 0
        %1825 = vmatpush2.bf16.msra.mxu0 0
        %1826 = vmatprep.subr.bf16.mxu0 0
        %1827 = vmatpush2.bf16.msra.mxu0 0
        %1828 = vmatprep.mubr.bf16.mxu0 0
        %1829 = vmatmul.mubr.bf16.gmra.mxu0 %v1308
        %v1830 = vpop.f32.mrf.mxu0
        %v1831 = vadd.f32 0.0, %v1830
        %v1832 = vpop.f32.mrf.mxu0
        %v1833 = vpop.f32.mrf.mxu0
        %v1834 = vadd.f32 0.0, %v1833
        %v1835 = vpop.f32.mrf.mxu0
        %1836 = vdwg.mxu0
        %v1837 = vadd.f32 %v1790, %v1831
        %v1838 = vadd.f32 %v1793, %v1834
        %1839 = vmatprep.subr.bf16.mxu0 0
        %1840 = vmatpush1.bf16.msra.mxu0 0
        %1841 = vmatprep.subr.bf16.mxu0 0
        %1842 = vmatpush1.bf16.msra.mxu0 0
        %1843 = vmatprep.subr.bf16.mxu0 0
        %1844 = vmatpush1.bf16.msra.mxu0 0
        %1845 = vmatprep.subr.bf16.mxu0 0
        %1846 = vmatpush1.bf16.msra.mxu0 0
        %1847 = vmatprep.subr.bf16.mxu0 0
        %1848 = vmatpush1.bf16.msra.mxu0 0
        %1849 = vmatprep.subr.bf16.mxu0 0
        %1850 = vmatpush1.bf16.msra.mxu0 0
        %1851 = vmatprep.subr.bf16.mxu0 0
        %1852 = vmatpush1.bf16.msra.mxu0 0
        %1853 = vmatprep.subr.bf16.mxu0 0
        %1854 = vmatpush1.bf16.msra.mxu0 %v1700
        %1855 = vmatprep.subr.bf16.mxu0 0
        %1856 = vmatpush2.bf16.msra.mxu0 0
        %1857 = vmatprep.subr.bf16.mxu0 0
        %1858 = vmatpush2.bf16.msra.mxu0 0
        %1859 = vmatprep.subr.bf16.mxu0 0
        %1860 = vmatpush2.bf16.msra.mxu0 0
        %1861 = vmatprep.subr.bf16.mxu0 0
        %1862 = vmatpush2.bf16.msra.mxu0 0
        %1863 = vmatprep.subr.bf16.mxu0 0
        %1864 = vmatpush2.bf16.msra.mxu0 0
        %1865 = vmatprep.subr.bf16.mxu0 0
        %1866 = vmatpush2.bf16.msra.mxu0 0
        %1867 = vmatprep.subr.bf16.mxu0 0
        %1868 = vmatpush2.bf16.msra.mxu0 0
        %1869 = vmatprep.subr.bf16.mxu0 0
        %1870 = vmatpush2.bf16.msra.mxu0 0
        %1871 = vmatprep.mubr.bf16.mxu0 0
        %1872 = vmatmul.mubr.bf16.gmra.mxu0 %v1400
        %v1873 = vpop.f32.mrf.mxu0
        %v1874 = vadd.f32 0.0, %v1873
        %v1875 = vpop.f32.mrf.mxu0
        %v1876 = vpop.f32.mrf.mxu0
        %v1877 = vadd.f32 0.0, %v1876
        %v1878 = vpop.f32.mrf.mxu0
        %1879 = vdwg.mxu0
        %1880 = vmatprep.subr.bf16.mxu0 0
        %1881 = vmatpush1.bf16.msra.mxu0 0
        %1882 = vmatprep.subr.bf16.mxu0 0
        %1883 = vmatpush1.bf16.msra.mxu0 0
        %1884 = vmatprep.subr.bf16.mxu0 0
        %1885 = vmatpush1.bf16.msra.mxu0 0
        %1886 = vmatprep.subr.bf16.mxu0 0
        %1887 = vmatpush1.bf16.msra.mxu0 0
        %1888 = vmatprep.subr.bf16.mxu0 0
        %1889 = vmatpush1.bf16.msra.mxu0 0
        %1890 = vmatprep.subr.bf16.mxu0 0
        %1891 = vmatpush1.bf16.msra.mxu0 0
        %1892 = vmatprep.subr.bf16.mxu0 0
        %1893 = vmatpush1.bf16.msra.mxu0 0
        %1894 = vmatprep.subr.bf16.mxu0 0
        %1895 = vmatpush1.bf16.msra.mxu0 %v1700
        %1896 = vmatprep.subr.bf16.mxu0 0
        %1897 = vmatpush2.bf16.msra.mxu0 0
        %1898 = vmatprep.subr.bf16.mxu0 0
        %1899 = vmatpush2.bf16.msra.mxu0 0
        %1900 = vmatprep.subr.bf16.mxu0 0
        %1901 = vmatpush2.bf16.msra.mxu0 0
        %1902 = vmatprep.subr.bf16.mxu0 0
        %1903 = vmatpush2.bf16.msra.mxu0 0
        %1904 = vmatprep.subr.bf16.mxu0 0
        %1905 = vmatpush2.bf16.msra.mxu0 0
        %1906 = vmatprep.subr.bf16.mxu0 0
        %1907 = vmatpush2.bf16.msra.mxu0 0
        %1908 = vmatprep.subr.bf16.mxu0 0
        %1909 = vmatpush2.bf16.msra.mxu0 0
        %1910 = vmatprep.subr.bf16.mxu0 0
        %1911 = vmatpush2.bf16.msra.mxu0 0
        %1912 = vmatprep.mubr.bf16.mxu0 0
        %1913 = vmatmul.mubr.bf16.gmra.mxu0 %v1449
        %v1914 = vpop.f32.mrf.mxu0
        %v1915 = vadd.f32 %v1874, %v1914
        %v1916 = vpop.f32.mrf.mxu0
        %v1917 = vpop.f32.mrf.mxu0
        %v1918 = vadd.f32 %v1877, %v1917
        %v1919 = vpop.f32.mrf.mxu0
        %1920 = vdwg.mxu0
        %1921 = vmatprep.subr.bf16.mxu0 0
        %1922 = vmatpush1.bf16.msra.mxu0 0
        %1923 = vmatprep.subr.bf16.mxu0 0
        %1924 = vmatpush1.bf16.msra.mxu0 0
        %1925 = vmatprep.subr.bf16.mxu0 0
        %1926 = vmatpush1.bf16.msra.mxu0 0
        %1927 = vmatprep.subr.bf16.mxu0 0
        %1928 = vmatpush1.bf16.msra.mxu0 0
        %1929 = vmatprep.subr.bf16.mxu0 0
        %1930 = vmatpush1.bf16.msra.mxu0 0
        %1931 = vmatprep.subr.bf16.mxu0 0
        %1932 = vmatpush1.bf16.msra.mxu0 0
        %1933 = vmatprep.subr.bf16.mxu0 0
        %1934 = vmatpush1.bf16.msra.mxu0 0
        %1935 = vmatprep.subr.bf16.mxu0 0
        %1936 = vmatpush1.bf16.msra.mxu0 %v1705
        %1937 = vmatprep.subr.bf16.mxu0 0
        %1938 = vmatpush2.bf16.msra.mxu0 0
        %1939 = vmatprep.subr.bf16.mxu0 0
        %1940 = vmatpush2.bf16.msra.mxu0 0
        %1941 = vmatprep.subr.bf16.mxu0 0
        %1942 = vmatpush2.bf16.msra.mxu0 0
        %1943 = vmatprep.subr.bf16.mxu0 0
        %1944 = vmatpush2.bf16.msra.mxu0 0
        %1945 = vmatprep.subr.bf16.mxu0 0
        %1946 = vmatpush2.bf16.msra.mxu0 0
        %1947 = vmatprep.subr.bf16.mxu0 0
        %1948 = vmatpush2.bf16.msra.mxu0 0
        %1949 = vmatprep.subr.bf16.mxu0 0
        %1950 = vmatpush2.bf16.msra.mxu0 0
        %1951 = vmatprep.subr.bf16.mxu0 0
        %1952 = vmatpush2.bf16.msra.mxu0 0
        %1953 = vmatprep.mubr.bf16.mxu0 0
        %1954 = vmatmul.mubr.bf16.gmra.mxu0 %v1449
        %v1955 = vpop.f32.mrf.mxu0
        %v1956 = vadd.f32 0.0, %v1955
        %v1957 = vpop.f32.mrf.mxu0
        %v1958 = vpop.f32.mrf.mxu0
        %v1959 = vadd.f32 0.0, %v1958
        %v1960 = vpop.f32.mrf.mxu0
        %1961 = vdwg.mxu0
        %v1962 = vadd.f32 %v1915, %v1956
        %v1963 = vadd.f32 %v1918, %v1959
        %1964 = vmatprep.subr.bf16.mxu0 0
        %1965 = vmatpush1.bf16.msra.mxu0 0
        %1966 = vmatprep.subr.bf16.mxu0 0
        %1967 = vmatpush1.bf16.msra.mxu0 0
        %1968 = vmatprep.subr.bf16.mxu0 0
        %1969 = vmatpush1.bf16.msra.mxu0 0
        %1970 = vmatprep.subr.bf16.mxu0 0
        %1971 = vmatpush1.bf16.msra.mxu0 0
        %1972 = vmatprep.subr.bf16.mxu0 0
        %1973 = vmatpush1.bf16.msra.mxu0 0
        %1974 = vmatprep.subr.bf16.mxu0 0
        %1975 = vmatpush1.bf16.msra.mxu0 0
        %1976 = vmatprep.subr.bf16.mxu0 0
        %1977 = vmatpush1.bf16.msra.mxu0 0
        %1978 = vmatprep.subr.bf16.mxu0 0
        %1979 = vmatpush1.bf16.msra.mxu0 %v1708
        %1980 = vmatprep.subr.bf16.mxu0 0
        %1981 = vmatpush2.bf16.msra.mxu0 0
        %1982 = vmatprep.subr.bf16.mxu0 0
        %1983 = vmatpush2.bf16.msra.mxu0 0
        %1984 = vmatprep.subr.bf16.mxu0 0
        %1985 = vmatpush2.bf16.msra.mxu0 0
        %1986 = vmatprep.subr.bf16.mxu0 0
        %1987 = vmatpush2.bf16.msra.mxu0 0
        %1988 = vmatprep.subr.bf16.mxu0 0
        %1989 = vmatpush2.bf16.msra.mxu0 0
        %1990 = vmatprep.subr.bf16.mxu0 0
        %1991 = vmatpush2.bf16.msra.mxu0 0
        %1992 = vmatprep.subr.bf16.mxu0 0
        %1993 = vmatpush2.bf16.msra.mxu0 0
        %1994 = vmatprep.subr.bf16.mxu0 0
        %1995 = vmatpush2.bf16.msra.mxu0 0
        %1996 = vmatprep.mubr.bf16.mxu0 0
        %1997 = vmatmul.mubr.bf16.gmra.mxu0 %v1541
        %v1998 = vpop.f32.mrf.mxu0
        %v1999 = vadd.f32 0.0, %v1998
        %v2000 = vpop.f32.mrf.mxu0
        %v2001 = vpop.f32.mrf.mxu0
        %v2002 = vadd.f32 0.0, %v2001
        %v2003 = vpop.f32.mrf.mxu0
        %2004 = vdwg.mxu0
        %2005 = vmatprep.subr.bf16.mxu0 0
        %2006 = vmatpush1.bf16.msra.mxu0 0
        %2007 = vmatprep.subr.bf16.mxu0 0
        %2008 = vmatpush1.bf16.msra.mxu0 0
        %2009 = vmatprep.subr.bf16.mxu0 0
        %2010 = vmatpush1.bf16.msra.mxu0 0
        %2011 = vmatprep.subr.bf16.mxu0 0
        %2012 = vmatpush1.bf16.msra.mxu0 0
        %2013 = vmatprep.subr.bf16.mxu0 0
        %2014 = vmatpush1.bf16.msra.mxu0 0
        %2015 = vmatprep.subr.bf16.mxu0 0
        %2016 = vmatpush1.bf16.msra.mxu0 0
        %2017 = vmatprep.subr.bf16.mxu0 0
        %2018 = vmatpush1.bf16.msra.mxu0 0
        %2019 = vmatprep.subr.bf16.mxu0 0
        %2020 = vmatpush1.bf16.msra.mxu0 %v1708
        %2021 = vmatprep.subr.bf16.mxu0 0
        %2022 = vmatpush2.bf16.msra.mxu0 0
        %2023 = vmatprep.subr.bf16.mxu0 0
        %2024 = vmatpush2.bf16.msra.mxu0 0
        %2025 = vmatprep.subr.bf16.mxu0 0
        %2026 = vmatpush2.bf16.msra.mxu0 0
        %2027 = vmatprep.subr.bf16.mxu0 0
        %2028 = vmatpush2.bf16.msra.mxu0 0
        %2029 = vmatprep.subr.bf16.mxu0 0
        %2030 = vmatpush2.bf16.msra.mxu0 0
        %2031 = vmatprep.subr.bf16.mxu0 0
        %2032 = vmatpush2.bf16.msra.mxu0 0
        %2033 = vmatprep.subr.bf16.mxu0 0
        %2034 = vmatpush2.bf16.msra.mxu0 0
        %2035 = vmatprep.subr.bf16.mxu0 0
        %2036 = vmatpush2.bf16.msra.mxu0 0
        %2037 = vmatprep.mubr.bf16.mxu0 0
        %2038 = vmatmul.mubr.bf16.gmra.mxu0 %v1590
        %v2039 = vpop.f32.mrf.mxu0
        %v2040 = vadd.f32 %v1999, %v2039
        %v2041 = vpop.f32.mrf.mxu0
        %v2042 = vpop.f32.mrf.mxu0
        %v2043 = vadd.f32 %v2002, %v2042
        %v2044 = vpop.f32.mrf.mxu0
        %2045 = vdwg.mxu0
        %2046 = vmatprep.subr.bf16.mxu0 0
        %2047 = vmatpush1.bf16.msra.mxu0 0
        %2048 = vmatprep.subr.bf16.mxu0 0
        %2049 = vmatpush1.bf16.msra.mxu0 0
        %2050 = vmatprep.subr.bf16.mxu0 0
        %2051 = vmatpush1.bf16.msra.mxu0 0
        %2052 = vmatprep.subr.bf16.mxu0 0
        %2053 = vmatpush1.bf16.msra.mxu0 0
        %2054 = vmatprep.subr.bf16.mxu0 0
        %2055 = vmatpush1.bf16.msra.mxu0 0
        %2056 = vmatprep.subr.bf16.mxu0 0
        %2057 = vmatpush1.bf16.msra.mxu0 0
        %2058 = vmatprep.subr.bf16.mxu0 0
        %2059 = vmatpush1.bf16.msra.mxu0 0
        %2060 = vmatprep.subr.bf16.mxu0 0
        %2061 = vmatpush1.bf16.msra.mxu0 %v1713
        %2062 = vmatprep.subr.bf16.mxu0 0
        %2063 = vmatpush2.bf16.msra.mxu0 0
        %2064 = vmatprep.subr.bf16.mxu0 0
        %2065 = vmatpush2.bf16.msra.mxu0 0
        %2066 = vmatprep.subr.bf16.mxu0 0
        %2067 = vmatpush2.bf16.msra.mxu0 0
        %2068 = vmatprep.subr.bf16.mxu0 0
        %2069 = vmatpush2.bf16.msra.mxu0 0
        %2070 = vmatprep.subr.bf16.mxu0 0
        %2071 = vmatpush2.bf16.msra.mxu0 0
        %2072 = vmatprep.subr.bf16.mxu0 0
        %2073 = vmatpush2.bf16.msra.mxu0 0
        %2074 = vmatprep.subr.bf16.mxu0 0
        %2075 = vmatpush2.bf16.msra.mxu0 0
        %2076 = vmatprep.subr.bf16.mxu0 0
        %2077 = vmatpush2.bf16.msra.mxu0 0
        %2078 = vmatprep.mubr.bf16.mxu0 0
        %2079 = vmatmul.mubr.bf16.gmra.mxu0 %v1590
        %v2080 = vpop.f32.mrf.mxu0
        %v2081 = vadd.f32 0.0, %v2080
        %v2082 = vpop.f32.mrf.mxu0
        %v2083 = vpop.f32.mrf.mxu0
        %v2084 = vadd.f32 0.0, %v2083
        %v2085 = vpop.f32.mrf.mxu0
        %2086 = vdwg.mxu0
        %v2087 = vadd.f32 %v2040, %v2081
        %v2088 = vadd.f32 %v2043, %v2084
        %v2089 = vsub.f32 %v1837, %v1962
        %v2090 = vsub.f32 %v1838, %v1963
        %v2091 = vmul.f32 %v2089, %v1227
        %v2092 = vmul.f32 %v2090, %v1228
        %2093 = vst.msk [vmem:[%s329 + $0x10] sm:$0xff] %vm446, %v2091
        %2094 = vst.msk [vmem:[%s329 + $0x18] sm:$0xff] %vm446, %v2092
        %v2095 = vsub.f32 %v2087, %v1837
        %v2096 = vsub.f32 %v2088, %v1838
        %v2097 = vsub.f32 %v2095, %v1962
        %v2098 = vsub.f32 %v2096, %v1963
        %v2099 = vmul.f32 %v2097, %v1227
        %v2100 = vmul.f32 %v2098, %v1228
        %2101 = vst.msk [vmem:[%s335 + $0x10] sm:$0xff] %vm446, %v2099
        %2102 = vst.msk [vmem:[%s335 + $0x18] sm:$0xff] %vm446, %v2100
        %v2103 = vld [vmem:[#allocation2 + $0x20] sm:$0xff]
        %v2104 = vld [vmem:[#allocation2 + $0x28] sm:$0xff]
        %v2105 = vld [vmem:[#allocation3 + $0x20] sm:$0xff]
        %v2106 = vld [vmem:[#allocation3 + $0x28] sm:$0xff]
        %v2107 = vpack.c.bf16 %v2104, %v2103
        %v2108 = vunpack.c.l.bf16 %v2107
        %v2109 = vunpack.c.h.bf16 %v2107
        %v2110 = vsub.f32 %v2103, %v2108
        %v2111 = vsub.f32 %v2104, %v2109
        %v2112 = vpack.c.bf16 %v2111, %v2110
        %v2113 = vpack.c.bf16 %v2106, %v2105
        %v2114 = vunpack.c.l.bf16 %v2113
        %v2115 = vunpack.c.h.bf16 %v2113
        %v2116 = vsub.f32 %v2105, %v2114
        %v2117 = vsub.f32 %v2106, %v2115
        %v2118 = vpack.c.bf16 %v2117, %v2116
        %v2119 = vadd.f32 %v2103, %v2105
        %v2120 = vadd.f32 %v2104, %v2106
        %v2121 = vpack.c.bf16 %v2120, %v2119
        %v2122 = vunpack.c.l.bf16 %v2121
        %v2123 = vunpack.c.h.bf16 %v2121
        %v2124 = vsub.f32 %v2119, %v2122
        %v2125 = vsub.f32 %v2120, %v2123
        %v2126 = vpack.c.bf16 %v2125, %v2124
        %2127 = vmatprep.subr.bf16.mxu0 0
        %2128 = vmatpush1.bf16.msra.mxu0 0
        %2129 = vmatprep.subr.bf16.mxu0 0
        %2130 = vmatpush1.bf16.msra.mxu0 0
        %2131 = vmatprep.subr.bf16.mxu0 0
        %2132 = vmatpush1.bf16.msra.mxu0 0
        %2133 = vmatprep.subr.bf16.mxu0 0
        %2134 = vmatpush1.bf16.msra.mxu0 0
        %2135 = vmatprep.subr.bf16.mxu0 0
        %2136 = vmatpush1.bf16.msra.mxu0 0
        %2137 = vmatprep.subr.bf16.mxu0 0
        %2138 = vmatpush1.bf16.msra.mxu0 0
        %2139 = vmatprep.subr.bf16.mxu0 0
        %2140 = vmatpush1.bf16.msra.mxu0 0
        %2141 = vmatprep.subr.bf16.mxu0 0
        %2142 = vmatpush1.bf16.msra.mxu0 %v2107
        %2143 = vmatprep.subr.bf16.mxu0 0
        %2144 = vmatpush2.bf16.msra.mxu0 0
        %2145 = vmatprep.subr.bf16.mxu0 0
        %2146 = vmatpush2.bf16.msra.mxu0 0
        %2147 = vmatprep.subr.bf16.mxu0 0
        %2148 = vmatpush2.bf16.msra.mxu0 0
        %2149 = vmatprep.subr.bf16.mxu0 0
        %2150 = vmatpush2.bf16.msra.mxu0 0
        %2151 = vmatprep.subr.bf16.mxu0 0
        %2152 = vmatpush2.bf16.msra.mxu0 0
        %2153 = vmatprep.subr.bf16.mxu0 0
        %2154 = vmatpush2.bf16.msra.mxu0 0
        %2155 = vmatprep.subr.bf16.mxu0 0
        %2156 = vmatpush2.bf16.msra.mxu0 0
        %2157 = vmatprep.subr.bf16.mxu0 0
        %2158 = vmatpush2.bf16.msra.mxu0 0
        %2159 = vmatprep.mubr.bf16.mxu0 0
        %2160 = vmatmul.mubr.bf16.gmra.mxu0 %v1259
        %v2161 = vpop.f32.mrf.mxu0
        %v2162 = vadd.f32 0.0, %v2161
        %v2163 = vpop.f32.mrf.mxu0
        %v2164 = vpop.f32.mrf.mxu0
        %v2165 = vadd.f32 0.0, %v2164
        %v2166 = vpop.f32.mrf.mxu0
        %2167 = vdwg.mxu0
        %2168 = vmatprep.subr.bf16.mxu0 0
        %2169 = vmatpush1.bf16.msra.mxu0 0
        %2170 = vmatprep.subr.bf16.mxu0 0
        %2171 = vmatpush1.bf16.msra.mxu0 0
        %2172 = vmatprep.subr.bf16.mxu0 0
        %2173 = vmatpush1.bf16.msra.mxu0 0
        %2174 = vmatprep.subr.bf16.mxu0 0
        %2175 = vmatpush1.bf16.msra.mxu0 0
        %2176 = vmatprep.subr.bf16.mxu0 0
        %2177 = vmatpush1.bf16.msra.mxu0 0
        %2178 = vmatprep.subr.bf16.mxu0 0
        %2179 = vmatpush1.bf16.msra.mxu0 0
        %2180 = vmatprep.subr.bf16.mxu0 0
        %2181 = vmatpush1.bf16.msra.mxu0 0
        %2182 = vmatprep.subr.bf16.mxu0 0
        %2183 = vmatpush1.bf16.msra.mxu0 %v2107
        %2184 = vmatprep.subr.bf16.mxu0 0
        %2185 = vmatpush2.bf16.msra.mxu0 0
        %2186 = vmatprep.subr.bf16.mxu0 0
        %2187 = vmatpush2.bf16.msra.mxu0 0
        %2188 = vmatprep.subr.bf16.mxu0 0
        %2189 = vmatpush2.bf16.msra.mxu0 0
        %2190 = vmatprep.subr.bf16.mxu0 0
        %2191 = vmatpush2.bf16.msra.mxu0 0
        %2192 = vmatprep.subr.bf16.mxu0 0
        %2193 = vmatpush2.bf16.msra.mxu0 0
        %2194 = vmatprep.subr.bf16.mxu0 0
        %2195 = vmatpush2.bf16.msra.mxu0 0
        %2196 = vmatprep.subr.bf16.mxu0 0
        %2197 = vmatpush2.bf16.msra.mxu0 0
        %2198 = vmatprep.subr.bf16.mxu0 0
        %2199 = vmatpush2.bf16.msra.mxu0 0
        %2200 = vmatprep.mubr.bf16.mxu0 0
        %2201 = vmatmul.mubr.bf16.gmra.mxu0 %v1308
        %v2202 = vpop.f32.mrf.mxu0
        %v2203 = vadd.f32 %v2162, %v2202
        %v2204 = vpop.f32.mrf.mxu0
        %v2205 = vpop.f32.mrf.mxu0
        %v2206 = vadd.f32 %v2165, %v2205
        %v2207 = vpop.f32.mrf.mxu0
        %2208 = vdwg.mxu0
        %2209 = vmatprep.subr.bf16.mxu0 0
        %2210 = vmatpush1.bf16.msra.mxu0 0
        %2211 = vmatprep.subr.bf16.mxu0 0
        %2212 = vmatpush1.bf16.msra.mxu0 0
        %2213 = vmatprep.subr.bf16.mxu0 0
        %2214 = vmatpush1.bf16.msra.mxu0 0
        %2215 = vmatprep.subr.bf16.mxu0 0
        %2216 = vmatpush1.bf16.msra.mxu0 0
        %2217 = vmatprep.subr.bf16.mxu0 0
        %2218 = vmatpush1.bf16.msra.mxu0 0
        %2219 = vmatprep.subr.bf16.mxu0 0
        %2220 = vmatpush1.bf16.msra.mxu0 0
        %2221 = vmatprep.subr.bf16.mxu0 0
        %2222 = vmatpush1.bf16.msra.mxu0 0
        %2223 = vmatprep.subr.bf16.mxu0 0
        %2224 = vmatpush1.bf16.msra.mxu0 %v2112
        %2225 = vmatprep.subr.bf16.mxu0 0
        %2226 = vmatpush2.bf16.msra.mxu0 0
        %2227 = vmatprep.subr.bf16.mxu0 0
        %2228 = vmatpush2.bf16.msra.mxu0 0
        %2229 = vmatprep.subr.bf16.mxu0 0
        %2230 = vmatpush2.bf16.msra.mxu0 0
        %2231 = vmatprep.subr.bf16.mxu0 0
        %2232 = vmatpush2.bf16.msra.mxu0 0
        %2233 = vmatprep.subr.bf16.mxu0 0
        %2234 = vmatpush2.bf16.msra.mxu0 0
        %2235 = vmatprep.subr.bf16.mxu0 0
        %2236 = vmatpush2.bf16.msra.mxu0 0
        %2237 = vmatprep.subr.bf16.mxu0 0
        %2238 = vmatpush2.bf16.msra.mxu0 0
        %2239 = vmatprep.subr.bf16.mxu0 0
        %2240 = vmatpush2.bf16.msra.mxu0 0
        %2241 = vmatprep.mubr.bf16.mxu0 0
        %2242 = vmatmul.mubr.bf16.gmra.mxu0 %v1308
        %v2243 = vpop.f32.mrf.mxu0
        %v2244 = vadd.f32 0.0, %v2243
        %v2245 = vpop.f32.mrf.mxu0
        %v2246 = vpop.f32.mrf.mxu0
        %v2247 = vadd.f32 0.0, %v2246
        %v2248 = vpop.f32.mrf.mxu0
        %2249 = vdwg.mxu0
        %v2250 = vadd.f32 %v2203, %v2244
        %v2251 = vadd.f32 %v2206, %v2247
        %2252 = vmatprep.subr.bf16.mxu0 0
        %2253 = vmatpush1.bf16.msra.mxu0 0
        %2254 = vmatprep.subr.bf16.mxu0 0
        %2255 = vmatpush1.bf16.msra.mxu0 0
        %2256 = vmatprep.subr.bf16.mxu0 0
        %2257 = vmatpush1.bf16.msra.mxu0 0
        %2258 = vmatprep.subr.bf16.mxu0 0
        %2259 = vmatpush1.bf16.msra.mxu0 0
        %2260 = vmatprep.subr.bf16.mxu0 0
        %2261 = vmatpush1.bf16.msra.mxu0 0
        %2262 = vmatprep.subr.bf16.mxu0 0
        %2263 = vmatpush1.bf16.msra.mxu0 0
        %2264 = vmatprep.subr.bf16.mxu0 0
        %2265 = vmatpush1.bf16.msra.mxu0 0
        %2266 = vmatprep.subr.bf16.mxu0 0
        %2267 = vmatpush1.bf16.msra.mxu0 %v2113
        %2268 = vmatprep.subr.bf16.mxu0 0
        %2269 = vmatpush2.bf16.msra.mxu0 0
        %2270 = vmatprep.subr.bf16.mxu0 0
        %2271 = vmatpush2.bf16.msra.mxu0 0
        %2272 = vmatprep.subr.bf16.mxu0 0
        %2273 = vmatpush2.bf16.msra.mxu0 0
        %2274 = vmatprep.subr.bf16.mxu0 0
        %2275 = vmatpush2.bf16.msra.mxu0 0
        %2276 = vmatprep.subr.bf16.mxu0 0
        %2277 = vmatpush2.bf16.msra.mxu0 0
        %2278 = vmatprep.subr.bf16.mxu0 0
        %2279 = vmatpush2.bf16.msra.mxu0 0
        %2280 = vmatprep.subr.bf16.mxu0 0
        %2281 = vmatpush2.bf16.msra.mxu0 0
        %2282 = vmatprep.subr.bf16.mxu0 0
        %2283 = vmatpush2.bf16.msra.mxu0 0
        %2284 = vmatprep.mubr.bf16.mxu0 0
        %2285 = vmatmul.mubr.bf16.gmra.mxu0 %v1400
        %v2286 = vpop.f32.mrf.mxu0
        %v2287 = vadd.f32 0.0, %v2286
        %v2288 = vpop.f32.mrf.mxu0
        %v2289 = vpop.f32.mrf.mxu0
        %v2290 = vadd.f32 0.0, %v2289
        %v2291 = vpop.f32.mrf.mxu0
        %2292 = vdwg.mxu0
        %2293 = vmatprep.subr.bf16.mxu0 0
        %2294 = vmatpush1.bf16.msra.mxu0 0
        %2295 = vmatprep.subr.bf16.mxu0 0
        %2296 = vmatpush1.bf16.msra.mxu0 0
        %2297 = vmatprep.subr.bf16.mxu0 0
        %2298 = vmatpush1.bf16.msra.mxu0 0
        %2299 = vmatprep.subr.bf16.mxu0 0
        %2300 = vmatpush1.bf16.msra.mxu0 0
        %2301 = vmatprep.subr.bf16.mxu0 0
        %2302 = vmatpush1.bf16.msra.mxu0 0
        %2303 = vmatprep.subr.bf16.mxu0 0
        %2304 = vmatpush1.bf16.msra.mxu0 0
        %2305 = vmatprep.subr.bf16.mxu0 0
        %2306 = vmatpush1.bf16.msra.mxu0 0
        %2307 = vmatprep.subr.bf16.mxu0 0
        %2308 = vmatpush1.bf16.msra.mxu0 %v2113
        %2309 = vmatprep.subr.bf16.mxu0 0
        %2310 = vmatpush2.bf16.msra.mxu0 0
        %2311 = vmatprep.subr.bf16.mxu0 0
        %2312 = vmatpush2.bf16.msra.mxu0 0
        %2313 = vmatprep.subr.bf16.mxu0 0
        %2314 = vmatpush2.bf16.msra.mxu0 0
        %2315 = vmatprep.subr.bf16.mxu0 0
        %2316 = vmatpush2.bf16.msra.mxu0 0
        %2317 = vmatprep.subr.bf16.mxu0 0
        %2318 = vmatpush2.bf16.msra.mxu0 0
        %2319 = vmatprep.subr.bf16.mxu0 0
        %2320 = vmatpush2.bf16.msra.mxu0 0
        %2321 = vmatprep.subr.bf16.mxu0 0
        %2322 = vmatpush2.bf16.msra.mxu0 0
        %2323 = vmatprep.subr.bf16.mxu0 0
        %2324 = vmatpush2.bf16.msra.mxu0 0
        %2325 = vmatprep.mubr.bf16.mxu0 0
        %2326 = vmatmul.mubr.bf16.gmra.mxu0 %v1449
        %v2327 = vpop.f32.mrf.mxu0
        %v2328 = vadd.f32 %v2287, %v2327
        %v2329 = vpop.f32.mrf.mxu0
        %v2330 = vpop.f32.mrf.mxu0
        %v2331 = vadd.f32 %v2290, %v2330
        %v2332 = vpop.f32.mrf.mxu0
        %2333 = vdwg.mxu0
        %2334 = vmatprep.subr.bf16.mxu0 0
        %2335 = vmatpush1.bf16.msra.mxu0 0
        %2336 = vmatprep.subr.bf16.mxu0 0
        %2337 = vmatpush1.bf16.msra.mxu0 0
        %2338 = vmatprep.subr.bf16.mxu0 0
        %2339 = vmatpush1.bf16.msra.mxu0 0
        %2340 = vmatprep.subr.bf16.mxu0 0
        %2341 = vmatpush1.bf16.msra.mxu0 0
        %2342 = vmatprep.subr.bf16.mxu0 0
        %2343 = vmatpush1.bf16.msra.mxu0 0
        %2344 = vmatprep.subr.bf16.mxu0 0
        %2345 = vmatpush1.bf16.msra.mxu0 0
        %2346 = vmatprep.subr.bf16.mxu0 0
        %2347 = vmatpush1.bf16.msra.mxu0 0
        %2348 = vmatprep.subr.bf16.mxu0 0
        %2349 = vmatpush1.bf16.msra.mxu0 %v2118
        %2350 = vmatprep.subr.bf16.mxu0 0
        %2351 = vmatpush2.bf16.msra.mxu0 0
        %2352 = vmatprep.subr.bf16.mxu0 0
        %2353 = vmatpush2.bf16.msra.mxu0 0
        %2354 = vmatprep.subr.bf16.mxu0 0
        %2355 = vmatpush2.bf16.msra.mxu0 0
        %2356 = vmatprep.subr.bf16.mxu0 0
        %2357 = vmatpush2.bf16.msra.mxu0 0
        %2358 = vmatprep.subr.bf16.mxu0 0
        %2359 = vmatpush2.bf16.msra.mxu0 0
        %2360 = vmatprep.subr.bf16.mxu0 0
        %2361 = vmatpush2.bf16.msra.mxu0 0
        %2362 = vmatprep.subr.bf16.mxu0 0
        %2363 = vmatpush2.bf16.msra.mxu0 0
        %2364 = vmatprep.subr.bf16.mxu0 0
        %2365 = vmatpush2.bf16.msra.mxu0 0
        %2366 = vmatprep.mubr.bf16.mxu0 0
        %2367 = vmatmul.mubr.bf16.gmra.mxu0 %v1449
        %v2368 = vpop.f32.mrf.mxu0
        %v2369 = vadd.f32 0.0, %v2368
        %v2370 = vpop.f32.mrf.mxu0
        %v2371 = vpop.f32.mrf.mxu0
        %v2372 = vadd.f32 0.0, %v2371
        %v2373 = vpop.f32.mrf.mxu0
        %2374 = vdwg.mxu0
        %v2375 = vadd.f32 %v2328, %v2369
        %v2376 = vadd.f32 %v2331, %v2372
        %2377 = vmatprep.subr.bf16.mxu0 0
        %2378 = vmatpush1.bf16.msra.mxu0 0
        %2379 = vmatprep.subr.bf16.mxu0 0
        %2380 = vmatpush1.bf16.msra.mxu0 0
        %2381 = vmatprep.subr.bf16.mxu0 0
        %2382 = vmatpush1.bf16.msra.mxu0 0
        %2383 = vmatprep.subr.bf16.mxu0 0
        %2384 = vmatpush1.bf16.msra.mxu0 0
        %2385 = vmatprep.subr.bf16.mxu0 0
        %2386 = vmatpush1.bf16.msra.mxu0 0
        %2387 = vmatprep.subr.bf16.mxu0 0
        %2388 = vmatpush1.bf16.msra.mxu0 0
        %2389 = vmatprep.subr.bf16.mxu0 0
        %2390 = vmatpush1.bf16.msra.mxu0 0
        %2391 = vmatprep.subr.bf16.mxu0 0
        %2392 = vmatpush1.bf16.msra.mxu0 %v2121
        %2393 = vmatprep.subr.bf16.mxu0 0
        %2394 = vmatpush2.bf16.msra.mxu0 0
        %2395 = vmatprep.subr.bf16.mxu0 0
        %2396 = vmatpush2.bf16.msra.mxu0 0
        %2397 = vmatprep.subr.bf16.mxu0 0
        %2398 = vmatpush2.bf16.msra.mxu0 0
        %2399 = vmatprep.subr.bf16.mxu0 0
        %2400 = vmatpush2.bf16.msra.mxu0 0
        %2401 = vmatprep.subr.bf16.mxu0 0
        %2402 = vmatpush2.bf16.msra.mxu0 0
        %2403 = vmatprep.subr.bf16.mxu0 0
        %2404 = vmatpush2.bf16.msra.mxu0 0
        %2405 = vmatprep.subr.bf16.mxu0 0
        %2406 = vmatpush2.bf16.msra.mxu0 0
        %2407 = vmatprep.subr.bf16.mxu0 0
        %2408 = vmatpush2.bf16.msra.mxu0 0
        %2409 = vmatprep.mubr.bf16.mxu0 0
        %2410 = vmatmul.mubr.bf16.gmra.mxu0 %v1541
        %v2411 = vpop.f32.mrf.mxu0
        %v2412 = vadd.f32 0.0, %v2411
        %v2413 = vpop.f32.mrf.mxu0
        %v2414 = vpop.f32.mrf.mxu0
        %v2415 = vadd.f32 0.0, %v2414
        %v2416 = vpop.f32.mrf.mxu0
        %2417 = vdwg.mxu0
        %2418 = vmatprep.subr.bf16.mxu0 0
        %2419 = vmatpush1.bf16.msra.mxu0 0
        %2420 = vmatprep.subr.bf16.mxu0 0
        %2421 = vmatpush1.bf16.msra.mxu0 0
        %2422 = vmatprep.subr.bf16.mxu0 0
        %2423 = vmatpush1.bf16.msra.mxu0 0
        %2424 = vmatprep.subr.bf16.mxu0 0
        %2425 = vmatpush1.bf16.msra.mxu0 0
        %2426 = vmatprep.subr.bf16.mxu0 0
        %2427 = vmatpush1.bf16.msra.mxu0 0
        %2428 = vmatprep.subr.bf16.mxu0 0
        %2429 = vmatpush1.bf16.msra.mxu0 0
        %2430 = vmatprep.subr.bf16.mxu0 0
        %2431 = vmatpush1.bf16.msra.mxu0 0
        %2432 = vmatprep.subr.bf16.mxu0 0
        %2433 = vmatpush1.bf16.msra.mxu0 %v2121
        %2434 = vmatprep.subr.bf16.mxu0 0
        %2435 = vmatpush2.bf16.msra.mxu0 0
        %2436 = vmatprep.subr.bf16.mxu0 0
        %2437 = vmatpush2.bf16.msra.mxu0 0
        %2438 = vmatprep.subr.bf16.mxu0 0
        %2439 = vmatpush2.bf16.msra.mxu0 0
        %2440 = vmatprep.subr.bf16.mxu0 0
        %2441 = vmatpush2.bf16.msra.mxu0 0
        %2442 = vmatprep.subr.bf16.mxu0 0
        %2443 = vmatpush2.bf16.msra.mxu0 0
        %2444 = vmatprep.subr.bf16.mxu0 0
        %2445 = vmatpush2.bf16.msra.mxu0 0
        %2446 = vmatprep.subr.bf16.mxu0 0
        %2447 = vmatpush2.bf16.msra.mxu0 0
        %2448 = vmatprep.subr.bf16.mxu0 0
        %2449 = vmatpush2.bf16.msra.mxu0 0
        %2450 = vmatprep.mubr.bf16.mxu0 0
        %2451 = vmatmul.mubr.bf16.gmra.mxu0 %v1590
        %v2452 = vpop.f32.mrf.mxu0
        %v2453 = vadd.f32 %v2412, %v2452
        %v2454 = vpop.f32.mrf.mxu0
        %v2455 = vpop.f32.mrf.mxu0
        %v2456 = vadd.f32 %v2415, %v2455
        %v2457 = vpop.f32.mrf.mxu0
        %2458 = vdwg.mxu0
        %2459 = vmatprep.subr.bf16.mxu0 0
        %2460 = vmatpush1.bf16.msra.mxu0 0
        %2461 = vmatprep.subr.bf16.mxu0 0
        %2462 = vmatpush1.bf16.msra.mxu0 0
        %2463 = vmatprep.subr.bf16.mxu0 0
        %2464 = vmatpush1.bf16.msra.mxu0 0
        %2465 = vmatprep.subr.bf16.mxu0 0
        %2466 = vmatpush1.bf16.msra.mxu0 0
        %2467 = vmatprep.subr.bf16.mxu0 0
        %2468 = vmatpush1.bf16.msra.mxu0 0
        %2469 = vmatprep.subr.bf16.mxu0 0
        %2470 = vmatpush1.bf16.msra.mxu0 0
        %2471 = vmatprep.subr.bf16.mxu0 0
        %2472 = vmatpush1.bf16.msra.mxu0 0
        %2473 = vmatprep.subr.bf16.mxu0 0
        %2474 = vmatpush1.bf16.msra.mxu0 %v2126
        %2475 = vmatprep.subr.bf16.mxu0 0
        %2476 = vmatpush2.bf16.msra.mxu0 0
        %2477 = vmatprep.subr.bf16.mxu0 0
        %2478 = vmatpush2.bf16.msra.mxu0 0
        %2479 = vmatprep.subr.bf16.mxu0 0
        %2480 = vmatpush2.bf16.msra.mxu0 0
        %2481 = vmatprep.subr.bf16.mxu0 0
        %2482 = vmatpush2.bf16.msra.mxu0 0
        %2483 = vmatprep.subr.bf16.mxu0 0
        %2484 = vmatpush2.bf16.msra.mxu0 0
        %2485 = vmatprep.subr.bf16.mxu0 0
        %2486 = vmatpush2.bf16.msra.mxu0 0
        %2487 = vmatprep.subr.bf16.mxu0 0
        %2488 = vmatpush2.bf16.msra.mxu0 0
        %2489 = vmatprep.subr.bf16.mxu0 0
        %2490 = vmatpush2.bf16.msra.mxu0 0
        %2491 = vmatprep.mubr.bf16.mxu0 0
        %2492 = vmatmul.mubr.bf16.gmra.mxu0 %v1590
        %v2493 = vpop.f32.mrf.mxu0
        %v2494 = vadd.f32 0.0, %v2493
        %v2495 = vpop.f32.mrf.mxu0
        %v2496 = vpop.f32.mrf.mxu0
        %v2497 = vadd.f32 0.0, %v2496
        %v2498 = vpop.f32.mrf.mxu0
        %2499 = vdwg.mxu0
        %v2500 = vadd.f32 %v2453, %v2494
        %v2501 = vadd.f32 %v2456, %v2497
        %v2502 = vsub.f32 %v2250, %v2375
        %v2503 = vsub.f32 %v2251, %v2376
        %v2504 = vmul.f32 %v2502, %v1227
        %v2505 = vmul.f32 %v2503, %v1228
        %2506 = vst.msk [vmem:[%s329 + $0x20] sm:$0xff] %vm446, %v2504
        %2507 = vst.msk [vmem:[%s329 + $0x28] sm:$0xff] %vm446, %v2505
        %v2508 = vsub.f32 %v2500, %v2250
        %v2509 = vsub.f32 %v2501, %v2251
        %v2510 = vsub.f32 %v2508, %v2375
        %v2511 = vsub.f32 %v2509, %v2376
        %v2512 = vmul.f32 %v2510, %v1227
        %v2513 = vmul.f32 %v2511, %v1228
        %2514 = vst.msk [vmem:[%s335 + $0x20] sm:$0xff] %vm446, %v2512
        %2515 = vst.msk [vmem:[%s335 + $0x28] sm:$0xff] %vm446, %v2513
        %v2516 = vld [vmem:[#allocation2 + $0x30] sm:$0xff]
        %v2517 = vld [vmem:[#allocation2 + $0x38] sm:$0xff]
        %v2518 = vld [vmem:[#allocation3 + $0x30] sm:$0xff]
        %v2519 = vld [vmem:[#allocation3 + $0x38] sm:$0xff]
        %v2520 = vpack.c.bf16 %v2517, %v2516
        %v2521 = vunpack.c.l.bf16 %v2520
        %v2522 = vunpack.c.h.bf16 %v2520
        %v2523 = vsub.f32 %v2516, %v2521
        %v2524 = vsub.f32 %v2517, %v2522
        %v2525 = vpack.c.bf16 %v2524, %v2523
        %v2526 = vpack.c.bf16 %v2519, %v2518
        %v2527 = vunpack.c.l.bf16 %v2526
        %v2528 = vunpack.c.h.bf16 %v2526
        %v2529 = vsub.f32 %v2518, %v2527
        %v2530 = vsub.f32 %v2519, %v2528
        %v2531 = vpack.c.bf16 %v2530, %v2529
        %v2532 = vadd.f32 %v2516, %v2518
        %v2533 = vadd.f32 %v2517, %v2519
        %v2534 = vpack.c.bf16 %v2533, %v2532
        %v2535 = vunpack.c.l.bf16 %v2534
        %v2536 = vunpack.c.h.bf16 %v2534
        %v2537 = vsub.f32 %v2532, %v2535
        %v2538 = vsub.f32 %v2533, %v2536
        %v2539 = vpack.c.bf16 %v2538, %v2537
        %2540 = vmatprep.subr.bf16.mxu0 0
        %2541 = vmatpush1.bf16.msra.mxu0 0
        %2542 = vmatprep.subr.bf16.mxu0 0
        %2543 = vmatpush1.bf16.msra.mxu0 0
        %2544 = vmatprep.subr.bf16.mxu0 0
        %2545 = vmatpush1.bf16.msra.mxu0 0
        %2546 = vmatprep.subr.bf16.mxu0 0
        %2547 = vmatpush1.bf16.msra.mxu0 0
        %2548 = vmatprep.subr.bf16.mxu0 0
        %2549 = vmatpush1.bf16.msra.mxu0 0
        %2550 = vmatprep.subr.bf16.mxu0 0
        %2551 = vmatpush1.bf16.msra.mxu0 0
        %2552 = vmatprep.subr.bf16.mxu0 0
        %2553 = vmatpush1.bf16.msra.mxu0 0
        %2554 = vmatprep.subr.bf16.mxu0 0
        %2555 = vmatpush1.bf16.msra.mxu0 %v2520
        %2556 = vmatprep.subr.bf16.mxu0 0
        %2557 = vmatpush2.bf16.msra.mxu0 0
        %2558 = vmatprep.subr.bf16.mxu0 0
        %2559 = vmatpush2.bf16.msra.mxu0 0
        %2560 = vmatprep.subr.bf16.mxu0 0
        %2561 = vmatpush2.bf16.msra.mxu0 0
        %2562 = vmatprep.subr.bf16.mxu0 0
        %2563 = vmatpush2.bf16.msra.mxu0 0
        %2564 = vmatprep.subr.bf16.mxu0 0
        %2565 = vmatpush2.bf16.msra.mxu0 0
        %2566 = vmatprep.subr.bf16.mxu0 0
        %2567 = vmatpush2.bf16.msra.mxu0 0
        %2568 = vmatprep.subr.bf16.mxu0 0
        %2569 = vmatpush2.bf16.msra.mxu0 0
        %2570 = vmatprep.subr.bf16.mxu0 0
        %2571 = vmatpush2.bf16.msra.mxu0 0
        %2572 = vmatprep.mubr.bf16.mxu0 0
        %2573 = vmatmul.mubr.bf16.gmra.mxu0 %v1259
        %v2574 = vpop.f32.mrf.mxu0
        %v2575 = vadd.f32 0.0, %v2574
        %v2576 = vpop.f32.mrf.mxu0
        %v2577 = vpop.f32.mrf.mxu0
        %v2578 = vadd.f32 0.0, %v2577
        %v2579 = vpop.f32.mrf.mxu0
        %2580 = vdwg.mxu0
        %2581 = vmatprep.subr.bf16.mxu0 0
        %2582 = vmatpush1.bf16.msra.mxu0 0
        %2583 = vmatprep.subr.bf16.mxu0 0
        %2584 = vmatpush1.bf16.msra.mxu0 0
        %2585 = vmatprep.subr.bf16.mxu0 0
        %2586 = vmatpush1.bf16.msra.mxu0 0
        %2587 = vmatprep.subr.bf16.mxu0 0
        %2588 = vmatpush1.bf16.msra.mxu0 0
        %2589 = vmatprep.subr.bf16.mxu0 0
        %2590 = vmatpush1.bf16.msra.mxu0 0
        %2591 = vmatprep.subr.bf16.mxu0 0
        %2592 = vmatpush1.bf16.msra.mxu0 0
        %2593 = vmatprep.subr.bf16.mxu0 0
        %2594 = vmatpush1.bf16.msra.mxu0 0
        %2595 = vmatprep.subr.bf16.mxu0 0
        %2596 = vmatpush1.bf16.msra.mxu0 %v2520
        %2597 = vmatprep.subr.bf16.mxu0 0
        %2598 = vmatpush2.bf16.msra.mxu0 0
        %2599 = vmatprep.subr.bf16.mxu0 0
        %2600 = vmatpush2.bf16.msra.mxu0 0
        %2601 = vmatprep.subr.bf16.mxu0 0
        %2602 = vmatpush2.bf16.msra.mxu0 0
        %2603 = vmatprep.subr.bf16.mxu0 0
        %2604 = vmatpush2.bf16.msra.mxu0 0
        %2605 = vmatprep.subr.bf16.mxu0 0
        %2606 = vmatpush2.bf16.msra.mxu0 0
        %2607 = vmatprep.subr.bf16.mxu0 0
        %2608 = vmatpush2.bf16.msra.mxu0 0
        %2609 = vmatprep.subr.bf16.mxu0 0
        %2610 = vmatpush2.bf16.msra.mxu0 0
        %2611 = vmatprep.subr.bf16.mxu0 0
        %2612 = vmatpush2.bf16.msra.mxu0 0
        %2613 = vmatprep.mubr.bf16.mxu0 0
        %2614 = vmatmul.mubr.bf16.gmra.mxu0 %v1308
        %v2615 = vpop.f32.mrf.mxu0
        %v2616 = vadd.f32 %v2575, %v2615
        %v2617 = vpop.f32.mrf.mxu0
        %v2618 = vpop.f32.mrf.mxu0
        %v2619 = vadd.f32 %v2578, %v2618
        %v2620 = vpop.f32.mrf.mxu0
        %2621 = vdwg.mxu0
        %2622 = vmatprep.subr.bf16.mxu0 0
        %2623 = vmatpush1.bf16.msra.mxu0 0
        %2624 = vmatprep.subr.bf16.mxu0 0
        %2625 = vmatpush1.bf16.msra.mxu0 0
        %2626 = vmatprep.subr.bf16.mxu0 0
        %2627 = vmatpush1.bf16.msra.mxu0 0
        %2628 = vmatprep.subr.bf16.mxu0 0
        %2629 = vmatpush1.bf16.msra.mxu0 0
        %2630 = vmatprep.subr.bf16.mxu0 0
        %2631 = vmatpush1.bf16.msra.mxu0 0
        %2632 = vmatprep.subr.bf16.mxu0 0
        %2633 = vmatpush1.bf16.msra.mxu0 0
        %2634 = vmatprep.subr.bf16.mxu0 0
        %2635 = vmatpush1.bf16.msra.mxu0 0
        %2636 = vmatprep.subr.bf16.mxu0 0
        %2637 = vmatpush1.bf16.msra.mxu0 %v2525
        %2638 = vmatprep.subr.bf16.mxu0 0
        %2639 = vmatpush2.bf16.msra.mxu0 0
        %2640 = vmatprep.subr.bf16.mxu0 0
        %2641 = vmatpush2.bf16.msra.mxu0 0
        %2642 = vmatprep.subr.bf16.mxu0 0
        %2643 = vmatpush2.bf16.msra.mxu0 0
        %2644 = vmatprep.subr.bf16.mxu0 0
        %2645 = vmatpush2.bf16.msra.mxu0 0
        %2646 = vmatprep.subr.bf16.mxu0 0
        %2647 = vmatpush2.bf16.msra.mxu0 0
        %2648 = vmatprep.subr.bf16.mxu0 0
        %2649 = vmatpush2.bf16.msra.mxu0 0
        %2650 = vmatprep.subr.bf16.mxu0 0
        %2651 = vmatpush2.bf16.msra.mxu0 0
        %2652 = vmatprep.subr.bf16.mxu0 0
        %2653 = vmatpush2.bf16.msra.mxu0 0
        %2654 = vmatprep.mubr.bf16.mxu0 0
        %2655 = vmatmul.mubr.bf16.gmra.mxu0 %v1308
        %v2656 = vpop.f32.mrf.mxu0
        %v2657 = vadd.f32 0.0, %v2656
        %v2658 = vpop.f32.mrf.mxu0
        %v2659 = vpop.f32.mrf.mxu0
        %v2660 = vadd.f32 0.0, %v2659
        %v2661 = vpop.f32.mrf.mxu0
        %2662 = vdwg.mxu0
        %v2663 = vadd.f32 %v2616, %v2657
        %v2664 = vadd.f32 %v2619, %v2660
        %2665 = vmatprep.subr.bf16.mxu0 0
        %2666 = vmatpush1.bf16.msra.mxu0 0
        %2667 = vmatprep.subr.bf16.mxu0 0
        %2668 = vmatpush1.bf16.msra.mxu0 0
        %2669 = vmatprep.subr.bf16.mxu0 0
        %2670 = vmatpush1.bf16.msra.mxu0 0
        %2671 = vmatprep.subr.bf16.mxu0 0
        %2672 = vmatpush1.bf16.msra.mxu0 0
        %2673 = vmatprep.subr.bf16.mxu0 0
        %2674 = vmatpush1.bf16.msra.mxu0 0
        %2675 = vmatprep.subr.bf16.mxu0 0
        %2676 = vmatpush1.bf16.msra.mxu0 0
        %2677 = vmatprep.subr.bf16.mxu0 0
        %2678 = vmatpush1.bf16.msra.mxu0 0
        %2679 = vmatprep.subr.bf16.mxu0 0
        %2680 = vmatpush1.bf16.msra.mxu0 %v2526
        %2681 = vmatprep.subr.bf16.mxu0 0
        %2682 = vmatpush2.bf16.msra.mxu0 0
        %2683 = vmatprep.subr.bf16.mxu0 0
        %2684 = vmatpush2.bf16.msra.mxu0 0
        %2685 = vmatprep.subr.bf16.mxu0 0
        %2686 = vmatpush2.bf16.msra.mxu0 0
        %2687 = vmatprep.subr.bf16.mxu0 0
        %2688 = vmatpush2.bf16.msra.mxu0 0
        %2689 = vmatprep.subr.bf16.mxu0 0
        %2690 = vmatpush2.bf16.msra.mxu0 0
        %2691 = vmatprep.subr.bf16.mxu0 0
        %2692 = vmatpush2.bf16.msra.mxu0 0
        %2693 = vmatprep.subr.bf16.mxu0 0
        %2694 = vmatpush2.bf16.msra.mxu0 0
        %2695 = vmatprep.subr.bf16.mxu0 0
        %2696 = vmatpush2.bf16.msra.mxu0 0
        %2697 = vmatprep.mubr.bf16.mxu0 0
        %2698 = vmatmul.mubr.bf16.gmra.mxu0 %v1400
        %v2699 = vpop.f32.mrf.mxu0
        %v2700 = vadd.f32 0.0, %v2699
        %v2701 = vpop.f32.mrf.mxu0
        %v2702 = vpop.f32.mrf.mxu0
        %v2703 = vadd.f32 0.0, %v2702
        %v2704 = vpop.f32.mrf.mxu0
        %2705 = vdwg.mxu0
        %2706 = vmatprep.subr.bf16.mxu0 0
        %2707 = vmatpush1.bf16.msra.mxu0 0
        %2708 = vmatprep.subr.bf16.mxu0 0
        %2709 = vmatpush1.bf16.msra.mxu0 0
        %2710 = vmatprep.subr.bf16.mxu0 0
        %2711 = vmatpush1.bf16.msra.mxu0 0
        %2712 = vmatprep.subr.bf16.mxu0 0
        %2713 = vmatpush1.bf16.msra.mxu0 0
        %2714 = vmatprep.subr.bf16.mxu0 0
        %2715 = vmatpush1.bf16.msra.mxu0 0
        %2716 = vmatprep.subr.bf16.mxu0 0
        %2717 = vmatpush1.bf16.msra.mxu0 0
        %2718 = vmatprep.subr.bf16.mxu0 0
        %2719 = vmatpush1.bf16.msra.mxu0 0
        %2720 = vmatprep.subr.bf16.mxu0 0
        %2721 = vmatpush1.bf16.msra.mxu0 %v2526
        %2722 = vmatprep.subr.bf16.mxu0 0
        %2723 = vmatpush2.bf16.msra.mxu0 0
        %2724 = vmatprep.subr.bf16.mxu0 0
        %2725 = vmatpush2.bf16.msra.mxu0 0
        %2726 = vmatprep.subr.bf16.mxu0 0
        %2727 = vmatpush2.bf16.msra.mxu0 0
        %2728 = vmatprep.subr.bf16.mxu0 0
        %2729 = vmatpush2.bf16.msra.mxu0 0
        %2730 = vmatprep.subr.bf16.mxu0 0
        %2731 = vmatpush2.bf16.msra.mxu0 0
        %2732 = vmatprep.subr.bf16.mxu0 0
        %2733 = vmatpush2.bf16.msra.mxu0 0
        %2734 = vmatprep.subr.bf16.mxu0 0
        %2735 = vmatpush2.bf16.msra.mxu0 0
        %2736 = vmatprep.subr.bf16.mxu0 0
        %2737 = vmatpush2.bf16.msra.mxu0 0
        %2738 = vmatprep.mubr.bf16.mxu0 0
        %2739 = vmatmul.mubr.bf16.gmra.mxu0 %v1449
        %v2740 = vpop.f32.mrf.mxu0
        %v2741 = vadd.f32 %v2700, %v2740
        %v2742 = vpop.f32.mrf.mxu0
        %v2743 = vpop.f32.mrf.mxu0
        %v2744 = vadd.f32 %v2703, %v2743
        %v2745 = vpop.f32.mrf.mxu0
        %2746 = vdwg.mxu0
        %2747 = vmatprep.subr.bf16.mxu0 0
        %2748 = vmatpush1.bf16.msra.mxu0 0
        %2749 = vmatprep.subr.bf16.mxu0 0
        %2750 = vmatpush1.bf16.msra.mxu0 0
        %2751 = vmatprep.subr.bf16.mxu0 0
        %2752 = vmatpush1.bf16.msra.mxu0 0
        %2753 = vmatprep.subr.bf16.mxu0 0
        %2754 = vmatpush1.bf16.msra.mxu0 0
        %2755 = vmatprep.subr.bf16.mxu0 0
        %2756 = vmatpush1.bf16.msra.mxu0 0
        %2757 = vmatprep.subr.bf16.mxu0 0
        %2758 = vmatpush1.bf16.msra.mxu0 0
        %2759 = vmatprep.subr.bf16.mxu0 0
        %2760 = vmatpush1.bf16.msra.mxu0 0
        %2761 = vmatprep.subr.bf16.mxu0 0
        %2762 = vmatpush1.bf16.msra.mxu0 %v2531
        %2763 = vmatprep.subr.bf16.mxu0 0
        %2764 = vmatpush2.bf16.msra.mxu0 0
        %2765 = vmatprep.subr.bf16.mxu0 0
        %2766 = vmatpush2.bf16.msra.mxu0 0
        %2767 = vmatprep.subr.bf16.mxu0 0
        %2768 = vmatpush2.bf16.msra.mxu0 0
        %2769 = vmatprep.subr.bf16.mxu0 0
        %2770 = vmatpush2.bf16.msra.mxu0 0
        %2771 = vmatprep.subr.bf16.mxu0 0
        %2772 = vmatpush2.bf16.msra.mxu0 0
        %2773 = vmatprep.subr.bf16.mxu0 0
        %2774 = vmatpush2.bf16.msra.mxu0 0
        %2775 = vmatprep.subr.bf16.mxu0 0
        %2776 = vmatpush2.bf16.msra.mxu0 0
        %2777 = vmatprep.subr.bf16.mxu0 0
        %2778 = vmatpush2.bf16.msra.mxu0 0
        %2779 = vmatprep.mubr.bf16.mxu0 0
        %2780 = vmatmul.mubr.bf16.gmra.mxu0 %v1449
        %v2781 = vpop.f32.mrf.mxu0
        %v2782 = vadd.f32 0.0, %v2781
        %v2783 = vpop.f32.mrf.mxu0
        %v2784 = vpop.f32.mrf.mxu0
        %v2785 = vadd.f32 0.0, %v2784
        %v2786 = vpop.f32.mrf.mxu0
        %2787 = vdwg.mxu0
        %v2788 = vadd.f32 %v2741, %v2782
        %v2789 = vadd.f32 %v2744, %v2785
        %2790 = vmatprep.subr.bf16.mxu0 0
        %2791 = vmatpush1.bf16.msra.mxu0 0
        %2792 = vmatprep.subr.bf16.mxu0 0
        %2793 = vmatpush1.bf16.msra.mxu0 0
        %2794 = vmatprep.subr.bf16.mxu0 0
        %2795 = vmatpush1.bf16.msra.mxu0 0
        %2796 = vmatprep.subr.bf16.mxu0 0
        %2797 = vmatpush1.bf16.msra.mxu0 0
        %2798 = vmatprep.subr.bf16.mxu0 0
        %2799 = vmatpush1.bf16.msra.mxu0 0
        %2800 = vmatprep.subr.bf16.mxu0 0
        %2801 = vmatpush1.bf16.msra.mxu0 0
        %2802 = vmatprep.subr.bf16.mxu0 0
        %2803 = vmatpush1.bf16.msra.mxu0 0
        %2804 = vmatprep.subr.bf16.mxu0 0
        %2805 = vmatpush1.bf16.msra.mxu0 %v2534
        %2806 = vmatprep.subr.bf16.mxu0 0
        %2807 = vmatpush2.bf16.msra.mxu0 0
        %2808 = vmatprep.subr.bf16.mxu0 0
        %2809 = vmatpush2.bf16.msra.mxu0 0
        %2810 = vmatprep.subr.bf16.mxu0 0
        %2811 = vmatpush2.bf16.msra.mxu0 0
        %2812 = vmatprep.subr.bf16.mxu0 0
        %2813 = vmatpush2.bf16.msra.mxu0 0
        %2814 = vmatprep.subr.bf16.mxu0 0
        %2815 = vmatpush2.bf16.msra.mxu0 0
        %2816 = vmatprep.subr.bf16.mxu0 0
        %2817 = vmatpush2.bf16.msra.mxu0 0
        %2818 = vmatprep.subr.bf16.mxu0 0
        %2819 = vmatpush2.bf16.msra.mxu0 0
        %2820 = vmatprep.subr.bf16.mxu0 0
        %2821 = vmatpush2.bf16.msra.mxu0 0
        %2822 = vmatprep.mubr.bf16.mxu0 0
        %2823 = vmatmul.mubr.bf16.gmra.mxu0 %v1541
        %v2824 = vpop.f32.mrf.mxu0
        %v2825 = vadd.f32 0.0, %v2824
        %v2826 = vpop.f32.mrf.mxu0
        %v2827 = vpop.f32.mrf.mxu0
        %v2828 = vadd.f32 0.0, %v2827
        %v2829 = vpop.f32.mrf.mxu0
        %2830 = vdwg.mxu0
        %2831 = vmatprep.subr.bf16.mxu0 0
        %2832 = vmatpush1.bf16.msra.mxu0 0
        %2833 = vmatprep.subr.bf16.mxu0 0
        %2834 = vmatpush1.bf16.msra.mxu0 0
        %2835 = vmatprep.subr.bf16.mxu0 0
        %2836 = vmatpush1.bf16.msra.mxu0 0
        %2837 = vmatprep.subr.bf16.mxu0 0
        %2838 = vmatpush1.bf16.msra.mxu0 0
        %2839 = vmatprep.subr.bf16.mxu0 0
        %2840 = vmatpush1.bf16.msra.mxu0 0
        %2841 = vmatprep.subr.bf16.mxu0 0
        %2842 = vmatpush1.bf16.msra.mxu0 0
        %2843 = vmatprep.subr.bf16.mxu0 0
        %2844 = vmatpush1.bf16.msra.mxu0 0
        %2845 = vmatprep.subr.bf16.mxu0 0
        %2846 = vmatpush1.bf16.msra.mxu0 %v2534
        %2847 = vmatprep.subr.bf16.mxu0 0
        %2848 = vmatpush2.bf16.msra.mxu0 0
        %2849 = vmatprep.subr.bf16.mxu0 0
        %2850 = vmatpush2.bf16.msra.mxu0 0
        %2851 = vmatprep.subr.bf16.mxu0 0
        %2852 = vmatpush2.bf16.msra.mxu0 0
        %2853 = vmatprep.subr.bf16.mxu0 0
        %2854 = vmatpush2.bf16.msra.mxu0 0
        %2855 = vmatprep.subr.bf16.mxu0 0
        %2856 = vmatpush2.bf16.msra.mxu0 0
        %2857 = vmatprep.subr.bf16.mxu0 0
        %2858 = vmatpush2.bf16.msra.mxu0 0
        %2859 = vmatprep.subr.bf16.mxu0 0
        %2860 = vmatpush2.bf16.msra.mxu0 0
        %2861 = vmatprep.subr.bf16.mxu0 0
        %2862 = vmatpush2.bf16.msra.mxu0 0
        %2863 = vmatprep.mubr.bf16.mxu0 0
        %2864 = vmatmul.mubr.bf16.gmra.mxu0 %v1590
        %v2865 = vpop.f32.mrf.mxu0
        %v2866 = vadd.f32 %v2825, %v2865
        %v2867 = vpop.f32.mrf.mxu0
        %v2868 = vpop.f32.mrf.mxu0
        %v2869 = vadd.f32 %v2828, %v2868
        %v2870 = vpop.f32.mrf.mxu0
        %2871 = vdwg.mxu0
        %2872 = vmatprep.subr.bf16.mxu0 0
        %2873 = vmatpush1.bf16.msra.mxu0 0
        %2874 = vmatprep.subr.bf16.mxu0 0
        %2875 = vmatpush1.bf16.msra.mxu0 0
        %2876 = vmatprep.subr.bf16.mxu0 0
        %2877 = vmatpush1.bf16.msra.mxu0 0
        %2878 = vmatprep.subr.bf16.mxu0 0
        %2879 = vmatpush1.bf16.msra.mxu0 0
        %2880 = vmatprep.subr.bf16.mxu0 0
        %2881 = vmatpush1.bf16.msra.mxu0 0
        %2882 = vmatprep.subr.bf16.mxu0 0
        %2883 = vmatpush1.bf16.msra.mxu0 0
        %2884 = vmatprep.subr.bf16.mxu0 0
        %2885 = vmatpush1.bf16.msra.mxu0 0
        %2886 = vmatprep.subr.bf16.mxu0 0
        %2887 = vmatpush1.bf16.msra.mxu0 %v2539
        %2888 = vmatprep.subr.bf16.mxu0 0
        %2889 = vmatpush2.bf16.msra.mxu0 0
        %2890 = vmatprep.subr.bf16.mxu0 0
        %2891 = vmatpush2.bf16.msra.mxu0 0
        %2892 = vmatprep.subr.bf16.mxu0 0
        %2893 = vmatpush2.bf16.msra.mxu0 0
        %2894 = vmatprep.subr.bf16.mxu0 0
        %2895 = vmatpush2.bf16.msra.mxu0 0
        %2896 = vmatprep.subr.bf16.mxu0 0
        %2897 = vmatpush2.bf16.msra.mxu0 0
        %2898 = vmatprep.subr.bf16.mxu0 0
        %2899 = vmatpush2.bf16.msra.mxu0 0
        %2900 = vmatprep.subr.bf16.mxu0 0
        %2901 = vmatpush2.bf16.msra.mxu0 0
        %2902 = vmatprep.subr.bf16.mxu0 0
        %2903 = vmatpush2.bf16.msra.mxu0 0
        %2904 = vmatprep.mubr.bf16.mxu0 0
        %2905 = vmatmul.mubr.bf16.gmra.mxu0 %v1590
        %v2906 = vpop.f32.mrf.mxu0
        %v2907 = vadd.f32 0.0, %v2906
        %v2908 = vpop.f32.mrf.mxu0
        %v2909 = vpop.f32.mrf.mxu0
        %v2910 = vadd.f32 0.0, %v2909
        %v2911 = vpop.f32.mrf.mxu0
        %2912 = vdwg.mxu0
        %v2913 = vadd.f32 %v2866, %v2907
        %v2914 = vadd.f32 %v2869, %v2910
        %v2915 = vsub.f32 %v2663, %v2788
        %v2916 = vsub.f32 %v2664, %v2789
        %v2917 = vmul.f32 %v2915, %v1227
        %v2918 = vmul.f32 %v2916, %v1228
        %2919 = vst.msk [vmem:[%s329 + $0x30] sm:$0xff] %vm446, %v2917
        %2920 = vst.msk [vmem:[%s329 + $0x38] sm:$0xff] %vm446, %v2918
        %v2921 = vsub.f32 %v2913, %v2663
        %v2922 = vsub.f32 %v2914, %v2664
        %v2923 = vsub.f32 %v2921, %v2788
        %v2924 = vsub.f32 %v2922, %v2789
        %v2925 = vmul.f32 %v2923, %v1227
        %v2926 = vmul.f32 %v2924, %v1228
        %2927 = vst.msk [vmem:[%s335 + $0x30] sm:$0xff] %vm446, %v2925
        %2928 = vst.msk [vmem:[%s335 + $0x38] sm:$0xff] %vm446, %v2926
        %s2929 = smul.u32 8, %s17
        %p2930 = scmp.lt.s32.totalorder %s2929, 15
        %s2931 = scalar_select %p2930, %s2929, 15
        %s2932 = smul.addr %s2931, 8
        %s2933 = scalar_lea.vmem %s4, %s2932
        %s2934 = smul.u32 8, %s17
        %p2935 = scmp.lt.s32.totalorder %s2934, 15
        %s2936 = scalar_select %p2935, %s2934, 15
        %s2937 = smul.addr %s2936, 8
        %s2938 = scalar_lea.vmem %s5, %s2937
        // Predicated region
        $region75: #{op_mri_singlecoil_forward.1} parent=69 // pred_check
          %p2939 = pneg %p124
        $region76: #{op_mri_singlecoil_forward.1} parent=69 // pred_check_branch
          %2941 = sbr.rel (%p2939) target = $region78
        $region77: #{op_mri_singlecoil_forward.1} parent=69 // pred_region
          %s2942 = smul.u32 8, %s17
        $region78: #{op_mri_singlecoil_forward.1} parent=69 // pred_fallthru
          _
        // Predicated region
        $region79: #{op_mri_singlecoil_forward.1} parent=69 // pred_check
          %p2943 = pneg %p150
        $region80: #{op_mri_singlecoil_forward.1} parent=69 // pred_check_branch
          %2945 = sbr.rel (%p2943) target = $region82
        $region81: #{op_mri_singlecoil_forward.1} parent=69 // pred_region
          %s2946 = smul.u32 8, %s17
        $region82: #{op_mri_singlecoil_forward.1} parent=69 // pred_fallthru
          _
      $region70: #{op_mri_singlecoil_forward.1} parent=5 // pred_fallthru
        _
      %p2947 = scmp.le.s32.totalorder 2, %s12
      // Predicated region
      $region83: #{op_mri_singlecoil_forward.1} parent=5 // pred_check
        %p2948 = pneg %p2947
      $region84: #{op_mri_singlecoil_forward.1} parent=5 // pred_check_branch
        %2950 = sbr.rel (%p2948) target = $region86
      $region85: #{op_mri_singlecoil_forward.1} parent=5 // pred_region
        %s2951 = ssub.s32 %s12, 2
        // Predicated region
        $region87: #{op_mri_singlecoil_forward.1} parent=85 // pred_check
          %p2952 = pneg %p130
        $region88: #{op_mri_singlecoil_forward.1} parent=85 // pred_check_branch
          %2954 = sbr.rel (%p2952) target = $region90
        $region89: #{op_mri_singlecoil_forward.1} parent=85 // pred_region
          %s2955 = smul.u32 8, %s18
          %p2956 = scmp.lt.s32.totalorder %s2955, 15
          %s2957 = scalar_select %p2956, %s2955, 15
          %s2958 = smul.addr %s2957, 8
          %s2959 = scalar_lea.vmem %s4, %s2958
        $region90: #{op_mri_singlecoil_forward.1} parent=85 // pred_fallthru
          _
        // Predicated region
        $region91: #{op_mri_singlecoil_forward.1} parent=85 // pred_check
          %p2960 = pneg %p156
        $region92: #{op_mri_singlecoil_forward.1} parent=85 // pred_check_branch
          %2962 = sbr.rel (%p2960) target = $region94
        $region93: #{op_mri_singlecoil_forward.1} parent=85 // pred_region
          %s2963 = smul.u32 8, %s18
          %p2964 = scmp.lt.s32.totalorder %s2963, 15
          %s2965 = scalar_select %p2964, %s2963, 15
          %s2966 = smul.addr %s2965, 8
          %s2967 = scalar_lea.vmem %s5, %s2966
        $region94: #{op_mri_singlecoil_forward.1} parent=85 // pred_fallthru
          _
      $region86: #{op_mri_singlecoil_forward.1} parent=5 // pred_fallthru
        _
    $region6: #{op_mri_singlecoil_forward.1} parent=1 // loop_footer
      %s16 = sadd.s32 1, %s12
    $region7: #{op_mri_singlecoil_forward.1} parent=1 // loop_footer_branch
      %11 = sbr.rel target = $region3
    $region8: #{op_mri_singlecoil_forward.1} parent=1 // loop_exit
      _

</llo_original>
